<compile_context>
chip_gen: v7x
topology: tpu7x:2x2x1
jax: 0.10.0
libtpu: 0.0.40
codegen_flags: <defaults>
</compile_context>

<pallas_src>
import functools
import math

import jax
import jax.numpy as jnp
import numpy as np
from jax.experimental import pallas as pl
from jax.experimental.pallas import tpu as pltpu


def _node_edge_kernel(
    # data
    x_ref, ef_ref, y_ref, xm_ref, pm_ref,
    # fused / packed params
    qkvw_ref, qkvb_ref, ew_ref, eb_ref, yw_ref, yb_ref,
    xyw_ref, xyb_ref, eyw_ref, eyb_ref,
    xoutw_ref, xoutb_ref, eoutw_ref, eoutb_ref,
    y1w_ref, y1b_ref, y2w_ref, y2b_ref,
    hsel_ref, hselt_ref,
    # outputs
    newx_ref, newe_ref, newy_ref,
    *, n, G, dx, de, dy, n_head, dot_dtype, exact_recip):
  f32 = jnp.float32
  h = n_head
  nn = n * n

  def mm(a, b):
    # bf16 (or f32) MXU inputs, f32 accumulation. astype is a no-op for the
    # host-precast operands.
    return jnp.dot(a.astype(dot_dtype), b.astype(dot_dtype),
                   preferred_element_type=f32)

  X = x_ref[...]                        # (G*n, dx)     bf16/f32
  Ef = ef_ref[...]                      # (G*n*n, de)
  yv = y_ref[...].reshape(G, dy)        # (G, dy)
  xm = xm_ref[...]                      # (G*n, 1)      node mask (f32)
  pm = pm_ref[...]                      # (G*n*n, 1)    pair mask = m[i]*m[j]

  # ---- fused node linear: Q | K | V  (Q pre-scaled by 1/sqrt(df)) ----------
  qkv = (mm(X, qkvw_ref[...]) + qkvb_ref[...]) * xm       # (G*n, 3*dx) f32
  Q = qkv[:, :dx]
  K = qkv[:, dx:2 * dx]
  V = qkv[:, 2 * dx:]

  # ---- fused edge linear: e_mul | e_add, pair-masked ------------------------
  EB = mm(Ef, ew_ref[...]) + eb_ref[...]                   # (G*n*n, 2h)
  E1 = EB[:, :h] * pm
  E2 = EB[:, h:] * pm

  # ---- fused y linear: y_e_add | y_e_mul | y_x_add | y_x_mul | y_y ----------
  yall = mm(yv, yw_ref[...]) + yb_ref[...]                 # (G, 2h+2dx+dy)
  ye_add = yall[:, :h]
  ye_mul = yall[:, h:2 * h]
  yx_add = yall[:, 2 * h:2 * h + dx]
  yx_mul = yall[:, 2 * h + dx:2 * h + 2 * dx]
  y_lin = yall[:, 2 * h + 2 * dx:]

  # ---- attention scores: broadcast Q over keys / tile K over queries --------
  # Row (g, i, j) of Q_exp is node (g, i); of K_til / V_til is node (g, j).
  Q_exp = jnp.broadcast_to(Q[:, None, :], (G * n, n, dx)).reshape(G * nn, dx)
  K_til = jnp.broadcast_to(K.reshape(G, 1, n, dx),
                           (G, n, n, dx)).reshape(G * nn, dx)
  S = mm(Q_exp * K_til, hsel_ref[...])                     # per-head sums -> (G*n*n, h)
  Y = S * (E1 + 1.0) + E2                                  # (G*n*n, h)

  # ---- edge output -----------------------------------------------------------
  ye_add_b = jnp.broadcast_to(ye_add[:, None, :], (G, nn, h)).reshape(G * nn, h)
  ye_mul_b = jnp.broadcast_to(ye_mul[:, None, :], (G, nn, h)).reshape(G * nn, h)
  newe_pre = ye_add_b + (ye_mul_b + 1.0) * Y
  # TODO(synk): could fold j into lanes ((G*n, n*de) store) for a lane-dense
  # output; at de=16 / n=8 the relayout cost ~ the store savings, so skipped.
  newe_ref[...] = (mm(newe_pre, eoutw_ref[...]) + eoutb_ref[...]) * pm

  # ---- masked softmax over keys (segments of n rows per query) ---------------
  Ym = jnp.where(pm > 0.0, Y, -1e30).reshape(G * n, n, h)
  mx = jnp.max(Ym, axis=1, keepdims=True)                  # (G*n, 1, h)
  p = jnp.exp(Ym - mx)
  s = jnp.sum(p, axis=1, keepdims=True)                    # (G*n, 1, h)
  inv = (1.0 / s) if exact_recip else pl.reciprocal(s, approx=True)
  attn = (p * inv).reshape(G * nn, h)

  # ---- weighted V + node output ----------------------------------------------
  attn_full = mm(attn, hselt_ref[...])                     # (G*n*n, dx)
  V_til = jnp.broadcast_to(V.reshape(G, 1, n, dx),
                           (G, n, n, dx)).reshape(G * nn, dx)
  wV = jnp.sum((attn_full * V_til).reshape(G * n, n, dx), axis=1)   # (G*n, dx)
  yx_add_b = jnp.broadcast_to(yx_add[:, None, :], (G, n, dx)).reshape(G * n, dx)
  yx_mul_b = jnp.broadcast_to(yx_mul[:, None, :], (G, n, dx)).reshape(G * n, dx)
  newx_pre = yx_add_b + (yx_mul_b + 1.0) * wV
  newx_ref[...] = (mm(newx_pre, xoutw_ref[...]) + xoutb_ref[...]) * xm

  # ---- global-feature update, batched over the G graphs of this block --------
  # Pooled mean/min/max/std include padded nodes/edges (matches PyTorch Xtoy/Etoy).
  X3 = X.astype(f32).reshape(G, n, dx)
  E3 = Ef.astype(f32).reshape(G, nn, de)
  inv_nm1 = 1.0 / max(n - 1, 1)        # max(): avoid NaN in degenerate n == 1
  inv_nnm1 = 1.0 / max(nn - 1, 1)
  xmu = jnp.mean(X3, axis=1)                                        # (G, dx)
  xsd = jnp.sqrt(jnp.sum((X3 - xmu[:, None, :]) ** 2, axis=1) * inv_nm1)
  xz = jnp.concatenate(
      [xmu, jnp.min(X3, axis=1), jnp.max(X3, axis=1), xsd], axis=-1)  # (G, 4dx)
  emu = jnp.mean(E3, axis=1)                                        # (G, de)
  esd = jnp.sqrt(jnp.sum((E3 - emu[:, None, :]) ** 2, axis=1) * inv_nnm1)
  ez = jnp.concatenate(
      [emu, jnp.min(E3, axis=1), jnp.max(E3, axis=1), esd], axis=-1)  # (G, 4de)
  new_y = (y_lin + mm(xz, xyw_ref[...]) + xyb_ref[...]
           + mm(ez, eyw_ref[...]) + eyb_ref[...])                    # (G, dy)
  hy = jnp.maximum(mm(new_y, y1w_ref[...]) + y1b_ref[...], 0.0)
  newy_ref[...] = (mm(hy, y2w_ref[...]) + y2b_ref[...]).reshape(G, 1, dy)


@functools.lru_cache(maxsize=None)
def _head_selectors(dx, n_head, use_bf16):
  """0/1 (dx, n_head) head-selection matrix and its transpose (cached)."""
  df = dx // n_head
  hsel = (np.arange(dx)[:, None] // df ==
          np.arange(n_head)[None, :]).astype(np.float32)
  dt = jnp.bfloat16 if use_bf16 else jnp.float32
  return jnp.asarray(hsel, dtype=dt), jnp.asarray(hsel.T.copy(), dtype=dt)


def pack_params(params, use_bf16=True):
  """Fuse / pre-cast NodeEdgeBlock weights once (not per forward call)."""
  p = params
  n_head = p["n_head"]
  dx = p["qw"].shape[0]
  df = dx // n_head
  scale = 1.0 / math.sqrt(df)
  wdt = jnp.bfloat16 if use_bf16 else jnp.float32
  f32 = jnp.float32

  def w(a):
    return jnp.asarray(a, dtype=wdt)

  def b(a):
    return jnp.asarray(a, dtype=f32)

  hsel, hselt = _head_selectors(dx, n_head, use_bf16)
  return {
      "n_head": n_head,
      # Q | K | V  (1/sqrt(df) folded into the Q slice of weight and bias).
      "qkvw": w(jnp.concatenate([p["qw"] * scale, p["kw"], p["vw"]], axis=1)),
      "qkvb": b(jnp.concatenate([p["qb"] * scale, p["kb"], p["vb"]], axis=1)),
      # e_mul | e_add
      "ew": w(jnp.concatenate([p["emulw"], p["eaddw"]], axis=1)),
      "eb": b(jnp.concatenate([p["emulb"], p["eaddb"]], axis=1)),
      # y_e_add | y_e_mul | y_x_add | y_x_mul | y_y
      "yw": w(jnp.concatenate([p["yeaddw"], p["yemulw"], p["yxaddw"],
                               p["yxmulw"], p["yyw"]], axis=1)),
      "yb": b(jnp.concatenate([p["yeaddb"], p["yemulb"], p["yxaddb"],
                               p["yxmulb"], p["yyb"]], axis=1)),
      "xyw": w(p["xyw"]), "xyb": b(p["xyb"]),
      "eyw": w(p["eyw"]), "eyb": b(p["eyb"]),
      "xoutw": w(p["xoutw"]), "xoutb": b(p["xoutb"]),
      "eoutw": w(p["eoutw"]), "eoutb": b(p["eoutb"]),
      "y1w": w(p["y1w"]), "y1b": b(p["y1b"]),
      "y2w": w(p["y2w"]), "y2b": b(p["y2b"]),
      "hsel": hsel, "hselt": hselt,
  }


_PARAM_ORDER = ("qkvw", "qkvb", "ew", "eb", "yw", "yb",
                "xyw", "xyb", "eyw", "eyb",
                "xoutw", "xoutb", "eoutw", "eoutb",
                "y1w", "y1b", "y2w", "y2b",
                "hsel", "hselt")


def node_edge_block(X, E, y, node_mask, t_init, packed, use_bf16=True):
  # TODO(synk): the E_reg / E_LLM branch (PredefinedNoiseScheduleDiscrete
  # cosine-alpha lookup + e_reg_* / e_llm_* / y_e_reg_* linears) is not
  # implemented; this covers the default E_reg=None / E_LLM=None path, so
  # t_init is accepted for signature fidelity but unused.
  del t_init
  bs, n, dx = X.shape
  de = E.shape[-1]
  dy = y.shape[-1]
  n_head = packed["n_head"]
  # TODO(synk): n is assumed to keep G*n sublane-aligned (n % 8 == 0 here);
  # pad n to a multiple of 8 for general graph sizes.

  # Graphs per grid step: largest divisor of bs up to min(8, bs // 2), so the
  # "parallel" grid axis has >= 2 steps (v7x has 2 TensorCores) while still
  # amortizing the ~600-cycle per-grid-step overhead.
  max_g = max(1, min(8, bs // 2))
  G = 1
  for d in range(max_g, 0, -1):
    if bs % d == 0:
      G = d
      break

  f32 = jnp.float32
  ddt = jnp.bfloat16 if use_bf16 else f32
  Xf = X.reshape(bs * n, dx).astype(ddt)
  Ef = E.reshape(bs * n * n, de).astype(ddt)
  yf = y.reshape(bs, 1, dy).astype(ddt)
  m = node_mask.astype(f32)
  xm = m.reshape(bs * n, 1)
  pm = (m[:, :, None] * m[:, None, :]).reshape(bs * n * n, 1)

  param_arrays = [packed[k] for k in _PARAM_ORDER]

  # Grid-invariant weights: fused totals are only a few KiB, so the default
  # double-buffering is negligible.
  # TODO(synk): use pipeline_mode=pl.Buffered(1) for these if the feature dims
  # grow enough for constant VMEM to matter.
  def const_spec(a):
    nd = a.ndim
    return pl.BlockSpec(a.shape, lambda b, _nd=nd: (0,) * _nd)

  in_specs = [
      pl.BlockSpec((G * n, dx), lambda b: (b, 0)),
      pl.BlockSpec((G * n * n, de), lambda b: (b, 0)),
      pl.BlockSpec((G, 1, dy), lambda b: (b, 0, 0)),
      pl.BlockSpec((G * n, 1), lambda b: (b, 0)),
      pl.BlockSpec((G * n * n, 1), lambda b: (b, 0)),
  ] + [const_spec(a) for a in param_arrays]

  out_specs = (
      pl.BlockSpec((G * n, dx), lambda b: (b, 0)),
      pl.BlockSpec((G * n * n, de), lambda b: (b, 0)),
      pl.BlockSpec((G, 1, dy), lambda b: (b, 0, 0)),
  )
  out_shape = (
      jax.ShapeDtypeStruct((bs * n, dx), f32),
      jax.ShapeDtypeStruct((bs * n * n, de), f32),
      jax.ShapeDtypeStruct((bs, 1, dy), f32),
  )

  kernel = functools.partial(
      _node_edge_kernel, n=n, G=G, dx=dx, de=de, dy=dy, n_head=n_head,
      dot_dtype=ddt, exact_recip=not use_bf16)

  newXf, newEf, new_y = pl.pallas_call(
      kernel,
      out_shape=out_shape,
      grid_spec=pltpu.PrefetchScalarGridSpec(
          num_scalar_prefetch=0,
          grid=(bs // G,),
          in_specs=in_specs,
          out_specs=out_specs,
      ),
      compiler_params=pltpu.CompilerParams(
          dimension_semantics=("parallel",),
          vmem_limit_bytes=32 * 1024 * 1024),
  )(Xf, Ef, yf, xm, pm, *param_arrays)
  return (newXf.reshape(bs, n, dx),
          newEf.reshape(bs, n, n, de),
          new_y.reshape(bs, dy))


def reference(X, E, y, node_mask, params):
  """Pure-JAX replica of the PyTorch forward (E_reg=None path)."""
  p = params
  n_head = p["n_head"]
  bs, n, dx = X.shape
  de = E.shape[-1]
  df = dx // n_head
  xm = node_mask.astype(jnp.float32)[..., None]
  em1 = xm[:, :, None, :]
  em2 = xm[:, None, :, :]
  Q = (X @ p["qw"] + p["qb"]) * xm
  K = (X @ p["kw"] + p["kb"]) * xm
  V = (X @ p["vw"] + p["vb"]) * xm
  Qh = Q.reshape(bs, n, n_head, df)
  Kh = K.reshape(bs, n, n_head, df)
  Vh = V.reshape(bs, n, n_head, df)
  Y = jnp.einsum("bihd,bjhd->bijh", Qh, Kh) / math.sqrt(df)
  E1 = (E @ p["emulw"] + p["emulb"]) * em1 * em2
  E2 = (E @ p["eaddw"] + p["eaddb"]) * em1 * em2
  Y = Y * (E1 + 1.0) + E2
  ye1 = (y @ p["yeaddw"] + p["yeaddb"])[:, None, None, :]
  ye2 = (y @ p["yemulw"] + p["yemulb"])[:, None, None, :]
  newE = ye1 + (ye2 + 1.0) * Y
  smask = jnp.broadcast_to(em2 > 0, Y.shape)
  attn = jax.nn.softmax(jnp.where(smask, Y, -1e30), axis=2)
  wV = jnp.einsum("bijh,bjhd->bihd", attn, Vh).reshape(bs, n, dx)
  yx1 = (y @ p["yxaddw"] + p["yxaddb"])[:, None, :]
  yx2 = (y @ p["yxmulw"] + p["yxmulb"])[:, None, :]
  newX = yx1 + (yx2 + 1.0) * wV
  newX = (newX @ p["xoutw"] + p["xoutb"]) * xm
  newE = (newE @ p["eoutw"] + p["eoutb"]) * em1 * em2
  xz = jnp.concatenate([jnp.mean(X, 1), jnp.min(X, 1), jnp.max(X, 1),
                        jnp.std(X, axis=1, ddof=1)], axis=-1)
  x_y = xz @ p["xyw"] + p["xyb"]
  Ef = E.reshape(bs, n * n, de)
  ez = jnp.concatenate([jnp.mean(Ef, 1), jnp.min(Ef, 1), jnp.max(Ef, 1),
                        jnp.std(Ef, axis=1, ddof=1)], axis=-1)
  e_y = ez @ p["eyw"] + p["eyb"]
  new_y = (y @ p["yyw"] + p["yyb"]) + x_y + e_y
  h = jnp.maximum(new_y @ p["y1w"] + p["y1b"], 0.0)
  new_y = h @ p["y2w"] + p["y2b"]
  return newX, newE, new_y


if __name__ == "__main__":
  bs, n, dx, de, dy, n_head = 2, 8, 32, 16, 16, 4

  keys = iter(jax.random.split(jax.random.PRNGKey(0), 48))

  def lin(fi, fo):
    k1, k2 = jax.random.split(next(keys))
    bound = 1.0 / math.sqrt(fi)
    w = jax.random.uniform(k1, (fi, fo), jnp.float32, -bound, bound)
    b = jax.random.uniform(k2, (1, fo), jnp.float32, -bound, bound)
    return w, b

  params = {"n_head": n_head}
  params["qw"], params["qb"] = lin(dx, dx)
  params["kw"], params["kb"] = lin(dx, dx)
  params["vw"], params["vb"] = lin(dx, dx)
  params["emulw"], params["emulb"] = lin(de, n_head)
  params["eaddw"], params["eaddb"] = lin(de, n_head)
  params["yeaddw"], params["yeaddb"] = lin(dy, n_head)
  params["yemulw"], params["yemulb"] = lin(dy, n_head)
  params["yxaddw"], params["yxaddb"] = lin(dy, dx)
  params["yxmulw"], params["yxmulb"] = lin(dy, dx)
  params["yyw"], params["yyb"] = lin(dy, dy)
  params["xyw"], params["xyb"] = lin(4 * dx, dy)
  params["eyw"], params["eyb"] = lin(4 * de, dy)
  params["xoutw"], params["xoutb"] = lin(dx, dx)
  params["eoutw"], params["eoutb"] = lin(n_head, de)
  params["y1w"], params["y1b"] = lin(dy, dy)
  params["y2w"], params["y2b"] = lin(dy, dy)

  X = jax.random.normal(next(keys), (bs, n, dx), jnp.float32)
  E = jax.random.normal(next(keys), (bs, n, n, de), jnp.float32)
  yg = jax.random.normal(next(keys), (bs, dy), jnp.float32)
  node_mask = jnp.array([[1, 1, 1, 1, 1, 1, 1, 1],
                         [1, 1, 1, 1, 1, 1, 0, 0]], jnp.float32)
  t_init = jnp.full((bs, 1), 0.5, jnp.float32)

  refX, refE, refy = reference(X, E, yg, node_mask, params)

  # f32 MXU-input path: correctness check of the kernel math (exact reciprocal).
  packed_f32 = pack_params(params, use_bf16=False)
  fX, fE, fy = node_edge_block(X, E, yg, node_mask, t_init, packed_f32,
                               use_bf16=False)
  jax.block_until_ready((fX, fE, fy))
  assert np.allclose(np.asarray(fX), np.asarray(refX), atol=1e-2, rtol=1e-2)
  assert np.allclose(np.asarray(fE), np.asarray(refE), atol=1e-2, rtol=1e-2)
  assert np.allclose(np.asarray(fy), np.asarray(refy), atol=1e-2, rtol=1e-2)

  # bf16-I/O path (default / perf path): looser tolerance for bf16 rounding of
  # the pre-cast matmul operands.
  packed_bf16 = pack_params(params, use_bf16=True)
  bX, bE, by = node_edge_block(X, E, yg, node_mask, t_init, packed_bf16,
                               use_bf16=True)
  jax.block_until_ready((bX, bE, by))
  assert np.allclose(np.asarray(bX), np.asarray(refX), atol=5e-2, rtol=5e-2)
  assert np.allclose(np.asarray(bE), np.asarray(refE), atol=5e-2, rtol=5e-2)
  assert np.allclose(np.asarray(by), np.asarray(refy), atol=5e-2, rtol=5e-2)

  print("KERNEL_OK")
</pallas_src>

<mosaic_0001>
module attributes {stable_mosaic.version = 11 : i64} {
  func.func @_node_edge_kernel(%arg0: i32, %arg1: memref<8x32xf32, #tpu.memory_space<vmem>>, %arg2: memref<64x16xf32, #tpu.memory_space<vmem>>, %arg3: memref<1x1x16xf32, #tpu.memory_space<vmem>>, %arg4: memref<8x1xf32, #tpu.memory_space<vmem>>, %arg5: memref<64x1xf32, #tpu.memory_space<vmem>>, %arg6: memref<32x96xf32, #tpu.memory_space<vmem>>, %arg7: memref<1x96xf32, #tpu.memory_space<vmem>>, %arg8: memref<16x8xf32, #tpu.memory_space<vmem>>, %arg9: memref<1x8xf32, #tpu.memory_space<vmem>>, %arg10: memref<16x88xf32, #tpu.memory_space<vmem>>, %arg11: memref<1x88xf32, #tpu.memory_space<vmem>>, %arg12: memref<128x16xf32, #tpu.memory_space<vmem>>, %arg13: memref<1x16xf32, #tpu.memory_space<vmem>>, %arg14: memref<64x16xf32, #tpu.memory_space<vmem>>, %arg15: memref<1x16xf32, #tpu.memory_space<vmem>>, %arg16: memref<32x32xf32, #tpu.memory_space<vmem>>, %arg17: memref<1x32xf32, #tpu.memory_space<vmem>>, %arg18: memref<4x16xf32, #tpu.memory_space<vmem>>, %arg19: memref<1x16xf32, #tpu.memory_space<vmem>>, %arg20: memref<16x16xf32, #tpu.memory_space<vmem>>, %arg21: memref<1x16xf32, #tpu.memory_space<vmem>>, %arg22: memref<16x16xf32, #tpu.memory_space<vmem>>, %arg23: memref<1x16xf32, #tpu.memory_space<vmem>>, %arg24: memref<32x4xf32, #tpu.memory_space<vmem>>, %arg25: memref<4x32xf32, #tpu.memory_space<vmem>>, %arg26: memref<8x32xf32, #tpu.memory_space<vmem>>, %arg27: memref<64x16xf32, #tpu.memory_space<vmem>>, %arg28: memref<1x1x16xf32, #tpu.memory_space<vmem>>) attributes {dimension_semantics = [#tpu.dimension_semantics<parallel>], iteration_bounds = array<i64: 2>, scalar_prefetch = 0 : i64, scratch_operands = 0 : i64, tpu.core_type = #tpu.core_type<tc>, window_params = [{transform_indices = @transform_0, window_bounds = array<i64: 8, 32>}, {transform_indices = @transform_1, window_bounds = array<i64: 64, 16>}, {transform_indices = @transform_2, window_bounds = array<i64: 1, 1, 16>}, {transform_indices = @transform_3, window_bounds = array<i64: 8, 1>}, {transform_indices = @transform_4, window_bounds = array<i64: 64, 1>}, {pipeline_mode = #tpu.pipeline_mode<synchronous>, transform_indices = @transform_5, window_bounds = array<i64: 32, 96>}, {pipeline_mode = #tpu.pipeline_mode<synchronous>, transform_indices = @transform_6, window_bounds = array<i64: 1, 96>}, {pipeline_mode = #tpu.pipeline_mode<synchronous>, transform_indices = @transform_7, window_bounds = array<i64: 16, 8>}, {pipeline_mode = #tpu.pipeline_mode<synchronous>, transform_indices = @transform_8, window_bounds = array<i64: 1, 8>}, {pipeline_mode = #tpu.pipeline_mode<synchronous>, transform_indices = @transform_9, window_bounds = array<i64: 16, 88>}, {pipeline_mode = #tpu.pipeline_mode<synchronous>, transform_indices = @transform_10, window_bounds = array<i64: 1, 88>}, {pipeline_mode = #tpu.pipeline_mode<synchronous>, transform_indices = @transform_11, window_bounds = array<i64: 128, 16>}, {pipeline_mode = #tpu.pipeline_mode<synchronous>, transform_indices = @transform_12, window_bounds = array<i64: 1, 16>}, {pipeline_mode = #tpu.pipeline_mode<synchronous>, transform_indices = @transform_13, window_bounds = array<i64: 64, 16>}, {pipeline_mode = #tpu.pipeline_mode<synchronous>, transform_indices = @transform_14, window_bounds = array<i64: 1, 16>}, {pipeline_mode = #tpu.pipeline_mode<synchronous>, transform_indices = @transform_15, window_bounds = array<i64: 32, 32>}, {pipeline_mode = #tpu.pipeline_mode<synchronous>, transform_indices = @transform_16, window_bounds = array<i64: 1, 32>}, {pipeline_mode = #tpu.pipeline_mode<synchronous>, transform_indices = @transform_17, window_bounds = array<i64: 4, 16>}, {pipeline_mode = #tpu.pipeline_mode<synchronous>, transform_indices = @transform_18, window_bounds = array<i64: 1, 16>}, {pipeline_mode = #tpu.pipeline_mode<synchronous>, transform_indices = @transform_19, window_bounds = array<i64: 16, 16>}, {pipeline_mode = #tpu.pipeline_mode<synchronous>, transform_indices = @transform_20, window_bounds = array<i64: 1, 16>}, {pipeline_mode = #tpu.pipeline_mode<synchronous>, transform_indices = @transform_21, window_bounds = array<i64: 16, 16>}, {pipeline_mode = #tpu.pipeline_mode<synchronous>, transform_indices = @transform_22, window_bounds = array<i64: 1, 16>}, {pipeline_mode = #tpu.pipeline_mode<synchronous>, transform_indices = @transform_23, window_bounds = array<i64: 32, 4>}, {pipeline_mode = #tpu.pipeline_mode<synchronous>, transform_indices = @transform_24, window_bounds = array<i64: 4, 32>}, {transform_indices = @transform_25, window_bounds = array<i64: 8, 32>}, {transform_indices = @transform_26, window_bounds = array<i64: 64, 16>}, {transform_indices = @transform_27, window_bounds = array<i64: 1, 1, 16>}]} {
    %c0 = arith.constant 0 : index
    %c0_0 = arith.constant 0 : index
    %0 = vector.load %arg1[%c0, %c0_0] : memref<8x32xf32, #tpu.memory_space<vmem>>, vector<8x32xf32>
    %c0_1 = arith.constant 0 : index
    %c0_2 = arith.constant 0 : index
    %1 = vector.load %arg2[%c0_1, %c0_2] : memref<64x16xf32, #tpu.memory_space<vmem>>, vector<64x16xf32>
    %c0_3 = arith.constant 0 : index
    %c0_4 = arith.constant 0 : index
    %c0_5 = arith.constant 0 : index
    %2 = vector.load %arg3[%c0_3, %c0_4, %c0_5] : memref<1x1x16xf32, #tpu.memory_space<vmem>>, vector<1x1x16xf32>
    %3 = vector.shape_cast %2 : vector<1x1x16xf32> to vector<1x16xf32>
    %c0_6 = arith.constant 0 : index
    %c0_7 = arith.constant 0 : index
    %4 = vector.load %arg4[%c0_6, %c0_7] : memref<8x1xf32, #tpu.memory_space<vmem>>, vector<8x1xf32>
    %c0_8 = arith.constant 0 : index
    %c0_9 = arith.constant 0 : index
    %5 = vector.load %arg5[%c0_8, %c0_9] : memref<64x1xf32, #tpu.memory_space<vmem>>, vector<64x1xf32>
    %c0_10 = arith.constant 0 : index
    %c0_11 = arith.constant 0 : index
    %6 = vector.load %arg6[%c0_10, %c0_11] : memref<32x96xf32, #tpu.memory_space<vmem>>, vector<32x96xf32>
    %cst = arith.constant dense<0.000000e+00> : vector<8x96xf32>
    %7 = tpu.matmul %0, %6, %cst {dimension_numbers = #tpu.dot_dimension_numbers<[1], [0], [0], [1], [0, 0, 1, 1], [], []>} : vector<8x32xf32>, vector<32x96xf32>, vector<8x96xf32> -> vector<8x96xf32>
    %c0_12 = arith.constant 0 : index
    %c0_13 = arith.constant 0 : index
    %8 = vector.load %arg7[%c0_12, %c0_13] : memref<1x96xf32, #tpu.memory_space<vmem>>, vector<1x96xf32>
    %9 = vector.broadcast %8 : vector<1x96xf32> to vector<8x96xf32>
    %10 = arith.addf %7, %9 : vector<8x96xf32>
    %11 = vector.broadcast %4 : vector<8x1xf32> to vector<8x96xf32>
    %12 = arith.mulf %10, %11 : vector<8x96xf32>
    %13 = vector.extract_strided_slice %12 {offsets = [0, 0], sizes = [8, 32], strides = [1, 1]} : vector<8x96xf32> to vector<8x32xf32>
    %14 = vector.extract_strided_slice %12 {offsets = [0, 32], sizes = [8, 32], strides = [1, 1]} : vector<8x96xf32> to vector<8x32xf32>
    %15 = vector.extract_strided_slice %12 {offsets = [0, 64], sizes = [8, 32], strides = [1, 1]} : vector<8x96xf32> to vector<8x32xf32>
    %c0_14 = arith.constant 0 : index
    %c0_15 = arith.constant 0 : index
    %16 = vector.load %arg8[%c0_14, %c0_15] : memref<16x8xf32, #tpu.memory_space<vmem>>, vector<16x8xf32>
    %cst_16 = arith.constant dense<0.000000e+00> : vector<64x8xf32>
    %17 = tpu.matmul %1, %16, %cst_16 {dimension_numbers = #tpu.dot_dimension_numbers<[1], [0], [0], [1], [0, 0, 1, 1], [], []>} : vector<64x16xf32>, vector<16x8xf32>, vector<64x8xf32> -> vector<64x8xf32>
    %c0_17 = arith.constant 0 : index
    %c0_18 = arith.constant 0 : index
    %18 = vector.load %arg9[%c0_17, %c0_18] : memref<1x8xf32, #tpu.memory_space<vmem>>, vector<1x8xf32>
    %19 = vector.broadcast %18 : vector<1x8xf32> to vector<64x8xf32>
    %20 = arith.addf %17, %19 : vector<64x8xf32>
    %21 = vector.extract_strided_slice %20 {offsets = [0, 0], sizes = [64, 4], strides = [1, 1]} : vector<64x8xf32> to vector<64x4xf32>
    %22 = vector.broadcast %5 : vector<64x1xf32> to vector<64x4xf32>
    %23 = arith.mulf %21, %22 : vector<64x4xf32>
    %24 = vector.extract_strided_slice %20 {offsets = [0, 4], sizes = [64, 4], strides = [1, 1]} : vector<64x8xf32> to vector<64x4xf32>
    %25 = vector.broadcast %5 : vector<64x1xf32> to vector<64x4xf32>
    %26 = arith.mulf %24, %25 : vector<64x4xf32>
    %c0_19 = arith.constant 0 : index
    %c0_20 = arith.constant 0 : index
    %27 = vector.load %arg10[%c0_19, %c0_20] : memref<16x88xf32, #tpu.memory_space<vmem>>, vector<16x88xf32>
    %cst_21 = arith.constant dense<0.000000e+00> : vector<1x88xf32>
    %28 = tpu.matmul %3, %27, %cst_21 {dimension_numbers = #tpu.dot_dimension_numbers<[1], [0], [0], [1], [0, 0, 1, 1], [], []>} : vector<1x16xf32>, vector<16x88xf32>, vector<1x88xf32> -> vector<1x88xf32>
    %c0_22 = arith.constant 0 : index
    %c0_23 = arith.constant 0 : index
    %29 = vector.load %arg11[%c0_22, %c0_23] : memref<1x88xf32, #tpu.memory_space<vmem>>, vector<1x88xf32>
    %30 = arith.addf %28, %29 : vector<1x88xf32>
    %31 = vector.extract_strided_slice %30 {offsets = [0, 0], sizes = [1, 4], strides = [1, 1]} : vector<1x88xf32> to vector<1x4xf32>
    %32 = vector.extract_strided_slice %30 {offsets = [0, 4], sizes = [1, 4], strides = [1, 1]} : vector<1x88xf32> to vector<1x4xf32>
    %33 = vector.extract_strided_slice %30 {offsets = [0, 8], sizes = [1, 32], strides = [1, 1]} : vector<1x88xf32> to vector<1x32xf32>
    %34 = vector.extract_strided_slice %30 {offsets = [0, 40], sizes = [1, 32], strides = [1, 1]} : vector<1x88xf32> to vector<1x32xf32>
    %35 = vector.extract_strided_slice %30 {offsets = [0, 72], sizes = [1, 16], strides = [1, 1]} : vector<1x88xf32> to vector<1x16xf32>
    %36 = vector.shape_cast %13 : vector<8x32xf32> to vector<8x1x32xf32>
    %37 = vector.shape_cast %36 : vector<8x1x32xf32> to vector<8x1x32xf32>
    %38 = vector.broadcast %37 : vector<8x1x32xf32> to vector<8x8x32xf32>
    %39 = vector.shape_cast %38 : vector<8x8x32xf32> to vector<64x32xf32>
    %40 = vector.shape_cast %14 : vector<8x32xf32> to vector<1x1x8x32xf32>
    %41 = vector.shape_cast %40 : vector<1x1x8x32xf32> to vector<1x1x8x32xf32>
    %42 = vector.broadcast %41 : vector<1x1x8x32xf32> to vector<1x8x8x32xf32>
    %43 = vector.shape_cast %42 : vector<1x8x8x32xf32> to vector<64x32xf32>
    %44 = arith.mulf %39, %43 : vector<64x32xf32>
    %c0_24 = arith.constant 0 : index
    %c0_25 = arith.constant 0 : index
    %45 = vector.load %arg24[%c0_24, %c0_25] : memref<32x4xf32, #tpu.memory_space<vmem>>, vector<32x4xf32>
    %cst_26 = arith.constant dense<0.000000e+00> : vector<64x4xf32>
    %46 = tpu.matmul %44, %45, %cst_26 {dimension_numbers = #tpu.dot_dimension_numbers<[1], [0], [0], [1], [0, 0, 1, 1], [], []>} : vector<64x32xf32>, vector<32x4xf32>, vector<64x4xf32> -> vector<64x4xf32>
    %cst_27 = arith.constant 1.000000e+00 : f32
    %47 = vector.broadcast %cst_27 : f32 to vector<64x4xf32>
    %48 = arith.addf %23, %47 : vector<64x4xf32>
    %49 = arith.mulf %46, %48 : vector<64x4xf32>
    %50 = arith.addf %49, %26 : vector<64x4xf32>
    %51 = vector.shape_cast %31 : vector<1x4xf32> to vector<1x1x4xf32>
    %52 = vector.shape_cast %51 : vector<1x1x4xf32> to vector<1x1x4xf32>
    %53 = vector.broadcast %52 : vector<1x1x4xf32> to vector<1x64x4xf32>
    %54 = vector.shape_cast %53 : vector<1x64x4xf32> to vector<64x4xf32>
    %55 = vector.shape_cast %32 : vector<1x4xf32> to vector<1x1x4xf32>
    %56 = vector.shape_cast %55 : vector<1x1x4xf32> to vector<1x1x4xf32>
    %57 = vector.broadcast %56 : vector<1x1x4xf32> to vector<1x64x4xf32>
    %58 = vector.shape_cast %57 : vector<1x64x4xf32> to vector<64x4xf32>
    %cst_28 = arith.constant 1.000000e+00 : f32
    %59 = vector.broadcast %cst_28 : f32 to vector<64x4xf32>
    %60 = arith.addf %58, %59 : vector<64x4xf32>
    %61 = arith.mulf %60, %50 : vector<64x4xf32>
    %62 = arith.addf %54, %61 : vector<64x4xf32>
    %c0_29 = arith.constant 0 : index
    %c0_30 = arith.constant 0 : index
    %63 = vector.load %arg18[%c0_29, %c0_30] : memref<4x16xf32, #tpu.memory_space<vmem>>, vector<4x16xf32>
    %cst_31 = arith.constant dense<0.000000e+00> : vector<64x16xf32>
    %64 = tpu.matmul %62, %63, %cst_31 {dimension_numbers = #tpu.dot_dimension_numbers<[1], [0], [0], [1], [0, 0, 1, 1], [], []>} : vector<64x4xf32>, vector<4x16xf32>, vector<64x16xf32> -> vector<64x16xf32>
    %c0_32 = arith.constant 0 : index
    %c0_33 = arith.constant 0 : index
    %65 = vector.load %arg19[%c0_32, %c0_33] : memref<1x16xf32, #tpu.memory_space<vmem>>, vector<1x16xf32>
    %66 = vector.broadcast %65 : vector<1x16xf32> to vector<64x16xf32>
    %67 = arith.addf %64, %66 : vector<64x16xf32>
    %68 = vector.broadcast %5 : vector<64x1xf32> to vector<64x16xf32>
    %69 = arith.mulf %67, %68 : vector<64x16xf32>
    %c0_34 = arith.constant 0 : index
    %c0_35 = arith.constant 0 : index
    %70 = vector.load %arg27[%c0_34, %c0_35] : memref<64x16xf32, #tpu.memory_space<vmem>>, vector<64x16xf32>
    tpu.vector_store %arg27[%c0_34, %c0_35], %69 {strides = array<i32>} : memref<64x16xf32, #tpu.memory_space<vmem>>, vector<64x16xf32>,
    %cst_36 = arith.constant 0.000000e+00 : f32
    %71 = vector.broadcast %cst_36 : f32 to vector<64x1xf32>
    %72 = arith.cmpf ogt, %5, %71 : vector<64x1xf32>
    %cst_37 = arith.constant -1.000000e+30 : f32
    %73 = vector.shape_cast %72 : vector<64x1xi1> to vector<64x1xi1>
    %74 = vector.broadcast %73 : vector<64x1xi1> to vector<64x4xi1>
    %75 = vector.broadcast %cst_37 : f32 to vector<64x4xf32>
    %76 = arith.select %74, %50, %75 : vector<64x4xi1>, vector<64x4xf32>
    %77 = vector.shape_cast %76 : vector<64x4xf32> to vector<8x8x4xf32>
    %cst_38 = arith.constant dense<0xFF800000> : vector<8x4xf32>
    %78 = vector.multi_reduction <maximumf>, %77, %cst_38 [1] : vector<8x8x4xf32> to vector<8x4xf32>
    %79 = vector.shape_cast %78 : vector<8x4xf32> to vector<8x1x4xf32>
    %80 = vector.broadcast %79 : vector<8x1x4xf32> to vector<8x8x4xf32>
    %81 = arith.subf %77, %80 : vector<8x8x4xf32>
    %82 = math.exp %81 : vector<8x8x4xf32>
    %cst_39 = arith.constant dense<0.000000e+00> : vector<8x4xf32>
    %83 = vector.multi_reduction <add>, %82, %cst_39 [1] : vector<8x8x4xf32> to vector<8x4xf32>
    %84 = vector.shape_cast %83 : vector<8x4xf32> to vector<8x1x4xf32>
    %cst_40 = arith.constant 1.000000e+00 : f32
    %85 = vector.broadcast %cst_40 : f32 to vector<8x1x4xf32>
    %86 = arith.divf %85, %84 : vector<8x1x4xf32>
    %87 = vector.broadcast %86 : vector<8x1x4xf32> to vector<8x8x4xf32>
    %88 = arith.mulf %82, %87 : vector<8x8x4xf32>
    %89 = vector.shape_cast %88 : vector<8x8x4xf32> to vector<64x4xf32>
    %c0_41 = arith.constant 0 : index
    %c0_42 = arith.constant 0 : index
    %90 = vector.load %arg25[%c0_41, %c0_42] : memref<4x32xf32, #tpu.memory_space<vmem>>, vector<4x32xf32>
    %cst_43 = arith.constant dense<0.000000e+00> : vector<64x32xf32>
    %91 = tpu.matmul %89, %90, %cst_43 {dimension_numbers = #tpu.dot_dimension_numbers<[1], [0], [0], [1], [0, 0, 1, 1], [], []>} : vector<64x4xf32>, vector<4x32xf32>, vector<64x32xf32> -> vector<64x32xf32>
    %92 = vector.shape_cast %15 : vector<8x32xf32> to vector<1x1x8x32xf32>
    %93 = vector.shape_cast %92 : vector<1x1x8x32xf32> to vector<1x1x8x32xf32>
    %94 = vector.broadcast %93 : vector<1x1x8x32xf32> to vector<1x8x8x32xf32>
    %95 = vector.shape_cast %94 : vector<1x8x8x32xf32> to vector<64x32xf32>
    %96 = arith.mulf %91, %95 : vector<64x32xf32>
    %97 = vector.shape_cast %96 : vector<64x32xf32> to vector<8x8x32xf32>
    %cst_44 = arith.constant dense<0.000000e+00> : vector<8x32xf32>
    %98 = vector.multi_reduction <add>, %97, %cst_44 [1] : vector<8x8x32xf32> to vector<8x32xf32>
    %99 = vector.shape_cast %33 : vector<1x32xf32> to vector<1x1x32xf32>
    %100 = vector.shape_cast %99 : vector<1x1x32xf32> to vector<1x1x32xf32>
    %101 = vector.broadcast %100 : vector<1x1x32xf32> to vector<1x8x32xf32>
    %102 = vector.shape_cast %101 : vector<1x8x32xf32> to vector<8x32xf32>
    %103 = vector.shape_cast %34 : vector<1x32xf32> to vector<1x1x32xf32>
    %104 = vector.shape_cast %103 : vector<1x1x32xf32> to vector<1x1x32xf32>
    %105 = vector.broadcast %104 : vector<1x1x32xf32> to vector<1x8x32xf32>
    %106 = vector.shape_cast %105 : vector<1x8x32xf32> to vector<8x32xf32>
    %cst_45 = arith.constant 1.000000e+00 : f32
    %107 = vector.broadcast %cst_45 : f32 to vector<8x32xf32>
    %108 = arith.addf %106, %107 : vector<8x32xf32>
    %109 = arith.mulf %108, %98 : vector<8x32xf32>
    %110 = arith.addf %102, %109 : vector<8x32xf32>
    %c0_46 = arith.constant 0 : index
    %c0_47 = arith.constant 0 : index
    %111 = vector.load %arg16[%c0_46, %c0_47] : memref<32x32xf32, #tpu.memory_space<vmem>>, vector<32x32xf32>
    %cst_48 = arith.constant dense<0.000000e+00> : vector<8x32xf32>
    %112 = tpu.matmul %110, %111, %cst_48 {dimension_numbers = #tpu.dot_dimension_numbers<[1], [0], [0], [1], [0, 0, 1, 1], [], []>} : vector<8x32xf32>, vector<32x32xf32>, vector<8x32xf32> -> vector<8x32xf32>
    %c0_49 = arith.constant 0 : index
    %c0_50 = arith.constant 0 : index
    %113 = vector.load %arg17[%c0_49, %c0_50] : memref<1x32xf32, #tpu.memory_space<vmem>>, vector<1x32xf32>
    %114 = vector.broadcast %113 : vector<1x32xf32> to vector<8x32xf32>
    %115 = arith.addf %112, %114 : vector<8x32xf32>
    %116 = vector.broadcast %4 : vector<8x1xf32> to vector<8x32xf32>
    %117 = arith.mulf %115, %116 : vector<8x32xf32>
    %c0_51 = arith.constant 0 : index
    %c0_52 = arith.constant 0 : index
    %118 = vector.load %arg26[%c0_51, %c0_52] : memref<8x32xf32, #tpu.memory_space<vmem>>, vector<8x32xf32>
    tpu.vector_store %arg26[%c0_51, %c0_52], %117 {strides = array<i32>} : memref<8x32xf32, #tpu.memory_space<vmem>>, vector<8x32xf32>,
    %119 = vector.shape_cast %0 : vector<8x32xf32> to vector<1x8x32xf32>
    %120 = vector.shape_cast %1 : vector<64x16xf32> to vector<1x64x16xf32>
    %cst_53 = arith.constant dense<0.000000e+00> : vector<1x32xf32>
    %121 = vector.multi_reduction <add>, %119, %cst_53 [1] : vector<1x8x32xf32> to vector<1x32xf32>
    %cst_54 = arith.constant 8.000000e+00 : f32
    %122 = vector.broadcast %cst_54 : f32 to vector<1x32xf32>
    %123 = arith.divf %121, %122 : vector<1x32xf32>
    %124 = vector.shape_cast %123 : vector<1x32xf32> to vector<1x1x32xf32>
    %125 = vector.broadcast %124 : vector<1x1x32xf32> to vector<1x8x32xf32>
    %126 = arith.subf %119, %125 : vector<1x8x32xf32>
    %127 = arith.mulf %126, %126 : vector<1x8x32xf32>
    %cst_55 = arith.constant dense<0.000000e+00> : vector<1x32xf32>
    %128 = vector.multi_reduction <add>, %127, %cst_55 [1] : vector<1x8x32xf32> to vector<1x32xf32>
    %cst_56 = arith.constant 0.142857149 : f32
    %129 = vector.broadcast %cst_56 : f32 to vector<1x32xf32>
    %130 = arith.mulf %128, %129 : vector<1x32xf32>
    %131 = math.sqrt %130 : vector<1x32xf32>
    %cst_57 = arith.constant dense<0x7F800000> : vector<1x32xf32>
    %132 = vector.multi_reduction <minimumf>, %119, %cst_57 [1] : vector<1x8x32xf32> to vector<1x32xf32>
    %cst_58 = arith.constant dense<0xFF800000> : vector<1x32xf32>
    %133 = vector.multi_reduction <maximumf>, %119, %cst_58 [1] : vector<1x8x32xf32> to vector<1x32xf32>
    %134 = tpu.concatenate %123, %132, %133, %131 in 1 : vector<1x32xf32>, vector<1x32xf32>, vector<1x32xf32>, vector<1x32xf32> -> vector<1x128xf32>
    %cst_59 = arith.constant dense<0.000000e+00> : vector<1x16xf32>
    %135 = vector.multi_reduction <add>, %120, %cst_59 [1] : vector<1x64x16xf32> to vector<1x16xf32>
    %cst_60 = arith.constant 6.400000e+01 : f32
    %136 = vector.broadcast %cst_60 : f32 to vector<1x16xf32>
    %137 = arith.divf %135, %136 : vector<1x16xf32>
    %138 = vector.shape_cast %137 : vector<1x16xf32> to vector<1x1x16xf32>
    %139 = vector.broadcast %138 : vector<1x1x16xf32> to vector<1x64x16xf32>
    %140 = arith.subf %120, %139 : vector<1x64x16xf32>
    %141 = arith.mulf %140, %140 : vector<1x64x16xf32>
    %cst_61 = arith.constant dense<0.000000e+00> : vector<1x16xf32>
    %142 = vector.multi_reduction <add>, %141, %cst_61 [1] : vector<1x64x16xf32> to vector<1x16xf32>
    %cst_62 = arith.constant 0.0158730168 : f32
    %143 = vector.broadcast %cst_62 : f32 to vector<1x16xf32>
    %144 = arith.mulf %142, %143 : vector<1x16xf32>
    %145 = math.sqrt %144 : vector<1x16xf32>
    %cst_63 = arith.constant dense<0x7F800000> : vector<1x16xf32>
    %146 = vector.multi_reduction <minimumf>, %120, %cst_63 [1] : vector<1x64x16xf32> to vector<1x16xf32>
    %cst_64 = arith.constant dense<0xFF800000> : vector<1x16xf32>
    %147 = vector.multi_reduction <maximumf>, %120, %cst_64 [1] : vector<1x64x16xf32> to vector<1x16xf32>
    %148 = tpu.concatenate %137, %146, %147, %145 in 1 : vector<1x16xf32>, vector<1x16xf32>, vector<1x16xf32>, vector<1x16xf32> -> vector<1x64xf32>
    %c0_65 = arith.constant 0 : index
    %c0_66 = arith.constant 0 : index
    %149 = vector.load %arg12[%c0_65, %c0_66] : memref<128x16xf32, #tpu.memory_space<vmem>>, vector<128x16xf32>
    %cst_67 = arith.constant dense<0.000000e+00> : vector<1x16xf32>
    %150 = tpu.matmul %134, %149, %cst_67 {dimension_numbers = #tpu.dot_dimension_numbers<[1], [0], [0], [1], [0, 0, 1, 1], [], []>} : vector<1x128xf32>, vector<128x16xf32>, vector<1x16xf32> -> vector<1x16xf32>
    %151 = arith.addf %35, %150 : vector<1x16xf32>
    %c0_68 = arith.constant 0 : index
    %c0_69 = arith.constant 0 : index
    %152 = vector.load %arg13[%c0_68, %c0_69] : memref<1x16xf32, #tpu.memory_space<vmem>>, vector<1x16xf32>
    %153 = arith.addf %151, %152 : vector<1x16xf32>
    %c0_70 = arith.constant 0 : index
    %c0_71 = arith.constant 0 : index
    %154 = vector.load %arg14[%c0_70, %c0_71] : memref<64x16xf32, #tpu.memory_space<vmem>>, vector<64x16xf32>
    %cst_72 = arith.constant dense<0.000000e+00> : vector<1x16xf32>
    %155 = tpu.matmul %148, %154, %cst_72 {dimension_numbers = #tpu.dot_dimension_numbers<[1], [0], [0], [1], [0, 0, 1, 1], [], []>} : vector<1x64xf32>, vector<64x16xf32>, vector<1x16xf32> -> vector<1x16xf32>
    %156 = arith.addf %153, %155 : vector<1x16xf32>
    %c0_73 = arith.constant 0 : index
    %c0_74 = arith.constant 0 : index
    %157 = vector.load %arg15[%c0_73, %c0_74] : memref<1x16xf32, #tpu.memory_space<vmem>>, vector<1x16xf32>
    %158 = arith.addf %156, %157 : vector<1x16xf32>
    %c0_75 = arith.constant 0 : index
    %c0_76 = arith.constant 0 : index
    %159 = vector.load %arg20[%c0_75, %c0_76] : memref<16x16xf32, #tpu.memory_space<vmem>>, vector<16x16xf32>
    %cst_77 = arith.constant dense<0.000000e+00> : vector<1x16xf32>
    %160 = tpu.matmul %158, %159, %cst_77 {dimension_numbers = #tpu.dot_dimension_numbers<[1], [0], [0], [1], [0, 0, 1, 1], [], []>} : vector<1x16xf32>, vector<16x16xf32>, vector<1x16xf32> -> vector<1x16xf32>
    %c0_78 = arith.constant 0 : index
    %c0_79 = arith.constant 0 : index
    %161 = vector.load %arg21[%c0_78, %c0_79] : memref<1x16xf32, #tpu.memory_space<vmem>>, vector<1x16xf32>
    %162 = arith.addf %160, %161 : vector<1x16xf32>
    %cst_80 = arith.constant 0.000000e+00 : f32
    %163 = vector.broadcast %cst_80 : f32 to vector<1x16xf32>
    %164 = arith.maximumf %162, %163 : vector<1x16xf32>
    %c0_81 = arith.constant 0 : index
    %c0_82 = arith.constant 0 : index
    %165 = vector.load %arg22[%c0_81, %c0_82] : memref<16x16xf32, #tpu.memory_space<vmem>>, vector<16x16xf32>
    %cst_83 = arith.constant dense<0.000000e+00> : vector<1x16xf32>
    %166 = tpu.matmul %164, %165, %cst_83 {dimension_numbers = #tpu.dot_dimension_numbers<[1], [0], [0], [1], [0, 0, 1, 1], [], []>} : vector<1x16xf32>, vector<16x16xf32>, vector<1x16xf32> -> vector<1x16xf32>
    %c0_84 = arith.constant 0 : index
    %c0_85 = arith.constant 0 : index
    %167 = vector.load %arg23[%c0_84, %c0_85] : memref<1x16xf32, #tpu.memory_space<vmem>>, vector<1x16xf32>
    %168 = arith.addf %166, %167 : vector<1x16xf32>
    %169 = vector.shape_cast %168 : vector<1x16xf32> to vector<1x1x16xf32>
    %c0_86 = arith.constant 0 : index
    %c0_87 = arith.constant 0 : index
    %c0_88 = arith.constant 0 : index
    %170 = vector.load %arg28[%c0_86, %c0_87, %c0_88] : memref<1x1x16xf32, #tpu.memory_space<vmem>>, vector<1x1x16xf32>
    tpu.vector_store %arg28[%c0_86, %c0_87, %c0_88], %169 {strides = array<i32>} : memref<1x1x16xf32, #tpu.memory_space<vmem>>, vector<1x1x16xf32>,
    return
  }
  func.func @transform_0(%arg0: i32) -> (i32, i32) {
    %c0_i32 = arith.constant 0 : i32
    %c0_i32_0 = arith.constant 0 : i32
    return %arg0, %c0_i32 : i32, i32
  }
  func.func @transform_1(%arg0: i32) -> (i32, i32) {
    %c0_i32 = arith.constant 0 : i32
    %c0_i32_0 = arith.constant 0 : i32
    return %arg0, %c0_i32 : i32, i32
  }
  func.func @transform_2(%arg0: i32) -> (i32, i32, i32) {
    %c0_i32 = arith.constant 0 : i32
    %c0_i32_0 = arith.constant 0 : i32
    %c0_i32_1 = arith.constant 0 : i32
    return %arg0, %c0_i32, %c0_i32_0 : i32, i32, i32
  }
  func.func @transform_3(%arg0: i32) -> (i32, i32) {
    %c0_i32 = arith.constant 0 : i32
    %c0_i32_0 = arith.constant 0 : i32
    return %arg0, %c0_i32 : i32, i32
  }
  func.func @transform_4(%arg0: i32) -> (i32, i32) {
    %c0_i32 = arith.constant 0 : i32
    %c0_i32_0 = arith.constant 0 : i32
    return %arg0, %c0_i32 : i32, i32
  }
  func.func @transform_5(%arg0: i32) -> (i32, i32) {
    %c0_i32 = arith.constant 0 : i32
    %c0_i32_0 = arith.constant 0 : i32
    %c0_i32_1 = arith.constant 0 : i32
    return %c0_i32, %c0_i32_0 : i32, i32
  }
  func.func @transform_6(%arg0: i32) -> (i32, i32) {
    %c0_i32 = arith.constant 0 : i32
    %c0_i32_0 = arith.constant 0 : i32
    %c0_i32_1 = arith.constant 0 : i32
    return %c0_i32, %c0_i32_0 : i32, i32
  }
  func.func @transform_7(%arg0: i32) -> (i32, i32) {
    %c0_i32 = arith.constant 0 : i32
    %c0_i32_0 = arith.constant 0 : i32
    %c0_i32_1 = arith.constant 0 : i32
    return %c0_i32, %c0_i32_0 : i32, i32
  }
  func.func @transform_8(%arg0: i32) -> (i32, i32) {
    %c0_i32 = arith.constant 0 : i32
    %c0_i32_0 = arith.constant 0 : i32
    %c0_i32_1 = arith.constant 0 : i32
    return %c0_i32, %c0_i32_0 : i32, i32
  }
  func.func @transform_9(%arg0: i32) -> (i32, i32) {
    %c0_i32 = arith.constant 0 : i32
    %c0_i32_0 = arith.constant 0 : i32
    %c0_i32_1 = arith.constant 0 : i32
    return %c0_i32, %c0_i32_0 : i32, i32
  }
  func.func @transform_10(%arg0: i32) -> (i32, i32) {
    %c0_i32 = arith.constant 0 : i32
    %c0_i32_0 = arith.constant 0 : i32
    %c0_i32_1 = arith.constant 0 : i32
    return %c0_i32, %c0_i32_0 : i32, i32
  }
  func.func @transform_11(%arg0: i32) -> (i32, i32) {
    %c0_i32 = arith.constant 0 : i32
    %c0_i32_0 = arith.constant 0 : i32
    %c0_i32_1 = arith.constant 0 : i32
    return %c0_i32, %c0_i32_0 : i32, i32
  }
  func.func @transform_12(%arg0: i32) -> (i32, i32) {
    %c0_i32 = arith.constant 0 : i32
    %c0_i32_0 = arith.constant 0 : i32
    %c0_i32_1 = arith.constant 0 : i32
    return %c0_i32, %c0_i32_0 : i32, i32
  }
  func.func @transform_13(%arg0: i32) -> (i32, i32) {
    %c0_i32 = arith.constant 0 : i32
    %c0_i32_0 = arith.constant 0 : i32
    %c0_i32_1 = arith.constant 0 : i32
    return %c0_i32, %c0_i32_0 : i32, i32
  }
  func.func @transform_14(%arg0: i32) -> (i32, i32) {
    %c0_i32 = arith.constant 0 : i32
    %c0_i32_0 = arith.constant 0 : i32
    %c0_i32_1 = arith.constant 0 : i32
    return %c0_i32, %c0_i32_0 : i32, i32
  }
  func.func @transform_15(%arg0: i32) -> (i32, i32) {
    %c0_i32 = arith.constant 0 : i32
    %c0_i32_0 = arith.constant 0 : i32
    %c0_i32_1 = arith.constant 0 : i32
    return %c0_i32, %c0_i32_0 : i32, i32
  }
  func.func @transform_16(%arg0: i32) -> (i32, i32) {
    %c0_i32 = arith.constant 0 : i32
    %c0_i32_0 = arith.constant 0 : i32
    %c0_i32_1 = arith.constant 0 : i32
    return %c0_i32, %c0_i32_0 : i32, i32
  }
  func.func @transform_17(%arg0: i32) -> (i32, i32) {
    %c0_i32 = arith.constant 0 : i32
    %c0_i32_0 = arith.constant 0 : i32
    %c0_i32_1 = arith.constant 0 : i32
    return %c0_i32, %c0_i32_0 : i32, i32
  }
  func.func @transform_18(%arg0: i32) -> (i32, i32) {
    %c0_i32 = arith.constant 0 : i32
    %c0_i32_0 = arith.constant 0 : i32
    %c0_i32_1 = arith.constant 0 : i32
    return %c0_i32, %c0_i32_0 : i32, i32
  }
  func.func @transform_19(%arg0: i32) -> (i32, i32) {
    %c0_i32 = arith.constant 0 : i32
    %c0_i32_0 = arith.constant 0 : i32
    %c0_i32_1 = arith.constant 0 : i32
    return %c0_i32, %c0_i32_0 : i32, i32
  }
  func.func @transform_20(%arg0: i32) -> (i32, i32) {
    %c0_i32 = arith.constant 0 : i32
    %c0_i32_0 = arith.constant 0 : i32
    %c0_i32_1 = arith.constant 0 : i32
    return %c0_i32, %c0_i32_0 : i32, i32
  }
  func.func @transform_21(%arg0: i32) -> (i32, i32) {
    %c0_i32 = arith.constant 0 : i32
    %c0_i32_0 = arith.constant 0 : i32
    %c0_i32_1 = arith.constant 0 : i32
    return %c0_i32, %c0_i32_0 : i32, i32
  }
  func.func @transform_22(%arg0: i32) -> (i32, i32) {
    %c0_i32 = arith.constant 0 : i32
    %c0_i32_0 = arith.constant 0 : i32
    %c0_i32_1 = arith.constant 0 : i32
    return %c0_i32, %c0_i32_0 : i32, i32
  }
  func.func @transform_23(%arg0: i32) -> (i32, i32) {
    %c0_i32 = arith.constant 0 : i32
    %c0_i32_0 = arith.constant 0 : i32
    %c0_i32_1 = arith.constant 0 : i32
    return %c0_i32, %c0_i32_0 : i32, i32
  }
  func.func @transform_24(%arg0: i32) -> (i32, i32) {
    %c0_i32 = arith.constant 0 : i32
    %c0_i32_0 = arith.constant 0 : i32
    %c0_i32_1 = arith.constant 0 : i32
    return %c0_i32, %c0_i32_0 : i32, i32
  }
  func.func @transform_25(%arg0: i32) -> (i32, i32) {
    %c0_i32 = arith.constant 0 : i32
    %c0_i32_0 = arith.constant 0 : i32
    return %arg0, %c0_i32 : i32, i32
  }
  func.func @transform_26(%arg0: i32) -> (i32, i32) {
    %c0_i32 = arith.constant 0 : i32
    %c0_i32_0 = arith.constant 0 : i32
    return %arg0, %c0_i32 : i32, i32
  }
  func.func @transform_27(%arg0: i32) -> (i32, i32, i32) {
    %c0_i32 = arith.constant 0 : i32
    %c0_i32_0 = arith.constant 0 : i32
    %c0_i32_1 = arith.constant 0 : i32
    return %arg0, %c0_i32, %c0_i32_0 : i32, i32, i32
  }
}

</mosaic_0001>

<llo_original>
// kernel: tpu_custom_call.1
$region0: #{tpu_custom_call.1}
  #allocation0 [shape = 'u32[]', space=smem, size = 0x4, offset = 0x4, fixed_abs, tag = 'smem constant byte address 0x4 - core index']
  #allocation1 [shape = 'u32[144,128]{1,0:T(1,128)}', space=vmem, size = 0x12000, scoped, tag = 'internal scratch']
  %s0 = inlined_call_operand.vmem [shape: f32[16,32], index: 0, kind: input, shape index: {}]
  %s1 = inlined_call_operand.vmem [shape: f32[128,16], index: 1, kind: input, shape index: {}]
  %s2 = inlined_call_operand.vmem [shape: f32[2,1,16], index: 2, kind: input, shape index: {}]
  %s3 = inlined_call_operand.vmem [shape: f32[16,1], index: 3, kind: input, shape index: {}]
  %s4 = inlined_call_operand.vmem [shape: f32[128,1], index: 4, kind: input, shape index: {}]
  %s5 = inlined_call_operand.vmem [shape: f32[32,96], index: 5, kind: input, shape index: {}]
  %s6 = inlined_call_operand.vmem [shape: f32[1,96], index: 6, kind: input, shape index: {}]
  %s7 = inlined_call_operand.vmem [shape: f32[16,8], index: 7, kind: input, shape index: {}]
  %s8 = inlined_call_operand.vmem [shape: f32[1,8], index: 8, kind: input, shape index: {}]
  %s9 = inlined_call_operand.vmem [shape: f32[16,88], index: 9, kind: input, shape index: {}]
  %s10 = inlined_call_operand.vmem [shape: f32[1,88], index: 10, kind: input, shape index: {}]
  %s11 = inlined_call_operand.vmem [shape: f32[128,16], index: 11, kind: input, shape index: {}]
  %s12 = inlined_call_operand.vmem [shape: f32[1,16], index: 12, kind: input, shape index: {}]
  %s13 = inlined_call_operand.vmem [shape: f32[64,16], index: 13, kind: input, shape index: {}]
  %s14 = inlined_call_operand.vmem [shape: f32[1,16], index: 14, kind: input, shape index: {}]
  %s15 = inlined_call_operand.vmem [shape: f32[32,32], index: 15, kind: input, shape index: {}]
  %s16 = inlined_call_operand.vmem [shape: f32[1,32], index: 16, kind: input, shape index: {}]
  %s17 = inlined_call_operand.vmem [shape: f32[4,16], index: 17, kind: input, shape index: {}]
  %s18 = inlined_call_operand.vmem [shape: f32[1,16], index: 18, kind: input, shape index: {}]
  %s19 = inlined_call_operand.vmem [shape: f32[16,16], index: 19, kind: input, shape index: {}]
  %s20 = inlined_call_operand.vmem [shape: f32[1,16], index: 20, kind: input, shape index: {}]
  %s21 = inlined_call_operand.vmem [shape: f32[16,16], index: 21, kind: input, shape index: {}]
  %s22 = inlined_call_operand.vmem [shape: f32[1,16], index: 22, kind: input, shape index: {}]
  %s23 = inlined_call_operand.vmem [shape: f32[32,4], index: 23, kind: input, shape index: {}]
  %s24 = inlined_call_operand.vmem [shape: f32[4,32], index: 24, kind: input, shape index: {}]
  %s25 = inlined_call_operand.hbm [shape: f32[16,32], index: 25, kind: output, shape index: {0}]
  %s26 = inlined_call_operand.vmem [shape: f32[128,16], index: 26, kind: output, shape index: {1}]
  %s27 = inlined_call_operand.hbm [shape: f32[2,1,16], index: 27, kind: output, shape index: {2}]
  %28 = xla_tuple %s25, %s26, %s27
  %s29 = sld [smem:[#allocation0]]
  $region149: #{tpu_custom_call.1} parent=0
    _
  %s31 = ssub.s32 1, %s29
  %s32 = scalar_select 0, %s31, %s29
  $region1: #{tpu_custom_call.1} parent=0
    #allocation2 [shape = 'u8[8192]{0}', space=vmem, size = 0x2000, scoped, tag = 'output window, operand 0']
    #allocation3 [shape = 's32[2]{0}', space=sflag, size = 0x8, scoped, tag = 'scoped memory for tpu_custom_call.1']
    #allocation4 [shape = 'u8[1024]{0}', space=vmem, size = 0x400, scoped, tag = 'output window, operand 2']
    #allocation5 [shape = 's32[2]{0}', space=sflag, size = 0x8, scoped, tag = 'scoped memory for tpu_custom_call.1']
    %33 = vsyncpa [#allocation3], 0
    %s34 = scalar_lea.sflag [#allocation3], 1
    %35 = vsyncpa %s34, 0
    %36 = vsyncpa [#allocation5], 0
    %s37 = scalar_lea.sflag [#allocation5], 1
    %38 = vsyncpa %s37, 0
    loop: start=0, step=1, limit=4
    $region2: #{tpu_custom_call.1} parent=1 // loop_pre_header
      _
    $region3: #{tpu_custom_call.1} parent=1 // loop_header
      %s40 = sphi 0, %s44
      %p41 = scmp.ge.s32.totalorder %s40, 4
      %s50 = sphi 0, %s52
      %s53 = sphi 0, %s50
      %s54 = sphi 0, %s53
      %s70 = sphi 0, %s54
      %s76 = sphi 0, %s78
      %s79 = sphi 0, %s76
      %s80 = sphi 0, %s79
      %s96 = sphi 0, %s80
      %s102 = sphi 0, %s104
      %s105 = sphi 0, %s102
      %s106 = sphi 0, %s105
      %s122 = sphi 0, %s106
      %s128 = sphi 0, %s130
      %s131 = sphi 0, %s128
      %s132 = sphi 0, %s131
      %s148 = sphi 0, %s132
      %s154 = sphi 0, %s156
      %s157 = sphi 0, %s154
      %s158 = sphi 0, %s157
      %s174 = sphi 0, %s158
      %s178 = sphi 0, %s178
      %s180 = sphi 0, %s178
      %s181 = sphi 0, %s180
      %s195 = sphi 0, %s181
      %s199 = sphi 0, %s199
      %s201 = sphi 0, %s199
      %s202 = sphi 0, %s201
      %s216 = sphi 0, %s202
      %s220 = sphi 0, %s220
      %s222 = sphi 0, %s220
      %s223 = sphi 0, %s222
      %s237 = sphi 0, %s223
      %s241 = sphi 0, %s241
      %s243 = sphi 0, %s241
      %s244 = sphi 0, %s243
      %s258 = sphi 0, %s244
      %s262 = sphi 0, %s262
      %s264 = sphi 0, %s262
      %s265 = sphi 0, %s264
      %s279 = sphi 0, %s265
      %s283 = sphi 0, %s283
      %s285 = sphi 0, %s283
      %s286 = sphi 0, %s285
      %s300 = sphi 0, %s286
      %s304 = sphi 0, %s304
      %s306 = sphi 0, %s304
      %s307 = sphi 0, %s306
      %s321 = sphi 0, %s307
      %s325 = sphi 0, %s325
      %s327 = sphi 0, %s325
      %s328 = sphi 0, %s327
      %s342 = sphi 0, %s328
      %s346 = sphi 0, %s346
      %s348 = sphi 0, %s346
      %s349 = sphi 0, %s348
      %s363 = sphi 0, %s349
      %s367 = sphi 0, %s367
      %s369 = sphi 0, %s367
      %s370 = sphi 0, %s369
      %s384 = sphi 0, %s370
      %s388 = sphi 0, %s388
      %s390 = sphi 0, %s388
      %s391 = sphi 0, %s390
      %s405 = sphi 0, %s391
      %s409 = sphi 0, %s409
      %s411 = sphi 0, %s409
      %s412 = sphi 0, %s411
      %s426 = sphi 0, %s412
      %s430 = sphi 0, %s430
      %s432 = sphi 0, %s430
      %s433 = sphi 0, %s432
      %s447 = sphi 0, %s433
      %s451 = sphi 0, %s451
      %s453 = sphi 0, %s451
      %s454 = sphi 0, %s453
      %s468 = sphi 0, %s454
      %s472 = sphi 0, %s472
      %s474 = sphi 0, %s472
      %s475 = sphi 0, %s474
      %s489 = sphi 0, %s475
      %s493 = sphi 0, %s493
      %s495 = sphi 0, %s493
      %s496 = sphi 0, %s495
      %s510 = sphi 0, %s496
      %s514 = sphi 0, %s514
      %s516 = sphi 0, %s514
      %s517 = sphi 0, %s516
      %s531 = sphi 0, %s517
      %s535 = sphi 0, %s535
      %s537 = sphi 0, %s535
      %s538 = sphi 0, %s537
      %s552 = sphi 0, %s538
      %s556 = sphi 0, %s556
      %s558 = sphi 0, %s556
      %s559 = sphi 0, %s558
      %s573 = sphi 0, %s559
      %s577 = sphi 0, %s577
      %s579 = sphi 0, %s577
      %s580 = sphi 0, %s579
      %s594 = sphi 0, %s580
      %s600 = sphi 0, %s602
      %s603 = sphi 0, %s600
      %s604 = sphi 0, %s603
      %s620 = sphi 0, %s604
      %s626 = sphi 0, %s628
      %s629 = sphi 0, %s626
      %s630 = sphi 0, %s629
      %s646 = sphi 0, %s630
      %s652 = sphi 0, %s654
      %s655 = sphi 0, %s652
      %s656 = sphi 0, %s655
      %s672 = sphi 0, %s656
    $region4: #{tpu_custom_call.1} parent=1 // loop_header_branch
      %43 = sbr.rel (%p41) target = $region8
    $region5: #{tpu_custom_call.1} parent=1 // loop_body
      %s45 = ssub.s32 %s40, 1
      %s46 = ssub.s32 %s40, 2
      %s47 = sadd.s32 %s40, 1
      %s48 = ssub.s32 %s40, %s47
      %p49 = scmp.eq.s32.totalorder %s48, 0
      %s51 = sadd.s32 %s50, 1
      %s52 = scalar_select %p49, %s50, %s51
      %p55 = pneg %p49
      %p56 = scmp.eq.s32.totalorder %s40, 1
      %p57 = por %p55, %p56
      %p58 = scmp.ne.s32.totalorder %s50, %s53
      %p59 = scmp.eq.s32.totalorder %s40, 0
      %p60 = por %p58, %p59
      %p61 = scmp.ne.s32.totalorder %s50, %s53
      %p62 = scmp.eq.s32.totalorder %s45, 1
      %p63 = por %p61, %p62
      %p64 = scmp.ne.s32.totalorder %s53, %s54
      %p65 = scmp.eq.s32.totalorder %s45, 0
      %p66 = por %p64, %p65
      %p67 = scmp.ne.s32.totalorder %s53, %s54
      %p68 = scmp.eq.s32.totalorder %s46, 1
      %p69 = por %p67, %p68
      %p71 = scmp.ne.s32.totalorder %s54, %s70
      %p72 = scmp.eq.s32.totalorder %s46, 0
      %p73 = por %p71, %p72
      %s74 = ssub.s32 %s40, %s47
      %p75 = scmp.eq.s32.totalorder %s74, 0
      %s77 = sadd.s32 %s76, 1
      %s78 = scalar_select %p75, %s76, %s77
      %p81 = pneg %p75
      %p82 = scmp.eq.s32.totalorder %s40, 1
      %p83 = por %p81, %p82
      %p84 = scmp.ne.s32.totalorder %s76, %s79
      %p85 = scmp.eq.s32.totalorder %s40, 0
      %p86 = por %p84, %p85
      %p87 = scmp.ne.s32.totalorder %s76, %s79
      %p88 = scmp.eq.s32.totalorder %s45, 1
      %p89 = por %p87, %p88
      %p90 = scmp.ne.s32.totalorder %s79, %s80
      %p91 = scmp.eq.s32.totalorder %s45, 0
      %p92 = por %p90, %p91
      %p93 = scmp.ne.s32.totalorder %s79, %s80
      %p94 = scmp.eq.s32.totalorder %s46, 1
      %p95 = por %p93, %p94
      %p97 = scmp.ne.s32.totalorder %s80, %s96
      %p98 = scmp.eq.s32.totalorder %s46, 0
      %p99 = por %p97, %p98
      %s100 = ssub.s32 %s40, %s47
      %p101 = scmp.eq.s32.totalorder %s100, 0
      %s103 = sadd.s32 %s102, 1
      %s104 = scalar_select %p101, %s102, %s103
      %p107 = pneg %p101
      %p108 = scmp.eq.s32.totalorder %s40, 1
      %p109 = por %p107, %p108
      %p110 = scmp.ne.s32.totalorder %s102, %s105
      %p111 = scmp.eq.s32.totalorder %s40, 0
      %p112 = por %p110, %p111
      %p113 = scmp.ne.s32.totalorder %s102, %s105
      %p114 = scmp.eq.s32.totalorder %s45, 1
      %p115 = por %p113, %p114
      %p116 = scmp.ne.s32.totalorder %s105, %s106
      %p117 = scmp.eq.s32.totalorder %s45, 0
      %p118 = por %p116, %p117
      %p119 = scmp.ne.s32.totalorder %s105, %s106
      %p120 = scmp.eq.s32.totalorder %s46, 1
      %p121 = por %p119, %p120
      %p123 = scmp.ne.s32.totalorder %s106, %s122
      %p124 = scmp.eq.s32.totalorder %s46, 0
      %p125 = por %p123, %p124
      %s126 = ssub.s32 %s40, %s47
      %p127 = scmp.eq.s32.totalorder %s126, 0
      %s129 = sadd.s32 %s128, 1
      %s130 = scalar_select %p127, %s128, %s129
      %p133 = pneg %p127
      %p134 = scmp.eq.s32.totalorder %s40, 1
      %p135 = por %p133, %p134
      %p136 = scmp.ne.s32.totalorder %s128, %s131
      %p137 = scmp.eq.s32.totalorder %s40, 0
      %p138 = por %p136, %p137
      %p139 = scmp.ne.s32.totalorder %s128, %s131
      %p140 = scmp.eq.s32.totalorder %s45, 1
      %p141 = por %p139, %p140
      %p142 = scmp.ne.s32.totalorder %s131, %s132
      %p143 = scmp.eq.s32.totalorder %s45, 0
      %p144 = por %p142, %p143
      %p145 = scmp.ne.s32.totalorder %s131, %s132
      %p146 = scmp.eq.s32.totalorder %s46, 1
      %p147 = por %p145, %p146
      %p149 = scmp.ne.s32.totalorder %s132, %s148
      %p150 = scmp.eq.s32.totalorder %s46, 0
      %p151 = por %p149, %p150
      %s152 = ssub.s32 %s40, %s47
      %p153 = scmp.eq.s32.totalorder %s152, 0
      %s155 = sadd.s32 %s154, 1
      %s156 = scalar_select %p153, %s154, %s155
      %p159 = pneg %p153
      %p160 = scmp.eq.s32.totalorder %s40, 1
      %p161 = por %p159, %p160
      %p162 = scmp.ne.s32.totalorder %s154, %s157
      %p163 = scmp.eq.s32.totalorder %s40, 0
      %p164 = por %p162, %p163
      %p165 = scmp.ne.s32.totalorder %s154, %s157
      %p166 = scmp.eq.s32.totalorder %s45, 1
      %p167 = por %p165, %p166
      %p168 = scmp.ne.s32.totalorder %s157, %s158
      %p169 = scmp.eq.s32.totalorder %s45, 0
      %p170 = por %p168, %p169
      %p171 = scmp.ne.s32.totalorder %s157, %s158
      %p172 = scmp.eq.s32.totalorder %s46, 1
      %p173 = por %p171, %p172
      %p175 = scmp.ne.s32.totalorder %s158, %s174
      %p176 = scmp.eq.s32.totalorder %s46, 0
      %p177 = por %p175, %p176
      %s179 = sadd.s32 %s178, 1
      %p182 = scmp.eq.s32.totalorder %s40, 1
      %p183 = scmp.ne.s32.totalorder %s178, %s180
      %p184 = scmp.eq.s32.totalorder %s40, 0
      %p185 = por %p183, %p184
      %p186 = scmp.ne.s32.totalorder %s178, %s180
      %p187 = scmp.eq.s32.totalorder %s45, 1
      %p188 = por %p186, %p187
      %p189 = scmp.ne.s32.totalorder %s180, %s181
      %p190 = scmp.eq.s32.totalorder %s45, 0
      %p191 = por %p189, %p190
      %p192 = scmp.ne.s32.totalorder %s180, %s181
      %p193 = scmp.eq.s32.totalorder %s46, 1
      %p194 = por %p192, %p193
      %p196 = scmp.ne.s32.totalorder %s181, %s195
      %p197 = scmp.eq.s32.totalorder %s46, 0
      %p198 = por %p196, %p197
      %s200 = sadd.s32 %s199, 1
      %p203 = scmp.eq.s32.totalorder %s40, 1
      %p204 = scmp.ne.s32.totalorder %s199, %s201
      %p205 = scmp.eq.s32.totalorder %s40, 0
      %p206 = por %p204, %p205
      %p207 = scmp.ne.s32.totalorder %s199, %s201
      %p208 = scmp.eq.s32.totalorder %s45, 1
      %p209 = por %p207, %p208
      %p210 = scmp.ne.s32.totalorder %s201, %s202
      %p211 = scmp.eq.s32.totalorder %s45, 0
      %p212 = por %p210, %p211
      %p213 = scmp.ne.s32.totalorder %s201, %s202
      %p214 = scmp.eq.s32.totalorder %s46, 1
      %p215 = por %p213, %p214
      %p217 = scmp.ne.s32.totalorder %s202, %s216
      %p218 = scmp.eq.s32.totalorder %s46, 0
      %p219 = por %p217, %p218
      %s221 = sadd.s32 %s220, 1
      %p224 = scmp.eq.s32.totalorder %s40, 1
      %p225 = scmp.ne.s32.totalorder %s220, %s222
      %p226 = scmp.eq.s32.totalorder %s40, 0
      %p227 = por %p225, %p226
      %p228 = scmp.ne.s32.totalorder %s220, %s222
      %p229 = scmp.eq.s32.totalorder %s45, 1
      %p230 = por %p228, %p229
      %p231 = scmp.ne.s32.totalorder %s222, %s223
      %p232 = scmp.eq.s32.totalorder %s45, 0
      %p233 = por %p231, %p232
      %p234 = scmp.ne.s32.totalorder %s222, %s223
      %p235 = scmp.eq.s32.totalorder %s46, 1
      %p236 = por %p234, %p235
      %p238 = scmp.ne.s32.totalorder %s223, %s237
      %p239 = scmp.eq.s32.totalorder %s46, 0
      %p240 = por %p238, %p239
      %s242 = sadd.s32 %s241, 1
      %p245 = scmp.eq.s32.totalorder %s40, 1
      %p246 = scmp.ne.s32.totalorder %s241, %s243
      %p247 = scmp.eq.s32.totalorder %s40, 0
      %p248 = por %p246, %p247
      %p249 = scmp.ne.s32.totalorder %s241, %s243
      %p250 = scmp.eq.s32.totalorder %s45, 1
      %p251 = por %p249, %p250
      %p252 = scmp.ne.s32.totalorder %s243, %s244
      %p253 = scmp.eq.s32.totalorder %s45, 0
      %p254 = por %p252, %p253
      %p255 = scmp.ne.s32.totalorder %s243, %s244
      %p256 = scmp.eq.s32.totalorder %s46, 1
      %p257 = por %p255, %p256
      %p259 = scmp.ne.s32.totalorder %s244, %s258
      %p260 = scmp.eq.s32.totalorder %s46, 0
      %p261 = por %p259, %p260
      %s263 = sadd.s32 %s262, 1
      %p266 = scmp.eq.s32.totalorder %s40, 1
      %p267 = scmp.ne.s32.totalorder %s262, %s264
      %p268 = scmp.eq.s32.totalorder %s40, 0
      %p269 = por %p267, %p268
      %p270 = scmp.ne.s32.totalorder %s262, %s264
      %p271 = scmp.eq.s32.totalorder %s45, 1
      %p272 = por %p270, %p271
      %p273 = scmp.ne.s32.totalorder %s264, %s265
      %p274 = scmp.eq.s32.totalorder %s45, 0
      %p275 = por %p273, %p274
      %p276 = scmp.ne.s32.totalorder %s264, %s265
      %p277 = scmp.eq.s32.totalorder %s46, 1
      %p278 = por %p276, %p277
      %p280 = scmp.ne.s32.totalorder %s265, %s279
      %p281 = scmp.eq.s32.totalorder %s46, 0
      %p282 = por %p280, %p281
      %s284 = sadd.s32 %s283, 1
      %p287 = scmp.eq.s32.totalorder %s40, 1
      %p288 = scmp.ne.s32.totalorder %s283, %s285
      %p289 = scmp.eq.s32.totalorder %s40, 0
      %p290 = por %p288, %p289
      %p291 = scmp.ne.s32.totalorder %s283, %s285
      %p292 = scmp.eq.s32.totalorder %s45, 1
      %p293 = por %p291, %p292
      %p294 = scmp.ne.s32.totalorder %s285, %s286
      %p295 = scmp.eq.s32.totalorder %s45, 0
      %p296 = por %p294, %p295
      %p297 = scmp.ne.s32.totalorder %s285, %s286
      %p298 = scmp.eq.s32.totalorder %s46, 1
      %p299 = por %p297, %p298
      %p301 = scmp.ne.s32.totalorder %s286, %s300
      %p302 = scmp.eq.s32.totalorder %s46, 0
      %p303 = por %p301, %p302
      %s305 = sadd.s32 %s304, 1
      %p308 = scmp.eq.s32.totalorder %s40, 1
      %p309 = scmp.ne.s32.totalorder %s304, %s306
      %p310 = scmp.eq.s32.totalorder %s40, 0
      %p311 = por %p309, %p310
      %p312 = scmp.ne.s32.totalorder %s304, %s306
      %p313 = scmp.eq.s32.totalorder %s45, 1
      %p314 = por %p312, %p313
      %p315 = scmp.ne.s32.totalorder %s306, %s307
      %p316 = scmp.eq.s32.totalorder %s45, 0
      %p317 = por %p315, %p316
      %p318 = scmp.ne.s32.totalorder %s306, %s307
      %p319 = scmp.eq.s32.totalorder %s46, 1
      %p320 = por %p318, %p319
      %p322 = scmp.ne.s32.totalorder %s307, %s321
      %p323 = scmp.eq.s32.totalorder %s46, 0
      %p324 = por %p322, %p323
      %s326 = sadd.s32 %s325, 1
      %p329 = scmp.eq.s32.totalorder %s40, 1
      %p330 = scmp.ne.s32.totalorder %s325, %s327
      %p331 = scmp.eq.s32.totalorder %s40, 0
      %p332 = por %p330, %p331
      %p333 = scmp.ne.s32.totalorder %s325, %s327
      %p334 = scmp.eq.s32.totalorder %s45, 1
      %p335 = por %p333, %p334
      %p336 = scmp.ne.s32.totalorder %s327, %s328
      %p337 = scmp.eq.s32.totalorder %s45, 0
      %p338 = por %p336, %p337
      %p339 = scmp.ne.s32.totalorder %s327, %s328
      %p340 = scmp.eq.s32.totalorder %s46, 1
      %p341 = por %p339, %p340
      %p343 = scmp.ne.s32.totalorder %s328, %s342
      %p344 = scmp.eq.s32.totalorder %s46, 0
      %p345 = por %p343, %p344
      %s347 = sadd.s32 %s346, 1
      %p350 = scmp.eq.s32.totalorder %s40, 1
      %p351 = scmp.ne.s32.totalorder %s346, %s348
      %p352 = scmp.eq.s32.totalorder %s40, 0
      %p353 = por %p351, %p352
      %p354 = scmp.ne.s32.totalorder %s346, %s348
      %p355 = scmp.eq.s32.totalorder %s45, 1
      %p356 = por %p354, %p355
      %p357 = scmp.ne.s32.totalorder %s348, %s349
      %p358 = scmp.eq.s32.totalorder %s45, 0
      %p359 = por %p357, %p358
      %p360 = scmp.ne.s32.totalorder %s348, %s349
      %p361 = scmp.eq.s32.totalorder %s46, 1
      %p362 = por %p360, %p361
      %p364 = scmp.ne.s32.totalorder %s349, %s363
      %p365 = scmp.eq.s32.totalorder %s46, 0
      %p366 = por %p364, %p365
      %s368 = sadd.s32 %s367, 1
      %p371 = scmp.eq.s32.totalorder %s40, 1
      %p372 = scmp.ne.s32.totalorder %s367, %s369
      %p373 = scmp.eq.s32.totalorder %s40, 0
      %p374 = por %p372, %p373
      %p375 = scmp.ne.s32.totalorder %s367, %s369
      %p376 = scmp.eq.s32.totalorder %s45, 1
      %p377 = por %p375, %p376
      %p378 = scmp.ne.s32.totalorder %s369, %s370
      %p379 = scmp.eq.s32.totalorder %s45, 0
      %p380 = por %p378, %p379
      %p381 = scmp.ne.s32.totalorder %s369, %s370
      %p382 = scmp.eq.s32.totalorder %s46, 1
      %p383 = por %p381, %p382
      %p385 = scmp.ne.s32.totalorder %s370, %s384
      %p386 = scmp.eq.s32.totalorder %s46, 0
      %p387 = por %p385, %p386
      %s389 = sadd.s32 %s388, 1
      %p392 = scmp.eq.s32.totalorder %s40, 1
      %p393 = scmp.ne.s32.totalorder %s388, %s390
      %p394 = scmp.eq.s32.totalorder %s40, 0
      %p395 = por %p393, %p394
      %p396 = scmp.ne.s32.totalorder %s388, %s390
      %p397 = scmp.eq.s32.totalorder %s45, 1
      %p398 = por %p396, %p397
      %p399 = scmp.ne.s32.totalorder %s390, %s391
      %p400 = scmp.eq.s32.totalorder %s45, 0
      %p401 = por %p399, %p400
      %p402 = scmp.ne.s32.totalorder %s390, %s391
      %p403 = scmp.eq.s32.totalorder %s46, 1
      %p404 = por %p402, %p403
      %p406 = scmp.ne.s32.totalorder %s391, %s405
      %p407 = scmp.eq.s32.totalorder %s46, 0
      %p408 = por %p406, %p407
      %s410 = sadd.s32 %s409, 1
      %p413 = scmp.eq.s32.totalorder %s40, 1
      %p414 = scmp.ne.s32.totalorder %s409, %s411
      %p415 = scmp.eq.s32.totalorder %s40, 0
      %p416 = por %p414, %p415
      %p417 = scmp.ne.s32.totalorder %s409, %s411
      %p418 = scmp.eq.s32.totalorder %s45, 1
      %p419 = por %p417, %p418
      %p420 = scmp.ne.s32.totalorder %s411, %s412
      %p421 = scmp.eq.s32.totalorder %s45, 0
      %p422 = por %p420, %p421
      %p423 = scmp.ne.s32.totalorder %s411, %s412
      %p424 = scmp.eq.s32.totalorder %s46, 1
      %p425 = por %p423, %p424
      %p427 = scmp.ne.s32.totalorder %s412, %s426
      %p428 = scmp.eq.s32.totalorder %s46, 0
      %p429 = por %p427, %p428
      %s431 = sadd.s32 %s430, 1
      %p434 = scmp.eq.s32.totalorder %s40, 1
      %p435 = scmp.ne.s32.totalorder %s430, %s432
      %p436 = scmp.eq.s32.totalorder %s40, 0
      %p437 = por %p435, %p436
      %p438 = scmp.ne.s32.totalorder %s430, %s432
      %p439 = scmp.eq.s32.totalorder %s45, 1
      %p440 = por %p438, %p439
      %p441 = scmp.ne.s32.totalorder %s432, %s433
      %p442 = scmp.eq.s32.totalorder %s45, 0
      %p443 = por %p441, %p442
      %p444 = scmp.ne.s32.totalorder %s432, %s433
      %p445 = scmp.eq.s32.totalorder %s46, 1
      %p446 = por %p444, %p445
      %p448 = scmp.ne.s32.totalorder %s433, %s447
      %p449 = scmp.eq.s32.totalorder %s46, 0
      %p450 = por %p448, %p449
      %s452 = sadd.s32 %s451, 1
      %p455 = scmp.eq.s32.totalorder %s40, 1
      %p456 = scmp.ne.s32.totalorder %s451, %s453
      %p457 = scmp.eq.s32.totalorder %s40, 0
      %p458 = por %p456, %p457
      %p459 = scmp.ne.s32.totalorder %s451, %s453
      %p460 = scmp.eq.s32.totalorder %s45, 1
      %p461 = por %p459, %p460
      %p462 = scmp.ne.s32.totalorder %s453, %s454
      %p463 = scmp.eq.s32.totalorder %s45, 0
      %p464 = por %p462, %p463
      %p465 = scmp.ne.s32.totalorder %s453, %s454
      %p466 = scmp.eq.s32.totalorder %s46, 1
      %p467 = por %p465, %p466
      %p469 = scmp.ne.s32.totalorder %s454, %s468
      %p470 = scmp.eq.s32.totalorder %s46, 0
      %p471 = por %p469, %p470
      %s473 = sadd.s32 %s472, 1
      %p476 = scmp.eq.s32.totalorder %s40, 1
      %p477 = scmp.ne.s32.totalorder %s472, %s474
      %p478 = scmp.eq.s32.totalorder %s40, 0
      %p479 = por %p477, %p478
      %p480 = scmp.ne.s32.totalorder %s472, %s474
      %p481 = scmp.eq.s32.totalorder %s45, 1
      %p482 = por %p480, %p481
      %p483 = scmp.ne.s32.totalorder %s474, %s475
      %p484 = scmp.eq.s32.totalorder %s45, 0
      %p485 = por %p483, %p484
      %p486 = scmp.ne.s32.totalorder %s474, %s475
      %p487 = scmp.eq.s32.totalorder %s46, 1
      %p488 = por %p486, %p487
      %p490 = scmp.ne.s32.totalorder %s475, %s489
      %p491 = scmp.eq.s32.totalorder %s46, 0
      %p492 = por %p490, %p491
      %s494 = sadd.s32 %s493, 1
      %p497 = scmp.eq.s32.totalorder %s40, 1
      %p498 = scmp.ne.s32.totalorder %s493, %s495
      %p499 = scmp.eq.s32.totalorder %s40, 0
      %p500 = por %p498, %p499
      %p501 = scmp.ne.s32.totalorder %s493, %s495
      %p502 = scmp.eq.s32.totalorder %s45, 1
      %p503 = por %p501, %p502
      %p504 = scmp.ne.s32.totalorder %s495, %s496
      %p505 = scmp.eq.s32.totalorder %s45, 0
      %p506 = por %p504, %p505
      %p507 = scmp.ne.s32.totalorder %s495, %s496
      %p508 = scmp.eq.s32.totalorder %s46, 1
      %p509 = por %p507, %p508
      %p511 = scmp.ne.s32.totalorder %s496, %s510
      %p512 = scmp.eq.s32.totalorder %s46, 0
      %p513 = por %p511, %p512
      %s515 = sadd.s32 %s514, 1
      %p518 = scmp.eq.s32.totalorder %s40, 1
      %p519 = scmp.ne.s32.totalorder %s514, %s516
      %p520 = scmp.eq.s32.totalorder %s40, 0
      %p521 = por %p519, %p520
      %p522 = scmp.ne.s32.totalorder %s514, %s516
      %p523 = scmp.eq.s32.totalorder %s45, 1
      %p524 = por %p522, %p523
      %p525 = scmp.ne.s32.totalorder %s516, %s517
      %p526 = scmp.eq.s32.totalorder %s45, 0
      %p527 = por %p525, %p526
      %p528 = scmp.ne.s32.totalorder %s516, %s517
      %p529 = scmp.eq.s32.totalorder %s46, 1
      %p530 = por %p528, %p529
      %p532 = scmp.ne.s32.totalorder %s517, %s531
      %p533 = scmp.eq.s32.totalorder %s46, 0
      %p534 = por %p532, %p533
      %s536 = sadd.s32 %s535, 1
      %p539 = scmp.eq.s32.totalorder %s40, 1
      %p540 = scmp.ne.s32.totalorder %s535, %s537
      %p541 = scmp.eq.s32.totalorder %s40, 0
      %p542 = por %p540, %p541
      %p543 = scmp.ne.s32.totalorder %s535, %s537
      %p544 = scmp.eq.s32.totalorder %s45, 1
      %p545 = por %p543, %p544
      %p546 = scmp.ne.s32.totalorder %s537, %s538
      %p547 = scmp.eq.s32.totalorder %s45, 0
      %p548 = por %p546, %p547
      %p549 = scmp.ne.s32.totalorder %s537, %s538
      %p550 = scmp.eq.s32.totalorder %s46, 1
      %p551 = por %p549, %p550
      %p553 = scmp.ne.s32.totalorder %s538, %s552
      %p554 = scmp.eq.s32.totalorder %s46, 0
      %p555 = por %p553, %p554
      %s557 = sadd.s32 %s556, 1
      %p560 = scmp.eq.s32.totalorder %s40, 1
      %p561 = scmp.ne.s32.totalorder %s556, %s558
      %p562 = scmp.eq.s32.totalorder %s40, 0
      %p563 = por %p561, %p562
      %p564 = scmp.ne.s32.totalorder %s556, %s558
      %p565 = scmp.eq.s32.totalorder %s45, 1
      %p566 = por %p564, %p565
      %p567 = scmp.ne.s32.totalorder %s558, %s559
      %p568 = scmp.eq.s32.totalorder %s45, 0
      %p569 = por %p567, %p568
      %p570 = scmp.ne.s32.totalorder %s558, %s559
      %p571 = scmp.eq.s32.totalorder %s46, 1
      %p572 = por %p570, %p571
      %p574 = scmp.ne.s32.totalorder %s559, %s573
      %p575 = scmp.eq.s32.totalorder %s46, 0
      %p576 = por %p574, %p575
      %s578 = sadd.s32 %s577, 1
      %p581 = scmp.eq.s32.totalorder %s40, 1
      %p582 = scmp.ne.s32.totalorder %s577, %s579
      %p583 = scmp.eq.s32.totalorder %s40, 0
      %p584 = por %p582, %p583
      %p585 = scmp.ne.s32.totalorder %s577, %s579
      %p586 = scmp.eq.s32.totalorder %s45, 1
      %p587 = por %p585, %p586
      %p588 = scmp.ne.s32.totalorder %s579, %s580
      %p589 = scmp.eq.s32.totalorder %s45, 0
      %p590 = por %p588, %p589
      %p591 = scmp.ne.s32.totalorder %s579, %s580
      %p592 = scmp.eq.s32.totalorder %s46, 1
      %p593 = por %p591, %p592
      %p595 = scmp.ne.s32.totalorder %s580, %s594
      %p596 = scmp.eq.s32.totalorder %s46, 0
      %p597 = por %p595, %p596
      %s598 = ssub.s32 %s40, %s47
      %p599 = scmp.eq.s32.totalorder %s598, 0
      %s601 = sadd.s32 %s600, 1
      %s602 = scalar_select %p599, %s600, %s601
      %p605 = pneg %p599
      %p606 = scmp.eq.s32.totalorder %s40, 1
      %p607 = por %p605, %p606
      %p608 = scmp.ne.s32.totalorder %s600, %s603
      %p609 = scmp.eq.s32.totalorder %s40, 0
      %p610 = por %p608, %p609
      %p611 = scmp.ne.s32.totalorder %s600, %s603
      %p612 = scmp.eq.s32.totalorder %s45, 1
      %p613 = por %p611, %p612
      %p614 = scmp.ne.s32.totalorder %s603, %s604
      %p615 = scmp.eq.s32.totalorder %s45, 0
      %p616 = por %p614, %p615
      %p617 = scmp.ne.s32.totalorder %s603, %s604
      %p618 = scmp.eq.s32.totalorder %s46, 1
      %p619 = por %p617, %p618
      %p621 = scmp.ne.s32.totalorder %s604, %s620
      %p622 = scmp.eq.s32.totalorder %s46, 0
      %p623 = por %p621, %p622
      %s624 = ssub.s32 %s40, %s47
      %p625 = scmp.eq.s32.totalorder %s624, 0
      %s627 = sadd.s32 %s626, 1
      %s628 = scalar_select %p625, %s626, %s627
      %p631 = pneg %p625
      %p632 = scmp.eq.s32.totalorder %s40, 1
      %p633 = por %p631, %p632
      %p634 = scmp.ne.s32.totalorder %s626, %s629
      %p635 = scmp.eq.s32.totalorder %s40, 0
      %p636 = por %p634, %p635
      %p637 = scmp.ne.s32.totalorder %s626, %s629
      %p638 = scmp.eq.s32.totalorder %s45, 1
      %p639 = por %p637, %p638
      %p640 = scmp.ne.s32.totalorder %s629, %s630
      %p641 = scmp.eq.s32.totalorder %s45, 0
      %p642 = por %p640, %p641
      %p643 = scmp.ne.s32.totalorder %s629, %s630
      %p644 = scmp.eq.s32.totalorder %s46, 1
      %p645 = por %p643, %p644
      %p647 = scmp.ne.s32.totalorder %s630, %s646
      %p648 = scmp.eq.s32.totalorder %s46, 0
      %p649 = por %p647, %p648
      %s650 = ssub.s32 %s40, %s47
      %p651 = scmp.eq.s32.totalorder %s650, 0
      %s653 = sadd.s32 %s652, 1
      %s654 = scalar_select %p651, %s652, %s653
      %p657 = pneg %p651
      %p658 = scmp.eq.s32.totalorder %s40, 1
      %p659 = por %p657, %p658
      %p660 = scmp.ne.s32.totalorder %s652, %s655
      %p661 = scmp.eq.s32.totalorder %s40, 0
      %p662 = por %p660, %p661
      %p663 = scmp.ne.s32.totalorder %s652, %s655
      %p664 = scmp.eq.s32.totalorder %s45, 1
      %p665 = por %p663, %p664
      %p666 = scmp.ne.s32.totalorder %s655, %s656
      %p667 = scmp.eq.s32.totalorder %s45, 0
      %p668 = por %p666, %p667
      %p669 = scmp.ne.s32.totalorder %s655, %s656
      %p670 = scmp.eq.s32.totalorder %s46, 1
      %p671 = por %p669, %p670
      %p673 = scmp.ne.s32.totalorder %s656, %s672
      %p674 = scmp.eq.s32.totalorder %s46, 0
      %p675 = por %p673, %p674
      %p676 = scmp.le.s32.totalorder 1, %s40
      %p677 = scmp.lt.s32.totalorder %s40, 3
      %p678 = pnand %p676, %p677
      %p679 = pneg %p678
      // Predicated region
      $region9: #{tpu_custom_call.1} parent=5 // pred_check
        _
      $region10: #{tpu_custom_call.1} parent=5 // pred_check_branch
        %681 = sbr.rel (%p678) target = $region12
      $region11: #{tpu_custom_call.1} parent=5 // pred_region
        %s682 = ssub.s32 %s40, 1
        // Predicated region
        $region13: #{tpu_custom_call.1} parent=11 // pred_check
          %p683 = pneg %p191
        $region14: #{tpu_custom_call.1} parent=11 // pred_check_branch
          %685 = sbr.rel (%p683) target = $region16
        $region15: #{tpu_custom_call.1} parent=11 // pred_region
          _
        $region16: #{tpu_custom_call.1} parent=11 // pred_fallthru
          _
        // Predicated region
        $region17: #{tpu_custom_call.1} parent=11 // pred_check
          %p686 = pneg %p212
        $region18: #{tpu_custom_call.1} parent=11 // pred_check_branch
          %688 = sbr.rel (%p686) target = $region20
        $region19: #{tpu_custom_call.1} parent=11 // pred_region
          _
        $region20: #{tpu_custom_call.1} parent=11 // pred_fallthru
          _
        // Predicated region
        $region21: #{tpu_custom_call.1} parent=11 // pred_check
          %p689 = pneg %p233
        $region22: #{tpu_custom_call.1} parent=11 // pred_check_branch
          %691 = sbr.rel (%p689) target = $region24
        $region23: #{tpu_custom_call.1} parent=11 // pred_region
          _
        $region24: #{tpu_custom_call.1} parent=11 // pred_fallthru
          _
        // Predicated region
        $region25: #{tpu_custom_call.1} parent=11 // pred_check
          %p692 = pneg %p254
        $region26: #{tpu_custom_call.1} parent=11 // pred_check_branch
          %694 = sbr.rel (%p692) target = $region28
        $region27: #{tpu_custom_call.1} parent=11 // pred_region
          _
        $region28: #{tpu_custom_call.1} parent=11 // pred_fallthru
          _
        // Predicated region
        $region29: #{tpu_custom_call.1} parent=11 // pred_check
          %p695 = pneg %p275
        $region30: #{tpu_custom_call.1} parent=11 // pred_check_branch
          %697 = sbr.rel (%p695) target = $region32
        $region31: #{tpu_custom_call.1} parent=11 // pred_region
          _
        $region32: #{tpu_custom_call.1} parent=11 // pred_fallthru
          _
        // Predicated region
        $region33: #{tpu_custom_call.1} parent=11 // pred_check
          %p698 = pneg %p296
        $region34: #{tpu_custom_call.1} parent=11 // pred_check_branch
          %700 = sbr.rel (%p698) target = $region36
        $region35: #{tpu_custom_call.1} parent=11 // pred_region
          _
        $region36: #{tpu_custom_call.1} parent=11 // pred_fallthru
          _
        // Predicated region
        $region37: #{tpu_custom_call.1} parent=11 // pred_check
          %p701 = pneg %p317
        $region38: #{tpu_custom_call.1} parent=11 // pred_check_branch
          %703 = sbr.rel (%p701) target = $region40
        $region39: #{tpu_custom_call.1} parent=11 // pred_region
          _
        $region40: #{tpu_custom_call.1} parent=11 // pred_fallthru
          _
        // Predicated region
        $region41: #{tpu_custom_call.1} parent=11 // pred_check
          %p704 = pneg %p338
        $region42: #{tpu_custom_call.1} parent=11 // pred_check_branch
          %706 = sbr.rel (%p704) target = $region44
        $region43: #{tpu_custom_call.1} parent=11 // pred_region
          _
        $region44: #{tpu_custom_call.1} parent=11 // pred_fallthru
          _
        // Predicated region
        $region45: #{tpu_custom_call.1} parent=11 // pred_check
          %p707 = pneg %p359
        $region46: #{tpu_custom_call.1} parent=11 // pred_check_branch
          %709 = sbr.rel (%p707) target = $region48
        $region47: #{tpu_custom_call.1} parent=11 // pred_region
          _
        $region48: #{tpu_custom_call.1} parent=11 // pred_fallthru
          _
        // Predicated region
        $region49: #{tpu_custom_call.1} parent=11 // pred_check
          %p710 = pneg %p380
        $region50: #{tpu_custom_call.1} parent=11 // pred_check_branch
          %712 = sbr.rel (%p710) target = $region52
        $region51: #{tpu_custom_call.1} parent=11 // pred_region
          _
        $region52: #{tpu_custom_call.1} parent=11 // pred_fallthru
          _
        // Predicated region
        $region53: #{tpu_custom_call.1} parent=11 // pred_check
          %p713 = pneg %p401
        $region54: #{tpu_custom_call.1} parent=11 // pred_check_branch
          %715 = sbr.rel (%p713) target = $region56
        $region55: #{tpu_custom_call.1} parent=11 // pred_region
          _
        $region56: #{tpu_custom_call.1} parent=11 // pred_fallthru
          _
        // Predicated region
        $region57: #{tpu_custom_call.1} parent=11 // pred_check
          %p716 = pneg %p422
        $region58: #{tpu_custom_call.1} parent=11 // pred_check_branch
          %718 = sbr.rel (%p716) target = $region60
        $region59: #{tpu_custom_call.1} parent=11 // pred_region
          _
        $region60: #{tpu_custom_call.1} parent=11 // pred_fallthru
          _
        // Predicated region
        $region61: #{tpu_custom_call.1} parent=11 // pred_check
          %p719 = pneg %p443
        $region62: #{tpu_custom_call.1} parent=11 // pred_check_branch
          %721 = sbr.rel (%p719) target = $region64
        $region63: #{tpu_custom_call.1} parent=11 // pred_region
          _
        $region64: #{tpu_custom_call.1} parent=11 // pred_fallthru
          _
        // Predicated region
        $region65: #{tpu_custom_call.1} parent=11 // pred_check
          %p722 = pneg %p464
        $region66: #{tpu_custom_call.1} parent=11 // pred_check_branch
          %724 = sbr.rel (%p722) target = $region68
        $region67: #{tpu_custom_call.1} parent=11 // pred_region
          _
        $region68: #{tpu_custom_call.1} parent=11 // pred_fallthru
          _
        // Predicated region
        $region69: #{tpu_custom_call.1} parent=11 // pred_check
          %p725 = pneg %p485
        $region70: #{tpu_custom_call.1} parent=11 // pred_check_branch
          %727 = sbr.rel (%p725) target = $region72
        $region71: #{tpu_custom_call.1} parent=11 // pred_region
          _
        $region72: #{tpu_custom_call.1} parent=11 // pred_fallthru
          _
        // Predicated region
        $region73: #{tpu_custom_call.1} parent=11 // pred_check
          %p728 = pneg %p506
        $region74: #{tpu_custom_call.1} parent=11 // pred_check_branch
          %730 = sbr.rel (%p728) target = $region76
        $region75: #{tpu_custom_call.1} parent=11 // pred_region
          _
        $region76: #{tpu_custom_call.1} parent=11 // pred_fallthru
          _
        // Predicated region
        $region77: #{tpu_custom_call.1} parent=11 // pred_check
          %p731 = pneg %p527
        $region78: #{tpu_custom_call.1} parent=11 // pred_check_branch
          %733 = sbr.rel (%p731) target = $region80
        $region79: #{tpu_custom_call.1} parent=11 // pred_region
          _
        $region80: #{tpu_custom_call.1} parent=11 // pred_fallthru
          _
        // Predicated region
        $region81: #{tpu_custom_call.1} parent=11 // pred_check
          %p734 = pneg %p548
        $region82: #{tpu_custom_call.1} parent=11 // pred_check_branch
          %736 = sbr.rel (%p734) target = $region84
        $region83: #{tpu_custom_call.1} parent=11 // pred_region
          _
        $region84: #{tpu_custom_call.1} parent=11 // pred_fallthru
          _
        // Predicated region
        $region85: #{tpu_custom_call.1} parent=11 // pred_check
          %p737 = pneg %p569
        $region86: #{tpu_custom_call.1} parent=11 // pred_check_branch
          %739 = sbr.rel (%p737) target = $region88
        $region87: #{tpu_custom_call.1} parent=11 // pred_region
          _
        $region88: #{tpu_custom_call.1} parent=11 // pred_fallthru
          _
        // Predicated region
        $region89: #{tpu_custom_call.1} parent=11 // pred_check
          %p740 = pneg %p590
        $region90: #{tpu_custom_call.1} parent=11 // pred_check_branch
          %742 = sbr.rel (%p740) target = $region92
        $region91: #{tpu_custom_call.1} parent=11 // pred_region
          _
        $region92: #{tpu_custom_call.1} parent=11 // pred_fallthru
          _
      $region12: #{tpu_custom_call.1} parent=5 // pred_fallthru
        _
      %p743 = scmp.lt.s32.totalorder %s40, 2
      // Predicated region
      $region93: #{tpu_custom_call.1} parent=5 // pred_check
        %p744 = pneg %p743
      $region94: #{tpu_custom_call.1} parent=5 // pred_check_branch
        %746 = sbr.rel (%p744) target = $region96
      $region95: #{tpu_custom_call.1} parent=5 // pred_region
        // Predicated region
        $region97: #{tpu_custom_call.1} parent=95 // pred_check
          %p747 = pneg %p60
        $region98: #{tpu_custom_call.1} parent=95 // pred_check_branch
          %749 = sbr.rel (%p747) target = $region100
        $region99: #{tpu_custom_call.1} parent=95 // pred_region
          %p750 = scmp.lt.s32.totalorder %s40, 1
          %s751 = scalar_select %p750, %s40, 1
          %s752 = smul.addr %s751, 8
          %s753 = scalar_lea.vmem %s0, %s752
        $region100: #{tpu_custom_call.1} parent=95 // pred_fallthru
          _
        // Predicated region
        $region101: #{tpu_custom_call.1} parent=95 // pred_check
          %p754 = pneg %p86
        $region102: #{tpu_custom_call.1} parent=95 // pred_check_branch
          %756 = sbr.rel (%p754) target = $region104
        $region103: #{tpu_custom_call.1} parent=95 // pred_region
          %s757 = smul.u32 8, %s40
          %p758 = scmp.lt.s32.totalorder %s757, 15
          %s759 = scalar_select %p758, %s757, 15
          %s760 = smul.addr %s759, 8
          %s761 = scalar_lea.vmem %s1, %s760
          %s762 = smul.u32 8, %s40
        $region104: #{tpu_custom_call.1} parent=95 // pred_fallthru
          _
        // Predicated region
        $region105: #{tpu_custom_call.1} parent=95 // pred_check
          %p763 = pneg %p112
        $region106: #{tpu_custom_call.1} parent=95 // pred_check_branch
          %765 = sbr.rel (%p763) target = $region108
        $region107: #{tpu_custom_call.1} parent=95 // pred_region
          %p766 = scmp.lt.s32.totalorder %s40, 1
          %s767 = scalar_select %p766, %s40, 1
          %s768 = scalar_lea.vmem %s2, %s767
        $region108: #{tpu_custom_call.1} parent=95 // pred_fallthru
          _
        // Predicated region
        $region109: #{tpu_custom_call.1} parent=95 // pred_check
          %p769 = pneg %p138
        $region110: #{tpu_custom_call.1} parent=95 // pred_check_branch
          %771 = sbr.rel (%p769) target = $region112
        $region111: #{tpu_custom_call.1} parent=95 // pred_region
          %p772 = scmp.lt.s32.totalorder %s40, 1
          %s773 = scalar_select %p772, %s40, 1
          %s774 = smul.addr %s773, 8
          %s775 = scalar_lea.vmem %s3, %s774
        $region112: #{tpu_custom_call.1} parent=95 // pred_fallthru
          _
        // Predicated region
        $region113: #{tpu_custom_call.1} parent=95 // pred_check
          %p776 = pneg %p164
        $region114: #{tpu_custom_call.1} parent=95 // pred_check_branch
          %778 = sbr.rel (%p776) target = $region116
        $region115: #{tpu_custom_call.1} parent=95 // pred_region
          %s779 = smul.u32 8, %s40
          %p780 = scmp.lt.s32.totalorder %s779, 15
          %s781 = scalar_select %p780, %s779, 15
          %s782 = smul.addr %s781, 8
          %s783 = scalar_lea.vmem %s4, %s782
          %s784 = smul.u32 8, %s40
        $region116: #{tpu_custom_call.1} parent=95 // pred_fallthru
          _
      $region96: #{tpu_custom_call.1} parent=5 // pred_fallthru
        _
      %p785 = scmp.le.s32.totalorder 1, %s40
      %p786 = scmp.lt.s32.totalorder %s40, 3
      %p787 = pnand %p785, %p786
      %p788 = pneg %p787
      // Predicated region
      $region117: #{tpu_custom_call.1} parent=5 // pred_check
        _
      $region118: #{tpu_custom_call.1} parent=5 // pred_check_branch
        %790 = sbr.rel (%p787) target = $region120
      $region119: #{tpu_custom_call.1} parent=5 // pred_region
        %s791 = ssub.s32 %s40, 1
        %p792 = scmp.lt.s32.totalorder %s45, 1
        %s793 = scalar_select %p792, %s45, 1
        %s794 = smul.addr %s793, 8
        %s795 = scalar_lea.vmem %s0, %s794
        %p796 = pneg %p66
        %p797 = pneg %p63
        %s798 = smul.u32 8, %s45
        %p799 = scmp.lt.s32.totalorder %s798, 15
        %s800 = scalar_select %p799, %s798, 15
        %s801 = smul.addr %s800, 8
        %s802 = scalar_lea.vmem %s1, %s801
        %p803 = pneg %p92
        %p804 = pneg %p89
        %p805 = scmp.lt.s32.totalorder %s45, 1
        %s806 = scalar_select %p805, %s45, 1
        %s807 = scalar_lea.vmem %s2, %s806
        %p808 = pneg %p118
        %p809 = pneg %p115
        %p810 = scmp.lt.s32.totalorder %s45, 1
        %s811 = scalar_select %p810, %s45, 1
        %s812 = smul.addr %s811, 8
        %s813 = scalar_lea.vmem %s3, %s812
        %p814 = pneg %p144
        %p815 = pneg %p141
        %s816 = smul.u32 8, %s45
        %p817 = scmp.lt.s32.totalorder %s816, 15
        %s818 = scalar_select %p817, %s816, 15
        %s819 = smul.addr %s818, 8
        %s820 = scalar_lea.vmem %s4, %s819
        %p821 = pneg %p170
        %p822 = pneg %p167
        %p823 = pneg %p191
        %p824 = pneg %p188
        %p825 = pneg %p212
        %p826 = pneg %p209
        %p827 = pneg %p233
        %p828 = pneg %p230
        %p829 = pneg %p254
        %p830 = pneg %p251
        %p831 = pneg %p275
        %p832 = pneg %p272
        %p833 = pneg %p296
        %p834 = pneg %p293
        %p835 = pneg %p317
        %p836 = pneg %p314
        %p837 = pneg %p338
        %p838 = pneg %p335
        %p839 = pneg %p359
        %p840 = pneg %p356
        %p841 = pneg %p380
        %p842 = pneg %p377
        %p843 = pneg %p401
        %p844 = pneg %p398
        %p845 = pneg %p422
        %p846 = pneg %p419
        %p847 = pneg %p443
        %p848 = pneg %p440
        %p849 = pneg %p464
        %p850 = pneg %p461
        %p851 = pneg %p485
        %p852 = pneg %p482
        %p853 = pneg %p506
        %p854 = pneg %p503
        %p855 = pneg %p527
        %p856 = pneg %p524
        %p857 = pneg %p548
        %p858 = pneg %p545
        %p859 = pneg %p569
        %p860 = pneg %p566
        %p861 = pneg %p590
        %p862 = pneg %p587
        %p863 = pneg %p616
        %p864 = pneg %p613
        %s865 = sand.u32 %s603, 1
        %s866 = scalar_lea.sflag [#allocation3], %s865
        %s867 = sand.u32 %s603, 1
        %s868 = smul.addr %s867, 8
        %s869 = scalar_lea.vmem [#allocation2], %s868
        %p870 = pneg %p642
        %p871 = pneg %p639
        %s872 = smul.u32 8, %s45
        %p873 = scmp.lt.s32.totalorder %s872, 15
        %s874 = scalar_select %p873, %s872, 15
        %s875 = smul.addr %s874, 8
        %s876 = scalar_lea.vmem %s26, %s875
        %p877 = pneg %p668
        %p878 = pneg %p665
        %s879 = sand.u32 %s655, 1
        %s880 = scalar_lea.sflag [#allocation5], %s879
        %s881 = sand.u32 %s655, 1
        %s882 = scalar_lea.vmem [#allocation4], %s881
        %p883 = scmp.lt.s32.totalorder %s45, 1
        %s884 = scalar_select %p883, %s45, 1
        %s885 = smul.addr %s884, 8
        %s886 = scalar_lea.vmem %s0, %s885
        %s887 = smul.u32 8, %s45
        %p888 = scmp.lt.s32.totalorder %s887, 15
        %s889 = scalar_select %p888, %s887, 15
        %s890 = smul.addr %s889, 8
        %s891 = scalar_lea.vmem %s1, %s890
        %s892 = smul.u32 8, %s45
        %p893 = scmp.lt.s32.totalorder %s45, 1
        %s894 = scalar_select %p893, %s45, 1
        %s895 = scalar_lea.vmem %s2, %s894
        %p896 = scmp.lt.s32.totalorder %s45, 1
        %s897 = scalar_select %p896, %s45, 1
        %s898 = smul.addr %s897, 8
        %s899 = scalar_lea.vmem %s3, %s898
        %s900 = smul.u32 8, %s45
        %p901 = scmp.lt.s32.totalorder %s900, 15
        %s902 = scalar_select %p901, %s900, 15
        %s903 = smul.addr %s902, 8
        %s904 = scalar_lea.vmem %s4, %s903
        %s905 = smul.u32 8, %s45
        %s906 = smul.u32 8, %s45
        %p907 = scmp.lt.s32.totalorder %s906, 15
        %s908 = scalar_select %p907, %s906, 15
        %s909 = smul.addr %s908, 8
        %s910 = scalar_lea.vmem %s26, %s909
        %s911 = smul.u32 8, %s45
        %v912 = vld [vmem:[%s886] sm:$0xff]
        %v913 = vld [vmem:[%s891] sm:$0xff]
        %v914 = vld [vmem:[%s891 + $0x8] sm:$0xff]
        %v915 = vld [vmem:[%s891 + $0x10] sm:$0xff]
        %v916 = vld [vmem:[%s891 + $0x18] sm:$0xff]
        %v917 = vld [vmem:[%s891 + $0x20] sm:$0xff]
        %v918 = vld [vmem:[%s891 + $0x28] sm:$0xff]
        %v919 = vld [vmem:[%s891 + $0x30] sm:$0xff]
        %v920 = vld [vmem:[%s891 + $0x38] sm:$0xff]
        %v921 = vld [vmem:[%s895] sm:$0x1]
        %v922 = vld [vmem:[%s899] sm:$0xff]
        %v923 = vld [vmem:[%s904] sm:$0xff]
        %v924 = vld [vmem:[%s904 + $0x8] sm:$0xff]
        %v925 = vld [vmem:[%s904 + $0x10] sm:$0xff]
        %v926 = vld [vmem:[%s904 + $0x18] sm:$0xff]
        %v927 = vld [vmem:[%s904 + $0x20] sm:$0xff]
        %v928 = vld [vmem:[%s904 + $0x28] sm:$0xff]
        %v929 = vld [vmem:[%s904 + $0x30] sm:$0xff]
        %v930 = vld [vmem:[%s904 + $0x38] sm:$0xff]
        %v931 = vld [vmem:[%s5] sm:$0xff]
        %v932 = vld [vmem:[%s5 + $0x8] sm:$0xff]
        %v933 = vld [vmem:[%s5 + $0x10] sm:$0xff]
        %v934 = vld [vmem:[%s5 + $0x18] sm:$0xff]
        %v935 = vld [vmem:[%s6] sm:$0x1]
        %v937 = vlaneseq
        %v938 = vshrl.u32 %v937, 7
        %v939 = vsub.s32 0, %v938
        %v940 = vrot.slane %v935, %v939
        %vm942 = vcmask 261120
        %v944 = vsel %vm942, %v912, 0
        %946 = vmatprep.subr.mxu0 0.0
        %947 = vmatpush1.msra.mxu0 %v931
        %948 = vmatprep.subr.mxu0 0.0
        %949 = vmatpush1.msra.mxu0 %v932
        %950 = vmatprep.subr.mxu0 0.0
        %951 = vmatpush1.msra.mxu0 %v933
        %952 = vmatprep.subr.mxu0 0.0
        %953 = vmatpush1.msra.mxu0 %v934
        %954 = vmatprep.subr.mxu0 0.0
        %955 = vmatpush1.msra.mxu0 0.0
        %956 = vmatprep.subr.mxu0 0.0
        %957 = vmatpush1.msra.mxu0 0.0
        %958 = vmatprep.subr.mxu0 0.0
        %959 = vmatpush1.msra.mxu0 0.0
        %960 = vmatprep.subr.mxu0 0.0
        %961 = vmatpush1.msra.mxu0 0.0
        %962 = vmatprep.subr.mxu0 0.0
        %963 = vmatpush1.msra.mxu0 0.0
        %964 = vmatprep.subr.mxu0 0.0
        %965 = vmatpush1.msra.mxu0 0.0
        %966 = vmatprep.subr.mxu0 0.0
        %967 = vmatpush1.msra.mxu0 0.0
        %968 = vmatprep.subr.mxu0 0.0
        %969 = vmatpush1.msra.mxu0 0.0
        %970 = vmatprep.subr.mxu0 0.0
        %971 = vmatpush1.msra.mxu0 0.0
        %972 = vmatprep.subr.mxu0 0.0
        %973 = vmatpush1.msra.mxu0 0.0
        %974 = vmatprep.subr.mxu0 0.0
        %975 = vmatpush1.msra.mxu0 0.0
        %976 = vmatprep.subr.mxu0 0.0
        %977 = vmatpush1.msra.mxu0 0.0
        %978 = vmatprep.subr.mxu0 0.0
        %979 = vmatpush1.msra.mxu0 0.0
        %980 = vmatprep.subr.mxu0 0.0
        %981 = vmatpush1.msra.mxu0 0.0
        %982 = vmatprep.subr.mxu0 0.0
        %983 = vmatpush1.msra.mxu0 0.0
        %984 = vmatprep.subr.mxu0 0.0
        %985 = vmatpush1.msra.mxu0 0.0
        %986 = vmatprep.subr.mxu0 0.0
        %987 = vmatpush1.msra.mxu0 0.0
        %988 = vmatprep.subr.mxu0 0.0
        %989 = vmatpush1.msra.mxu0 0.0
        %990 = vmatprep.subr.mxu0 0.0
        %991 = vmatpush1.msra.mxu0 0.0
        %992 = vmatprep.subr.mxu0 0.0
        %993 = vmatpush1.msra.mxu0 0.0
        %994 = vmatprep.subr.mxu0 0.0
        %995 = vmatpush1.msra.mxu0 0.0
        %996 = vmatprep.subr.mxu0 0.0
        %997 = vmatpush1.msra.mxu0 0.0
        %998 = vmatprep.subr.mxu0 0.0
        %999 = vmatpush1.msra.mxu0 0.0
        %1000 = vmatprep.subr.mxu0 0.0
        %1001 = vmatpush1.msra.mxu0 0.0
        %1002 = vmatprep.subr.mxu0 0.0
        %1003 = vmatpush1.msra.mxu0 0.0
        %1004 = vmatprep.subr.mxu0 0.0
        %1005 = vmatpush1.msra.mxu0 0.0
        %1006 = vmatprep.subr.mxu0 0.0
        %1007 = vmatpush1.msra.mxu0 0.0
        %1008 = vmatprep.subr.mxu0 0.0
        %1009 = vmatpush1.msra.mxu0 0.0
        %1010 = vmatprep.mubr.f32.mxu0 0.0
        %1011 = vmatmul.mubr.f32.gmra.mrb[0].mxu0 %v944
        %v1012 = vpop.f32.mrb[0].mxu0
        %v1013 = vadd.f32 %v940, %v1012
        %v1014 = vpop.f32.mrb[0].mxu0
        %1015 = vdwg.mxu0
        %1017 = vset.pattern.permute.xlu0 0
        %1018 = vperm.xlu0 %1017, %v922
        %v1019 = vpop.permute.xlu0 %1018
        %v1021 = vmul.f32 %v1013, %v1019
        %v1022 = vld [vmem:[%s7] sm:$0xff]
        %v1023 = vld [vmem:[%s7 + $0x8] sm:$0xff]
        %v1024 = vld [vmem:[%s8] sm:$0x1]
        %v1026 = vlaneseq
        %v1027 = vshrl.u32 %v1026, 7
        %v1028 = vsub.s32 0, %v1027
        %v1029 = vrot.slane %v1024, %v1028
        %vm1031 = vcmask 130048
        %v1033 = vsel %vm1031, %v913, 0
        %v1036 = vsel %vm1031, %v914, 0
        %v1039 = vsel %vm1031, %v915, 0
        %v1042 = vsel %vm1031, %v916, 0
        %v1045 = vsel %vm1031, %v917, 0
        %v1048 = vsel %vm1031, %v918, 0
        %v1051 = vsel %vm1031, %v919, 0
        %v1054 = vsel %vm1031, %v920, 0
        %1056 = vmatprep.subr.mxu0 0.0
        %1057 = vmatpush1.msra.mxu0 %v1022
        %1058 = vmatprep.subr.mxu0 0.0
        %1059 = vmatpush1.msra.mxu0 %v1023
        %1060 = vmatprep.subr.mxu0 0.0
        %1061 = vmatpush1.msra.mxu0 0.0
        %1062 = vmatprep.subr.mxu0 0.0
        %1063 = vmatpush1.msra.mxu0 0.0
        %1064 = vmatprep.subr.mxu0 0.0
        %1065 = vmatpush1.msra.mxu0 0.0
        %1066 = vmatprep.subr.mxu0 0.0
        %1067 = vmatpush1.msra.mxu0 0.0
        %1068 = vmatprep.subr.mxu0 0.0
        %1069 = vmatpush1.msra.mxu0 0.0
        %1070 = vmatprep.subr.mxu0 0.0
        %1071 = vmatpush1.msra.mxu0 0.0
        %1072 = vmatprep.subr.mxu0 0.0
        %1073 = vmatpush1.msra.mxu0 0.0
        %1074 = vmatprep.subr.mxu0 0.0
        %1075 = vmatpush1.msra.mxu0 0.0
        %1076 = vmatprep.subr.mxu0 0.0
        %1077 = vmatpush1.msra.mxu0 0.0
        %1078 = vmatprep.subr.mxu0 0.0
        %1079 = vmatpush1.msra.mxu0 0.0
        %1080 = vmatprep.subr.mxu0 0.0
        %1081 = vmatpush1.msra.mxu0 0.0
        %1082 = vmatprep.subr.mxu0 0.0
        %1083 = vmatpush1.msra.mxu0 0.0
        %1084 = vmatprep.subr.mxu0 0.0
        %1085 = vmatpush1.msra.mxu0 0.0
        %1086 = vmatprep.subr.mxu0 0.0
        %1087 = vmatpush1.msra.mxu0 0.0
        %1088 = vmatprep.subr.mxu0 0.0
        %1089 = vmatpush1.msra.mxu0 0.0
        %1090 = vmatprep.subr.mxu0 0.0
        %1091 = vmatpush1.msra.mxu0 0.0
        %1092 = vmatprep.subr.mxu0 0.0
        %1093 = vmatpush1.msra.mxu0 0.0
        %1094 = vmatprep.subr.mxu0 0.0
        %1095 = vmatpush1.msra.mxu0 0.0
        %1096 = vmatprep.subr.mxu0 0.0
        %1097 = vmatpush1.msra.mxu0 0.0
        %1098 = vmatprep.subr.mxu0 0.0
        %1099 = vmatpush1.msra.mxu0 0.0
        %1100 = vmatprep.subr.mxu0 0.0
        %1101 = vmatpush1.msra.mxu0 0.0
        %1102 = vmatprep.subr.mxu0 0.0
        %1103 = vmatpush1.msra.mxu0 0.0
        %1104 = vmatprep.subr.mxu0 0.0
        %1105 = vmatpush1.msra.mxu0 0.0
        %1106 = vmatprep.subr.mxu0 0.0
        %1107 = vmatpush1.msra.mxu0 0.0
        %1108 = vmatprep.subr.mxu0 0.0
        %1109 = vmatpush1.msra.mxu0 0.0
        %1110 = vmatprep.subr.mxu0 0.0
        %1111 = vmatpush1.msra.mxu0 0.0
        %1112 = vmatprep.subr.mxu0 0.0
        %1113 = vmatpush1.msra.mxu0 0.0
        %1114 = vmatprep.subr.mxu0 0.0
        %1115 = vmatpush1.msra.mxu0 0.0
        %1116 = vmatprep.subr.mxu0 0.0
        %1117 = vmatpush1.msra.mxu0 0.0
        %1118 = vmatprep.subr.mxu0 0.0
        %1119 = vmatpush1.msra.mxu0 0.0
        %1120 = vmatprep.mubr.f32.mxu0 0.0
        %1121 = vmatmul.mubr.f32.gmra.mrb[0].mxu0 %v1033
        %v1122 = vpop.f32.mrb[0].mxu0
        %v1123 = vadd.f32 %v1029, %v1122
        %v1124 = vpop.f32.mrb[0].mxu0
        %1125 = vmatprep.mubr.f32.mxu0 0.0
        %1126 = vmatmul.mubr.f32.gmra.mrb[0].mxu0 %v1036
        %v1127 = vpop.f32.mrb[0].mxu0
        %v1128 = vadd.f32 %v1029, %v1127
        %v1129 = vpop.f32.mrb[0].mxu0
        %1130 = vmatprep.mubr.f32.mxu0 0.0
        %1131 = vmatmul.mubr.f32.gmra.mrb[0].mxu0 %v1039
        %v1132 = vpop.f32.mrb[0].mxu0
        %v1133 = vadd.f32 %v1029, %v1132
        %v1134 = vpop.f32.mrb[0].mxu0
        %1135 = vmatprep.mubr.f32.mxu0 0.0
        %1136 = vmatmul.mubr.f32.gmra.mrb[0].mxu0 %v1042
        %v1137 = vpop.f32.mrb[0].mxu0
        %v1138 = vadd.f32 %v1029, %v1137
        %v1139 = vpop.f32.mrb[0].mxu0
        %1140 = vmatprep.mubr.f32.mxu0 0.0
        %1141 = vmatmul.mubr.f32.gmra.mrb[0].mxu0 %v1045
        %v1142 = vpop.f32.mrb[0].mxu0
        %v1143 = vadd.f32 %v1029, %v1142
        %v1144 = vpop.f32.mrb[0].mxu0
        %1145 = vmatprep.mubr.f32.mxu0 0.0
        %1146 = vmatmul.mubr.f32.gmra.mrb[0].mxu0 %v1048
        %v1147 = vpop.f32.mrb[0].mxu0
        %v1148 = vadd.f32 %v1029, %v1147
        %v1149 = vpop.f32.mrb[0].mxu0
        %1150 = vmatprep.mubr.f32.mxu0 0.0
        %1151 = vmatmul.mubr.f32.gmra.mrb[0].mxu0 %v1051
        %v1152 = vpop.f32.mrb[0].mxu0
        %v1153 = vadd.f32 %v1029, %v1152
        %v1154 = vpop.f32.mrb[0].mxu0
        %1155 = vmatprep.mubr.f32.mxu0 0.0
        %1156 = vmatmul.mubr.f32.gmra.mrb[0].mxu0 %v1054
        %v1157 = vpop.f32.mrb[0].mxu0
        %v1158 = vadd.f32 %v1029, %v1157
        %v1159 = vpop.f32.mrb[0].mxu0
        %1160 = vdwg.mxu0
        %1162 = vset.pattern.permute.xlu0 0
        %1163 = vperm.xlu0 %1162, %v923
        %v1164 = vpop.permute.xlu0 %1163
        %1167 = vset.pattern.permute.xlu0 0
        %1168 = vperm.xlu0 %1167, %v924
        %v1169 = vpop.permute.xlu0 %1168
        %1172 = vset.pattern.permute.xlu0 0
        %1173 = vperm.xlu0 %1172, %v925
        %v1174 = vpop.permute.xlu0 %1173
        %1177 = vset.pattern.permute.xlu0 0
        %1178 = vperm.xlu0 %1177, %v926
        %v1179 = vpop.permute.xlu0 %1178
        %1182 = vset.pattern.permute.xlu0 0
        %1183 = vperm.xlu0 %1182, %v927
        %v1184 = vpop.permute.xlu0 %1183
        %1187 = vset.pattern.permute.xlu0 0
        %1188 = vperm.xlu0 %1187, %v928
        %v1189 = vpop.permute.xlu0 %1188
        %1192 = vset.pattern.permute.xlu0 0
        %1193 = vperm.xlu0 %1192, %v929
        %v1194 = vpop.permute.xlu0 %1193
        %1197 = vset.pattern.permute.xlu0 0
        %1198 = vperm.xlu0 %1197, %v930
        %v1199 = vpop.permute.xlu0 %1198
        %v1201 = vmul.f32 %v1123, %v1164
        %v1202 = vmul.f32 %v1128, %v1169
        %v1203 = vmul.f32 %v1133, %v1174
        %v1204 = vmul.f32 %v1138, %v1179
        %v1205 = vmul.f32 %v1143, %v1184
        %v1206 = vmul.f32 %v1148, %v1189
        %v1207 = vmul.f32 %v1153, %v1194
        %v1208 = vmul.f32 %v1158, %v1199
        %v1209 = vld [vmem:[%s9] sm:$0xff]
        %v1210 = vld [vmem:[%s9 + $0x8] sm:$0xff]
        %v1211 = vld [vmem:[%s10] sm:$0x1]
        %v1213 = vsel %vm1031, %v921, 0
        %1215 = vmatprep.subr.mxu0 0.0
        %1216 = vmatpush1.msra.mxu0 %v1209
        %1217 = vmatprep.subr.mxu0 0.0
        %1218 = vmatpush1.msra.mxu0 %v1210
        %1219 = vmatprep.subr.mxu0 0.0
        %1220 = vmatpush1.msra.mxu0 0.0
        %1221 = vmatprep.subr.mxu0 0.0
        %1222 = vmatpush1.msra.mxu0 0.0
        %1223 = vmatprep.subr.mxu0 0.0
        %1224 = vmatpush1.msra.mxu0 0.0
        %1225 = vmatprep.subr.mxu0 0.0
        %1226 = vmatpush1.msra.mxu0 0.0
        %1227 = vmatprep.subr.mxu0 0.0
        %1228 = vmatpush1.msra.mxu0 0.0
        %1229 = vmatprep.subr.mxu0 0.0
        %1230 = vmatpush1.msra.mxu0 0.0
        %1231 = vmatprep.subr.mxu0 0.0
        %1232 = vmatpush1.msra.mxu0 0.0
        %1233 = vmatprep.subr.mxu0 0.0
        %1234 = vmatpush1.msra.mxu0 0.0
        %1235 = vmatprep.subr.mxu0 0.0
        %1236 = vmatpush1.msra.mxu0 0.0
        %1237 = vmatprep.subr.mxu0 0.0
        %1238 = vmatpush1.msra.mxu0 0.0
        %1239 = vmatprep.subr.mxu0 0.0
        %1240 = vmatpush1.msra.mxu0 0.0
        %1241 = vmatprep.subr.mxu0 0.0
        %1242 = vmatpush1.msra.mxu0 0.0
        %1243 = vmatprep.subr.mxu0 0.0
        %1244 = vmatpush1.msra.mxu0 0.0
        %1245 = vmatprep.subr.mxu0 0.0
        %1246 = vmatpush1.msra.mxu0 0.0
        %1247 = vmatprep.subr.mxu0 0.0
        %1248 = vmatpush1.msra.mxu0 0.0
        %1249 = vmatprep.subr.mxu0 0.0
        %1250 = vmatpush1.msra.mxu0 0.0
        %1251 = vmatprep.subr.mxu0 0.0
        %1252 = vmatpush1.msra.mxu0 0.0
        %1253 = vmatprep.subr.mxu0 0.0
        %1254 = vmatpush1.msra.mxu0 0.0
        %1255 = vmatprep.subr.mxu0 0.0
        %1256 = vmatpush1.msra.mxu0 0.0
        %1257 = vmatprep.subr.mxu0 0.0
        %1258 = vmatpush1.msra.mxu0 0.0
        %1259 = vmatprep.subr.mxu0 0.0
        %1260 = vmatpush1.msra.mxu0 0.0
        %1261 = vmatprep.subr.mxu0 0.0
        %1262 = vmatpush1.msra.mxu0 0.0
        %1263 = vmatprep.subr.mxu0 0.0
        %1264 = vmatpush1.msra.mxu0 0.0
        %1265 = vmatprep.subr.mxu0 0.0
        %1266 = vmatpush1.msra.mxu0 0.0
        %1267 = vmatprep.subr.mxu0 0.0
        %1268 = vmatpush1.msra.mxu0 0.0
        %1269 = vmatprep.subr.mxu0 0.0
        %1270 = vmatpush1.msra.mxu0 0.0
        %1271 = vmatprep.subr.mxu0 0.0
        %1272 = vmatpush1.msra.mxu0 0.0
        %1273 = vmatprep.subr.mxu0 0.0
        %1274 = vmatpush1.msra.mxu0 0.0
        %1275 = vmatprep.subr.mxu0 0.0
        %1276 = vmatpush1.msra.mxu0 0.0
        %1277 = vmatprep.subr.mxu0 0.0
        %1278 = vmatpush1.msra.mxu0 0.0
        %1279 = vmatprep.mubr.f32.mxu0 0.0
        %1280 = vmatmul.mubr.f32.gmra.mrb[0].mxu0 %v1213
        %v1281 = vpop.f32.mrb[0].mxu0
        %v1282 = vadd.f32 %v1211, %v1281
        %v1283 = vpop.f32.mrb[0].mxu0
        %1284 = vdwg.mxu0
        %v1286 = vcombine.high %v1021, %v1021
        %v1288 = vunpack.c.l.s4 1966171168
        %v1289 = vunpack.c.0.s8 %v1288
        %v1290 = vlaneseq
        %v1291 = vshrl.u32 %v1290, 7
        %v1292 = vsub.s32 %v1289, %v1291
        %v1293 = vrot.slane %v1021, %v1292
        %v1295 = vunpack.c.l.s4 1966171168
        %v1296 = vunpack.c.0.s8 %v1295
        %v1297 = vlaneseq
        %v1298 = vshrl.u32 %v1297, 7
        %v1299 = vsub.s32 %v1296, %v1298
        %v1300 = vrot.slane %v1286, %v1299
        %v1301 = vcombine.high %v1293, %v1293
        %v1302 = vcombine.high %v1300, %v1300
        %v1304 = vunpack.c.l.s4 1966171168
        %v1305 = vunpack.c.0.s8 %v1304
        %v1306 = vlaneseq
        %v1307 = vshrl.u32 %v1306, 7
        %v1308 = vsub.s32 %v1305, %v1307
        %v1309 = vrot.slane %v1293, %v1308
        %v1311 = vunpack.c.l.s4 1966171168
        %v1312 = vunpack.c.0.s8 %v1311
        %v1313 = vlaneseq
        %v1314 = vshrl.u32 %v1313, 7
        %v1315 = vsub.s32 %v1312, %v1314
        %v1316 = vrot.slane %v1300, %v1315
        %v1318 = vunpack.c.l.s4 1966171168
        %v1319 = vunpack.c.0.s8 %v1318
        %v1320 = vlaneseq
        %v1321 = vshrl.u32 %v1320, 7
        %v1322 = vsub.s32 %v1319, %v1321
        %v1323 = vrot.slane %v1301, %v1322
        %v1325 = vunpack.c.l.s4 1966171168
        %v1326 = vunpack.c.0.s8 %v1325
        %v1327 = vlaneseq
        %v1328 = vshrl.u32 %v1327, 7
        %v1329 = vsub.s32 %v1326, %v1328
        %v1330 = vrot.slane %v1302, %v1329
        %v1331 = vcombine.high %v1309, %v1309
        %v1332 = vcombine.high %v1316, %v1316
        %v1333 = vcombine.high %v1323, %v1323
        %v1334 = vcombine.high %v1330, %v1330
        %v1335 = vlaneseq
        %v1336 = vshrl.u32 %v1335, 7
        %v1337 = vsub.s32 0, %v1336
        %v1338 = vrot.slane %v1309, %v1337
        %v1339 = vlaneseq
        %v1340 = vshrl.u32 %v1339, 7
        %v1341 = vsub.s32 0, %v1340
        %v1342 = vrot.slane %v1323, %v1341
        %v1343 = vlaneseq
        %v1344 = vshrl.u32 %v1343, 7
        %v1345 = vsub.s32 0, %v1344
        %v1346 = vrot.slane %v1331, %v1345
        %v1347 = vlaneseq
        %v1348 = vshrl.u32 %v1347, 7
        %v1349 = vsub.s32 0, %v1348
        %v1350 = vrot.slane %v1333, %v1349
        %v1351 = vlaneseq
        %v1352 = vshrl.u32 %v1351, 7
        %v1353 = vsub.s32 0, %v1352
        %v1354 = vrot.slane %v1316, %v1353
        %v1355 = vlaneseq
        %v1356 = vshrl.u32 %v1355, 7
        %v1357 = vsub.s32 0, %v1356
        %v1358 = vrot.slane %v1330, %v1357
        %v1359 = vlaneseq
        %v1360 = vshrl.u32 %v1359, 7
        %v1361 = vsub.s32 0, %v1360
        %v1362 = vrot.slane %v1332, %v1361
        %v1363 = vlaneseq
        %v1364 = vshrl.u32 %v1363, 7
        %v1365 = vsub.s32 0, %v1364
        %v1366 = vrot.slane %v1334, %v1365
        %1375 = vrot.lane.b32.xlu0 %v1021, 96
        %v1376 = vpop.permute.xlu0 %1375
        %v1378 = vmul.f32 %v1338, %v1376
        %v1379 = vmul.f32 %v1342, %v1376
        %v1380 = vmul.f32 %v1346, %v1376
        %v1381 = vmul.f32 %v1350, %v1376
        %v1382 = vmul.f32 %v1354, %v1376
        %v1383 = vmul.f32 %v1358, %v1376
        %v1384 = vmul.f32 %v1362, %v1376
        %v1385 = vmul.f32 %v1366, %v1376
        %v1386 = vld [vmem:[%s23] sm:$0xff]
        %v1387 = vld [vmem:[%s23 + $0x8] sm:$0xff]
        %v1388 = vld [vmem:[%s23 + $0x10] sm:$0xff]
        %v1389 = vld [vmem:[%s23 + $0x18] sm:$0xff]
        %v1391 = vsel %vm942, %v1378, 0
        %v1394 = vsel %vm942, %v1379, 0
        %v1397 = vsel %vm942, %v1380, 0
        %v1400 = vsel %vm942, %v1381, 0
        %v1403 = vsel %vm942, %v1382, 0
        %v1406 = vsel %vm942, %v1383, 0
        %v1409 = vsel %vm942, %v1384, 0
        %v1412 = vsel %vm942, %v1385, 0
        %1414 = vmatprep.subr.mxu0 0.0
        %1415 = vmatpush1.msra.mxu0 %v1386
        %1416 = vmatprep.subr.mxu0 0.0
        %1417 = vmatpush1.msra.mxu0 %v1387
        %1418 = vmatprep.subr.mxu0 0.0
        %1419 = vmatpush1.msra.mxu0 %v1388
        %1420 = vmatprep.subr.mxu0 0.0
        %1421 = vmatpush1.msra.mxu0 %v1389
        %1422 = vmatprep.subr.mxu0 0.0
        %1423 = vmatpush1.msra.mxu0 0.0
        %1424 = vmatprep.subr.mxu0 0.0
        %1425 = vmatpush1.msra.mxu0 0.0
        %1426 = vmatprep.subr.mxu0 0.0
        %1427 = vmatpush1.msra.mxu0 0.0
        %1428 = vmatprep.subr.mxu0 0.0
        %1429 = vmatpush1.msra.mxu0 0.0
        %1430 = vmatprep.subr.mxu0 0.0
        %1431 = vmatpush1.msra.mxu0 0.0
        %1432 = vmatprep.subr.mxu0 0.0
        %1433 = vmatpush1.msra.mxu0 0.0
        %1434 = vmatprep.subr.mxu0 0.0
        %1435 = vmatpush1.msra.mxu0 0.0
        %1436 = vmatprep.subr.mxu0 0.0
        %1437 = vmatpush1.msra.mxu0 0.0
        %1438 = vmatprep.subr.mxu0 0.0
        %1439 = vmatpush1.msra.mxu0 0.0
        %1440 = vmatprep.subr.mxu0 0.0
        %1441 = vmatpush1.msra.mxu0 0.0
        %1442 = vmatprep.subr.mxu0 0.0
        %1443 = vmatpush1.msra.mxu0 0.0
        %1444 = vmatprep.subr.mxu0 0.0
        %1445 = vmatpush1.msra.mxu0 0.0
        %1446 = vmatprep.subr.mxu0 0.0
        %1447 = vmatpush1.msra.mxu0 0.0
        %1448 = vmatprep.subr.mxu0 0.0
        %1449 = vmatpush1.msra.mxu0 0.0
        %1450 = vmatprep.subr.mxu0 0.0
        %1451 = vmatpush1.msra.mxu0 0.0
        %1452 = vmatprep.subr.mxu0 0.0
        %1453 = vmatpush1.msra.mxu0 0.0
        %1454 = vmatprep.subr.mxu0 0.0
        %1455 = vmatpush1.msra.mxu0 0.0
        %1456 = vmatprep.subr.mxu0 0.0
        %1457 = vmatpush1.msra.mxu0 0.0
        %1458 = vmatprep.subr.mxu0 0.0
        %1459 = vmatpush1.msra.mxu0 0.0
        %1460 = vmatprep.subr.mxu0 0.0
        %1461 = vmatpush1.msra.mxu0 0.0
        %1462 = vmatprep.subr.mxu0 0.0
        %1463 = vmatpush1.msra.mxu0 0.0
        %1464 = vmatprep.subr.mxu0 0.0
        %1465 = vmatpush1.msra.mxu0 0.0
        %1466 = vmatprep.subr.mxu0 0.0
        %1467 = vmatpush1.msra.mxu0 0.0
        %1468 = vmatprep.subr.mxu0 0.0
        %1469 = vmatpush1.msra.mxu0 0.0
        %1470 = vmatprep.subr.mxu0 0.0
        %1471 = vmatpush1.msra.mxu0 0.0
        %1472 = vmatprep.subr.mxu0 0.0
        %1473 = vmatpush1.msra.mxu0 0.0
        %1474 = vmatprep.subr.mxu0 0.0
        %1475 = vmatpush1.msra.mxu0 0.0
        %1476 = vmatprep.subr.mxu0 0.0
        %1477 = vmatpush1.msra.mxu0 0.0
        %1478 = vmatprep.mubr.f32.mxu0 0.0
        %1479 = vmatmul.mubr.f32.gmra.mrb[0].mxu0 %v1391
        %v1480 = vpop.f32.mrb[0].mxu0
        %v1481 = vadd.f32 0.0, %v1480
        %v1482 = vpop.f32.mrb[0].mxu0
        %1483 = vmatprep.mubr.f32.mxu0 0.0
        %1484 = vmatmul.mubr.f32.gmra.mrb[0].mxu0 %v1394
        %v1485 = vpop.f32.mrb[0].mxu0
        %v1486 = vadd.f32 0.0, %v1485
        %v1487 = vpop.f32.mrb[0].mxu0
        %1488 = vmatprep.mubr.f32.mxu0 0.0
        %1489 = vmatmul.mubr.f32.gmra.mrb[0].mxu0 %v1397
        %v1490 = vpop.f32.mrb[0].mxu0
        %v1491 = vadd.f32 0.0, %v1490
        %v1492 = vpop.f32.mrb[0].mxu0
        %1493 = vmatprep.mubr.f32.mxu0 0.0
        %1494 = vmatmul.mubr.f32.gmra.mrb[0].mxu0 %v1400
        %v1495 = vpop.f32.mrb[0].mxu0
        %v1496 = vadd.f32 0.0, %v1495
        %v1497 = vpop.f32.mrb[0].mxu0
        %1498 = vmatprep.mubr.f32.mxu0 0.0
        %1499 = vmatmul.mubr.f32.gmra.mrb[0].mxu0 %v1403
        %v1500 = vpop.f32.mrb[0].mxu0
        %v1501 = vadd.f32 0.0, %v1500
        %v1502 = vpop.f32.mrb[0].mxu0
        %1503 = vmatprep.mubr.f32.mxu0 0.0
        %1504 = vmatmul.mubr.f32.gmra.mrb[0].mxu0 %v1406
        %v1505 = vpop.f32.mrb[0].mxu0
        %v1506 = vadd.f32 0.0, %v1505
        %v1507 = vpop.f32.mrb[0].mxu0
        %1508 = vmatprep.mubr.f32.mxu0 0.0
        %1509 = vmatmul.mubr.f32.gmra.mrb[0].mxu0 %v1409
        %v1510 = vpop.f32.mrb[0].mxu0
        %v1511 = vadd.f32 0.0, %v1510
        %v1512 = vpop.f32.mrb[0].mxu0
        %1513 = vmatprep.mubr.f32.mxu0 0.0
        %1514 = vmatmul.mubr.f32.gmra.mrb[0].mxu0 %v1412
        %v1515 = vpop.f32.mrb[0].mxu0
        %v1516 = vadd.f32 0.0, %v1515
        %v1517 = vpop.f32.mrb[0].mxu0
        %1518 = vdwg.mxu0
        %v1519 = vadd.f32 %v1201, 1.0
        %v1520 = vadd.f32 %v1202, 1.0
        %v1521 = vadd.f32 %v1203, 1.0
        %v1522 = vadd.f32 %v1204, 1.0
        %v1523 = vadd.f32 %v1205, 1.0
        %v1524 = vadd.f32 %v1206, 1.0
        %v1525 = vadd.f32 %v1207, 1.0
        %v1526 = vadd.f32 %v1208, 1.0
        %v1527 = vmul.f32 %v1481, %v1519
        %v1528 = vmul.f32 %v1486, %v1520
        %v1529 = vmul.f32 %v1491, %v1521
        %v1530 = vmul.f32 %v1496, %v1522
        %v1531 = vmul.f32 %v1501, %v1523
        %v1532 = vmul.f32 %v1506, %v1524
        %v1533 = vmul.f32 %v1511, %v1525
        %v1534 = vmul.f32 %v1516, %v1526
        %1543 = vrot.lane.b32.xlu0 %v1201, 124
        %v1544 = vpop.permute.xlu0 %1543
        %1545 = vrot.lane.b32.xlu0 %v1202, 124
        %v1546 = vpop.permute.xlu0 %1545
        %1547 = vrot.lane.b32.xlu0 %v1203, 124
        %v1548 = vpop.permute.xlu0 %1547
        %1549 = vrot.lane.b32.xlu0 %v1204, 124
        %v1550 = vpop.permute.xlu0 %1549
        %1551 = vrot.lane.b32.xlu0 %v1205, 124
        %v1552 = vpop.permute.xlu0 %1551
        %1553 = vrot.lane.b32.xlu0 %v1206, 124
        %v1554 = vpop.permute.xlu0 %1553
        %1555 = vrot.lane.b32.xlu0 %v1207, 124
        %v1556 = vpop.permute.xlu0 %1555
        %1557 = vrot.lane.b32.xlu0 %v1208, 124
        %v1558 = vpop.permute.xlu0 %1557
        %v1567 = vadd.f32 %v1527, %v1544
        %v1568 = vadd.f32 %v1528, %v1546
        %v1569 = vadd.f32 %v1529, %v1548
        %v1570 = vadd.f32 %v1530, %v1550
        %v1571 = vadd.f32 %v1531, %v1552
        %v1572 = vadd.f32 %v1532, %v1554
        %v1573 = vadd.f32 %v1533, %v1556
        %v1574 = vadd.f32 %v1534, %v1558
        %v1575 = vlaneseq
        %v1576 = vshrl.u32 %v1575, 7
        %v1577 = vsub.s32 0, %v1576
        %v1578 = vrot.slane %v1282, %v1577
        %v1579 = vadd.f32 %v1578, 1.0
        %1588 = vrot.lane.b32.xlu0 %v1567, 4
        %v1589 = vpop.permute.xlu0 %1588
        %1590 = vrot.lane.b32.xlu0 %v1568, 4
        %v1591 = vpop.permute.xlu0 %1590
        %1592 = vrot.lane.b32.xlu0 %v1569, 4
        %v1593 = vpop.permute.xlu0 %1592
        %1594 = vrot.lane.b32.xlu0 %v1570, 4
        %v1595 = vpop.permute.xlu0 %1594
        %1596 = vrot.lane.b32.xlu0 %v1571, 4
        %v1597 = vpop.permute.xlu0 %1596
        %1598 = vrot.lane.b32.xlu0 %v1572, 4
        %v1599 = vpop.permute.xlu0 %1598
        %1600 = vrot.lane.b32.xlu0 %v1573, 4
        %v1601 = vpop.permute.xlu0 %1600
        %1602 = vrot.lane.b32.xlu0 %v1574, 4
        %v1603 = vpop.permute.xlu0 %1602
        %v1612 = vmul.f32 %v1579, %v1589
        %v1613 = vmul.f32 %v1579, %v1591
        %v1614 = vmul.f32 %v1579, %v1593
        %v1615 = vmul.f32 %v1579, %v1595
        %v1616 = vmul.f32 %v1579, %v1597
        %v1617 = vmul.f32 %v1579, %v1599
        %v1618 = vmul.f32 %v1579, %v1601
        %v1619 = vmul.f32 %v1579, %v1603
        %1628 = vrot.lane.b32.xlu0 %v1612, 124
        %v1629 = vpop.permute.xlu0 %1628
        %1630 = vrot.lane.b32.xlu0 %v1613, 124
        %v1631 = vpop.permute.xlu0 %1630
        %1632 = vrot.lane.b32.xlu0 %v1614, 124
        %v1633 = vpop.permute.xlu0 %1632
        %1634 = vrot.lane.b32.xlu0 %v1615, 124
        %v1635 = vpop.permute.xlu0 %1634
        %1636 = vrot.lane.b32.xlu0 %v1616, 124
        %v1637 = vpop.permute.xlu0 %1636
        %1638 = vrot.lane.b32.xlu0 %v1617, 124
        %v1639 = vpop.permute.xlu0 %1638
        %1640 = vrot.lane.b32.xlu0 %v1618, 124
        %v1641 = vpop.permute.xlu0 %1640
        %1642 = vrot.lane.b32.xlu0 %v1619, 124
        %v1643 = vpop.permute.xlu0 %1642
        %v1652 = vadd.f32 %v1578, %v1629
        %v1653 = vadd.f32 %v1578, %v1631
        %v1654 = vadd.f32 %v1578, %v1633
        %v1655 = vadd.f32 %v1578, %v1635
        %v1656 = vadd.f32 %v1578, %v1637
        %v1657 = vadd.f32 %v1578, %v1639
        %v1658 = vadd.f32 %v1578, %v1641
        %v1659 = vadd.f32 %v1578, %v1643
        %v1660 = vld [vmem:[%s17] sm:$0xf]
        %v1661 = vld [vmem:[%s18] sm:$0x1]
        %v1663 = vlaneseq
        %v1664 = vshrl.u32 %v1663, 7
        %v1665 = vsub.s32 0, %v1664
        %v1666 = vrot.slane %v1661, %v1665
        %vm1668 = vcmask 31744
        %v1670 = vsel %vm1668, %v1652, 0
        %v1673 = vsel %vm1668, %v1653, 0
        %v1676 = vsel %vm1668, %v1654, 0
        %v1679 = vsel %vm1668, %v1655, 0
        %v1682 = vsel %vm1668, %v1656, 0
        %v1685 = vsel %vm1668, %v1657, 0
        %v1688 = vsel %vm1668, %v1658, 0
        %v1691 = vsel %vm1668, %v1659, 0
        %vm1693 = vcmask 1043456
        %v1695 = vsel %vm1693, %v1660, 0
        %1697 = vmatprep.subr.mxu0 0.0
        %1698 = vmatpush1.msra.mxu0 %v1695
        %1699 = vmatprep.subr.mxu0 0.0
        %1700 = vmatpush1.msra.mxu0 0.0
        %1701 = vmatprep.subr.mxu0 0.0
        %1702 = vmatpush1.msra.mxu0 0.0
        %1703 = vmatprep.subr.mxu0 0.0
        %1704 = vmatpush1.msra.mxu0 0.0
        %1705 = vmatprep.subr.mxu0 0.0
        %1706 = vmatpush1.msra.mxu0 0.0
        %1707 = vmatprep.subr.mxu0 0.0
        %1708 = vmatpush1.msra.mxu0 0.0
        %1709 = vmatprep.subr.mxu0 0.0
        %1710 = vmatpush1.msra.mxu0 0.0
        %1711 = vmatprep.subr.mxu0 0.0
        %1712 = vmatpush1.msra.mxu0 0.0
        %1713 = vmatprep.subr.mxu0 0.0
        %1714 = vmatpush1.msra.mxu0 0.0
        %1715 = vmatprep.subr.mxu0 0.0
        %1716 = vmatpush1.msra.mxu0 0.0
        %1717 = vmatprep.subr.mxu0 0.0
        %1718 = vmatpush1.msra.mxu0 0.0
        %1719 = vmatprep.subr.mxu0 0.0
        %1720 = vmatpush1.msra.mxu0 0.0
        %1721 = vmatprep.subr.mxu0 0.0
        %1722 = vmatpush1.msra.mxu0 0.0
        %1723 = vmatprep.subr.mxu0 0.0
        %1724 = vmatpush1.msra.mxu0 0.0
        %1725 = vmatprep.subr.mxu0 0.0
        %1726 = vmatpush1.msra.mxu0 0.0
        %1727 = vmatprep.subr.mxu0 0.0
        %1728 = vmatpush1.msra.mxu0 0.0
        %1729 = vmatprep.subr.mxu0 0.0
        %1730 = vmatpush1.msra.mxu0 0.0
        %1731 = vmatprep.subr.mxu0 0.0
        %1732 = vmatpush1.msra.mxu0 0.0
        %1733 = vmatprep.subr.mxu0 0.0
        %1734 = vmatpush1.msra.mxu0 0.0
        %1735 = vmatprep.subr.mxu0 0.0
        %1736 = vmatpush1.msra.mxu0 0.0
        %1737 = vmatprep.subr.mxu0 0.0
        %1738 = vmatpush1.msra.mxu0 0.0
        %1739 = vmatprep.subr.mxu0 0.0
        %1740 = vmatpush1.msra.mxu0 0.0
        %1741 = vmatprep.subr.mxu0 0.0
        %1742 = vmatpush1.msra.mxu0 0.0
        %1743 = vmatprep.subr.mxu0 0.0
        %1744 = vmatpush1.msra.mxu0 0.0
        %1745 = vmatprep.subr.mxu0 0.0
        %1746 = vmatpush1.msra.mxu0 0.0
        %1747 = vmatprep.subr.mxu0 0.0
        %1748 = vmatpush1.msra.mxu0 0.0
        %1749 = vmatprep.subr.mxu0 0.0
        %1750 = vmatpush1.msra.mxu0 0.0
        %1751 = vmatprep.subr.mxu0 0.0
        %1752 = vmatpush1.msra.mxu0 0.0
        %1753 = vmatprep.subr.mxu0 0.0
        %1754 = vmatpush1.msra.mxu0 0.0
        %1755 = vmatprep.subr.mxu0 0.0
        %1756 = vmatpush1.msra.mxu0 0.0
        %1757 = vmatprep.subr.mxu0 0.0
        %1758 = vmatpush1.msra.mxu0 0.0
        %1759 = vmatprep.subr.mxu0 0.0
        %1760 = vmatpush1.msra.mxu0 0.0
        %1761 = vmatprep.mubr.f32.mxu0 0.0
        %1762 = vmatmul.mubr.f32.gmra.mrb[0].mxu0 %v1670
        %v1763 = vpop.f32.mrb[0].mxu0
        %v1764 = vadd.f32 %v1666, %v1763
        %v1765 = vpop.f32.mrb[0].mxu0
        %1766 = vmatprep.mubr.f32.mxu0 0.0
        %1767 = vmatmul.mubr.f32.gmra.mrb[0].mxu0 %v1673
        %v1768 = vpop.f32.mrb[0].mxu0
        %v1769 = vadd.f32 %v1666, %v1768
        %v1770 = vpop.f32.mrb[0].mxu0
        %1771 = vmatprep.mubr.f32.mxu0 0.0
        %1772 = vmatmul.mubr.f32.gmra.mrb[0].mxu0 %v1676
        %v1773 = vpop.f32.mrb[0].mxu0
        %v1774 = vadd.f32 %v1666, %v1773
        %v1775 = vpop.f32.mrb[0].mxu0
        %1776 = vmatprep.mubr.f32.mxu0 0.0
        %1777 = vmatmul.mubr.f32.gmra.mrb[0].mxu0 %v1679
        %v1778 = vpop.f32.mrb[0].mxu0
        %v1779 = vadd.f32 %v1666, %v1778
        %v1780 = vpop.f32.mrb[0].mxu0
        %1781 = vmatprep.mubr.f32.mxu0 0.0
        %1782 = vmatmul.mubr.f32.gmra.mrb[0].mxu0 %v1682
        %v1783 = vpop.f32.mrb[0].mxu0
        %v1784 = vadd.f32 %v1666, %v1783
        %v1785 = vpop.f32.mrb[0].mxu0
        %1786 = vmatprep.mubr.f32.mxu0 0.0
        %1787 = vmatmul.mubr.f32.gmra.mrb[0].mxu0 %v1685
        %v1788 = vpop.f32.mrb[0].mxu0
        %v1789 = vadd.f32 %v1666, %v1788
        %v1790 = vpop.f32.mrb[0].mxu0
        %1791 = vmatprep.mubr.f32.mxu0 0.0
        %1792 = vmatmul.mubr.f32.gmra.mrb[0].mxu0 %v1688
        %v1793 = vpop.f32.mrb[0].mxu0
        %v1794 = vadd.f32 %v1666, %v1793
        %v1795 = vpop.f32.mrb[0].mxu0
        %1796 = vmatprep.mubr.f32.mxu0 0.0
        %1797 = vmatmul.mubr.f32.gmra.mrb[0].mxu0 %v1691
        %v1798 = vpop.f32.mrb[0].mxu0
        %v1799 = vadd.f32 %v1666, %v1798
        %v1800 = vpop.f32.mrb[0].mxu0
        %1801 = vdwg.mxu0
        %v1802 = vmul.f32 %v1764, %v1164
        %v1803 = vmul.f32 %v1769, %v1169
        %v1804 = vmul.f32 %v1774, %v1174
        %v1805 = vmul.f32 %v1779, %v1179
        %v1806 = vmul.f32 %v1784, %v1184
        %v1807 = vmul.f32 %v1789, %v1189
        %v1808 = vmul.f32 %v1794, %v1194
        %v1809 = vmul.f32 %v1799, %v1199
        %1810 = vst.msk [vmem:[%s910] sm:$0xff] %vm1031, %v1802
        %1811 = vst.msk [vmem:[%s910 + $0x8] sm:$0xff] %vm1031, %v1803
        %1812 = vst.msk [vmem:[%s910 + $0x10] sm:$0xff] %vm1031, %v1804
        %1813 = vst.msk [vmem:[%s910 + $0x18] sm:$0xff] %vm1031, %v1805
        %1814 = vst.msk [vmem:[%s910 + $0x20] sm:$0xff] %vm1031, %v1806
        %1815 = vst.msk [vmem:[%s910 + $0x28] sm:$0xff] %vm1031, %v1807
        %1816 = vst.msk [vmem:[%s910 + $0x30] sm:$0xff] %vm1031, %v1808
        %1817 = vst.msk [vmem:[%s910 + $0x38] sm:$0xff] %vm1031, %v1809
        %vm1818 = vcmp.gt.f32.partialorder %v923, 0.0
        %vm1819 = vcmp.gt.f32.partialorder %v924, 0.0
        %vm1820 = vcmp.gt.f32.partialorder %v925, 0.0
        %vm1821 = vcmp.gt.f32.partialorder %v926, 0.0
        %vm1822 = vcmp.gt.f32.partialorder %v927, 0.0
        %vm1823 = vcmp.gt.f32.partialorder %v928, 0.0
        %vm1824 = vcmp.gt.f32.partialorder %v929, 0.0
        %vm1825 = vcmp.gt.f32.partialorder %v930, 0.0
        %v1826 = vsel %vm1818, 1, 0
        %v1827 = vsel %vm1819, 1, 0
        %v1828 = vsel %vm1820, 1, 0
        %v1829 = vsel %vm1821, 1, 0
        %v1830 = vsel %vm1822, 1, 0
        %v1831 = vsel %vm1823, 1, 0
        %v1832 = vsel %vm1824, 1, 0
        %v1833 = vsel %vm1825, 1, 0
        %1834 = vset.pattern.permute.xlu0 0
        %1835 = vperm.xlu0 %1834, %v1826
        %v1836 = vpop.permute.xlu0 %1835
        %1837 = vset.pattern.permute.xlu0 0
        %1838 = vperm.xlu0 %1837, %v1827
        %v1839 = vpop.permute.xlu0 %1838
        %1840 = vset.pattern.permute.xlu0 0
        %1841 = vperm.xlu0 %1840, %v1828
        %v1842 = vpop.permute.xlu0 %1841
        %1843 = vset.pattern.permute.xlu0 0
        %1844 = vperm.xlu0 %1843, %v1829
        %v1845 = vpop.permute.xlu0 %1844
        %1846 = vset.pattern.permute.xlu0 0
        %1847 = vperm.xlu0 %1846, %v1830
        %v1848 = vpop.permute.xlu0 %1847
        %1849 = vset.pattern.permute.xlu0 0
        %1850 = vperm.xlu0 %1849, %v1831
        %v1851 = vpop.permute.xlu0 %1850
        %1852 = vset.pattern.permute.xlu0 0
        %1853 = vperm.xlu0 %1852, %v1832
        %v1854 = vpop.permute.xlu0 %1853
        %1855 = vset.pattern.permute.xlu0 0
        %1856 = vperm.xlu0 %1855, %v1833
        %v1857 = vpop.permute.xlu0 %1856
        %vm1858 = vcmp.eq.s32.totalorder %v1836, 1
        %vm1859 = vcmp.eq.s32.totalorder %v1839, 1
        %vm1860 = vcmp.eq.s32.totalorder %v1842, 1
        %vm1861 = vcmp.eq.s32.totalorder %v1845, 1
        %vm1862 = vcmp.eq.s32.totalorder %v1848, 1
        %vm1863 = vcmp.eq.s32.totalorder %v1851, 1
        %vm1864 = vcmp.eq.s32.totalorder %v1854, 1
        %vm1865 = vcmp.eq.s32.totalorder %v1857, 1
        %v1866 = vsel %vm1858, %v1567, -1e+30
        %v1867 = vsel %vm1859, %v1568, -1e+30
        %v1868 = vsel %vm1860, %v1569, -1e+30
        %v1869 = vsel %vm1861, %v1570, -1e+30
        %v1870 = vsel %vm1862, %v1571, -1e+30
        %v1871 = vsel %vm1863, %v1572, -1e+30
        %v1872 = vsel %vm1864, %v1573, -1e+30
        %v1873 = vsel %vm1865, %v1574, -1e+30
        %v1874 = vsel %vm1668, %v1866, -inf
        %v1875 = vrot.slane %v1874, 4
        %v1876 = vmax.f32 %v1874, %v1875
        %v1877 = vrot.slane %v1876, 2
        %v1878 = vmax.f32 %v1876, %v1877
        %v1879 = vrot.slane %v1878, 1
        %v1880 = vmax.f32 %v1878, %v1879
        %v1881 = vsel %vm1668, %v1867, -inf
        %v1882 = vrot.slane %v1881, 4
        %v1883 = vmax.f32 %v1881, %v1882
        %v1884 = vrot.slane %v1883, 2
        %v1885 = vmax.f32 %v1883, %v1884
        %v1886 = vrot.slane %v1885, 1
        %v1887 = vmax.f32 %v1885, %v1886
        %v1888 = vsel %vm1668, %v1868, -inf
        %v1889 = vrot.slane %v1888, 4
        %v1890 = vmax.f32 %v1888, %v1889
        %v1891 = vrot.slane %v1890, 2
        %v1892 = vmax.f32 %v1890, %v1891
        %v1893 = vrot.slane %v1892, 1
        %v1894 = vmax.f32 %v1892, %v1893
        %v1895 = vsel %vm1668, %v1869, -inf
        %v1896 = vrot.slane %v1895, 4
        %v1897 = vmax.f32 %v1895, %v1896
        %v1898 = vrot.slane %v1897, 2
        %v1899 = vmax.f32 %v1897, %v1898
        %v1900 = vrot.slane %v1899, 1
        %v1901 = vmax.f32 %v1899, %v1900
        %v1902 = vsel %vm1668, %v1870, -inf
        %v1903 = vrot.slane %v1902, 4
        %v1904 = vmax.f32 %v1902, %v1903
        %v1905 = vrot.slane %v1904, 2
        %v1906 = vmax.f32 %v1904, %v1905
        %v1907 = vrot.slane %v1906, 1
        %v1908 = vmax.f32 %v1906, %v1907
        %v1909 = vsel %vm1668, %v1871, -inf
        %v1910 = vrot.slane %v1909, 4
        %v1911 = vmax.f32 %v1909, %v1910
        %v1912 = vrot.slane %v1911, 2
        %v1913 = vmax.f32 %v1911, %v1912
        %v1914 = vrot.slane %v1913, 1
        %v1915 = vmax.f32 %v1913, %v1914
        %v1916 = vsel %vm1668, %v1872, -inf
        %v1917 = vrot.slane %v1916, 4
        %v1918 = vmax.f32 %v1916, %v1917
        %v1919 = vrot.slane %v1918, 2
        %v1920 = vmax.f32 %v1918, %v1919
        %v1921 = vrot.slane %v1920, 1
        %v1922 = vmax.f32 %v1920, %v1921
        %v1923 = vsel %vm1668, %v1873, -inf
        %v1924 = vrot.slane %v1923, 4
        %v1925 = vmax.f32 %v1923, %v1924
        %v1926 = vrot.slane %v1925, 2
        %v1927 = vmax.f32 %v1925, %v1926
        %v1928 = vrot.slane %v1927, 1
        %v1929 = vmax.f32 %v1927, %v1928
        %v1930 = vsub.f32 %v1866, %v1880
        %v1931 = vsub.f32 %v1867, %v1887
        %v1932 = vsub.f32 %v1868, %v1894
        %v1933 = vsub.f32 %v1869, %v1901
        %v1934 = vsub.f32 %v1870, %v1908
        %v1935 = vsub.f32 %v1871, %v1915
        %v1936 = vsub.f32 %v1872, %v1922
        %v1937 = vsub.f32 %v1873, %v1929
        %v1938 = vmul.f32 %v1930, 1.442695
        %v1939 = vpow.pop %v1938
        %v1940 = vmul.f32 %v1931, 1.442695
        %v1941 = vpow.pop %v1940
        %v1942 = vmul.f32 %v1932, 1.442695
        %v1943 = vpow.pop %v1942
        %v1944 = vmul.f32 %v1933, 1.442695
        %v1945 = vpow.pop %v1944
        %v1946 = vmul.f32 %v1934, 1.442695
        %v1947 = vpow.pop %v1946
        %v1948 = vmul.f32 %v1935, 1.442695
        %v1949 = vpow.pop %v1948
        %v1950 = vmul.f32 %v1936, 1.442695
        %v1951 = vpow.pop %v1950
        %v1952 = vmul.f32 %v1937, 1.442695
        %v1953 = vpow.pop %v1952
        %v1954 = vsel %vm1668, %v1939, 0.0
        %v1955 = vrot.slane %v1954, 4
        %v1956 = vadd.f32 %v1954, %v1955
        %v1957 = vrot.slane %v1956, 2
        %v1958 = vadd.f32 %v1956, %v1957
        %v1959 = vrot.slane %v1958, 1
        %v1960 = vadd.f32 %v1958, %v1959
        %v1961 = vsel %vm1668, %v1941, 0.0
        %v1962 = vrot.slane %v1961, 4
        %v1963 = vadd.f32 %v1961, %v1962
        %v1964 = vrot.slane %v1963, 2
        %v1965 = vadd.f32 %v1963, %v1964
        %v1966 = vrot.slane %v1965, 1
        %v1967 = vadd.f32 %v1965, %v1966
        %v1968 = vsel %vm1668, %v1943, 0.0
        %v1969 = vrot.slane %v1968, 4
        %v1970 = vadd.f32 %v1968, %v1969
        %v1971 = vrot.slane %v1970, 2
        %v1972 = vadd.f32 %v1970, %v1971
        %v1973 = vrot.slane %v1972, 1
        %v1974 = vadd.f32 %v1972, %v1973
        %v1975 = vsel %vm1668, %v1945, 0.0
        %v1976 = vrot.slane %v1975, 4
        %v1977 = vadd.f32 %v1975, %v1976
        %v1978 = vrot.slane %v1977, 2
        %v1979 = vadd.f32 %v1977, %v1978
        %v1980 = vrot.slane %v1979, 1
        %v1981 = vadd.f32 %v1979, %v1980
        %v1982 = vsel %vm1668, %v1947, 0.0
        %v1983 = vrot.slane %v1982, 4
        %v1984 = vadd.f32 %v1982, %v1983
        %v1985 = vrot.slane %v1984, 2
        %v1986 = vadd.f32 %v1984, %v1985
        %v1987 = vrot.slane %v1986, 1
        %v1988 = vadd.f32 %v1986, %v1987
        %v1989 = vsel %vm1668, %v1949, 0.0
        %v1990 = vrot.slane %v1989, 4
        %v1991 = vadd.f32 %v1989, %v1990
        %v1992 = vrot.slane %v1991, 2
        %v1993 = vadd.f32 %v1991, %v1992
        %v1994 = vrot.slane %v1993, 1
        %v1995 = vadd.f32 %v1993, %v1994
        %v1996 = vsel %vm1668, %v1951, 0.0
        %v1997 = vrot.slane %v1996, 4
        %v1998 = vadd.f32 %v1996, %v1997
        %v1999 = vrot.slane %v1998, 2
        %v2000 = vadd.f32 %v1998, %v1999
        %v2001 = vrot.slane %v2000, 1
        %v2002 = vadd.f32 %v2000, %v2001
        %v2003 = vsel %vm1668, %v1953, 0.0
        %v2004 = vrot.slane %v2003, 4
        %v2005 = vadd.f32 %v2003, %v2004
        %v2006 = vrot.slane %v2005, 2
        %v2007 = vadd.f32 %v2005, %v2006
        %v2008 = vrot.slane %v2007, 1
        %v2009 = vadd.f32 %v2007, %v2008
        %v2010 = vrcp.pop %v1960
        %v2011 = vmul.f32 1.0, %v2010
        %v2012 = vrcp.pop %v1967
        %v2013 = vmul.f32 1.0, %v2012
        %v2014 = vrcp.pop %v1974
        %v2015 = vmul.f32 1.0, %v2014
        %v2016 = vrcp.pop %v1981
        %v2017 = vmul.f32 1.0, %v2016
        %v2018 = vrcp.pop %v1988
        %v2019 = vmul.f32 1.0, %v2018
        %v2020 = vrcp.pop %v1995
        %v2021 = vmul.f32 1.0, %v2020
        %v2022 = vrcp.pop %v2002
        %v2023 = vmul.f32 1.0, %v2022
        %v2024 = vrcp.pop %v2009
        %v2025 = vmul.f32 1.0, %v2024
        %v2026 = vmul.f32 %v1939, %v2011
        %v2027 = vmul.f32 %v1941, %v2013
        %v2028 = vmul.f32 %v1943, %v2015
        %v2029 = vmul.f32 %v1945, %v2017
        %v2030 = vmul.f32 %v1947, %v2019
        %v2031 = vmul.f32 %v1949, %v2021
        %v2032 = vmul.f32 %v1951, %v2023
        %v2033 = vmul.f32 %v1953, %v2025
        %v2034 = vld [vmem:[%s24] sm:$0xf]
        %v2036 = vsel %vm1668, %v2026, 0
        %v2039 = vsel %vm1668, %v2027, 0
        %v2042 = vsel %vm1668, %v2028, 0
        %v2045 = vsel %vm1668, %v2029, 0
        %v2048 = vsel %vm1668, %v2030, 0
        %v2051 = vsel %vm1668, %v2031, 0
        %v2054 = vsel %vm1668, %v2032, 0
        %v2057 = vsel %vm1668, %v2033, 0
        %v2060 = vsel %vm1693, %v2034, 0
        %2062 = vmatprep.subr.mxu0 0.0
        %2063 = vmatpush1.msra.mxu0 %v2060
        %2064 = vmatprep.subr.mxu0 0.0
        %2065 = vmatpush1.msra.mxu0 0.0
        %2066 = vmatprep.subr.mxu0 0.0
        %2067 = vmatpush1.msra.mxu0 0.0
        %2068 = vmatprep.subr.mxu0 0.0
        %2069 = vmatpush1.msra.mxu0 0.0
        %2070 = vmatprep.subr.mxu0 0.0
        %2071 = vmatpush1.msra.mxu0 0.0
        %2072 = vmatprep.subr.mxu0 0.0
        %2073 = vmatpush1.msra.mxu0 0.0
        %2074 = vmatprep.subr.mxu0 0.0
        %2075 = vmatpush1.msra.mxu0 0.0
        %2076 = vmatprep.subr.mxu0 0.0
        %2077 = vmatpush1.msra.mxu0 0.0
        %2078 = vmatprep.subr.mxu0 0.0
        %2079 = vmatpush1.msra.mxu0 0.0
        %2080 = vmatprep.subr.mxu0 0.0
        %2081 = vmatpush1.msra.mxu0 0.0
        %2082 = vmatprep.subr.mxu0 0.0
        %2083 = vmatpush1.msra.mxu0 0.0
        %2084 = vmatprep.subr.mxu0 0.0
        %2085 = vmatpush1.msra.mxu0 0.0
        %2086 = vmatprep.subr.mxu0 0.0
        %2087 = vmatpush1.msra.mxu0 0.0
        %2088 = vmatprep.subr.mxu0 0.0
        %2089 = vmatpush1.msra.mxu0 0.0
        %2090 = vmatprep.subr.mxu0 0.0
        %2091 = vmatpush1.msra.mxu0 0.0
        %2092 = vmatprep.subr.mxu0 0.0
        %2093 = vmatpush1.msra.mxu0 0.0
        %2094 = vmatprep.subr.mxu0 0.0
        %2095 = vmatpush1.msra.mxu0 0.0
        %2096 = vmatprep.subr.mxu0 0.0
        %2097 = vmatpush1.msra.mxu0 0.0
        %2098 = vmatprep.subr.mxu0 0.0
        %2099 = vmatpush1.msra.mxu0 0.0
        %2100 = vmatprep.subr.mxu0 0.0
        %2101 = vmatpush1.msra.mxu0 0.0
        %2102 = vmatprep.subr.mxu0 0.0
        %2103 = vmatpush1.msra.mxu0 0.0
        %2104 = vmatprep.subr.mxu0 0.0
        %2105 = vmatpush1.msra.mxu0 0.0
        %2106 = vmatprep.subr.mxu0 0.0
        %2107 = vmatpush1.msra.mxu0 0.0
        %2108 = vmatprep.subr.mxu0 0.0
        %2109 = vmatpush1.msra.mxu0 0.0
        %2110 = vmatprep.subr.mxu0 0.0
        %2111 = vmatpush1.msra.mxu0 0.0
        %2112 = vmatprep.subr.mxu0 0.0
        %2113 = vmatpush1.msra.mxu0 0.0
        %2114 = vmatprep.subr.mxu0 0.0
        %2115 = vmatpush1.msra.mxu0 0.0
        %2116 = vmatprep.subr.mxu0 0.0
        %2117 = vmatpush1.msra.mxu0 0.0
        %2118 = vmatprep.subr.mxu0 0.0
        %2119 = vmatpush1.msra.mxu0 0.0
        %2120 = vmatprep.subr.mxu0 0.0
        %2121 = vmatpush1.msra.mxu0 0.0
        %2122 = vmatprep.subr.mxu0 0.0
        %2123 = vmatpush1.msra.mxu0 0.0
        %2124 = vmatprep.subr.mxu0 0.0
        %2125 = vmatpush1.msra.mxu0 0.0
        %2126 = vmatprep.mubr.f32.mxu0 0.0
        %2127 = vmatmul.mubr.f32.gmra.mrb[0].mxu0 %v2036
        %v2128 = vpop.f32.mrb[0].mxu0
        %v2129 = vadd.f32 0.0, %v2128
        %v2130 = vpop.f32.mrb[0].mxu0
        %2131 = vmatprep.mubr.f32.mxu0 0.0
        %2132 = vmatmul.mubr.f32.gmra.mrb[0].mxu0 %v2039
        %v2133 = vpop.f32.mrb[0].mxu0
        %v2134 = vadd.f32 0.0, %v2133
        %v2135 = vpop.f32.mrb[0].mxu0
        %2136 = vmatprep.mubr.f32.mxu0 0.0
        %2137 = vmatmul.mubr.f32.gmra.mrb[0].mxu0 %v2042
        %v2138 = vpop.f32.mrb[0].mxu0
        %v2139 = vadd.f32 0.0, %v2138
        %v2140 = vpop.f32.mrb[0].mxu0
        %2141 = vmatprep.mubr.f32.mxu0 0.0
        %2142 = vmatmul.mubr.f32.gmra.mrb[0].mxu0 %v2045
        %v2143 = vpop.f32.mrb[0].mxu0
        %v2144 = vadd.f32 0.0, %v2143
        %v2145 = vpop.f32.mrb[0].mxu0
        %2146 = vmatprep.mubr.f32.mxu0 0.0
        %2147 = vmatmul.mubr.f32.gmra.mrb[0].mxu0 %v2048
        %v2148 = vpop.f32.mrb[0].mxu0
        %v2149 = vadd.f32 0.0, %v2148
        %v2150 = vpop.f32.mrb[0].mxu0
        %2151 = vmatprep.mubr.f32.mxu0 0.0
        %2152 = vmatmul.mubr.f32.gmra.mrb[0].mxu0 %v2051
        %v2153 = vpop.f32.mrb[0].mxu0
        %v2154 = vadd.f32 0.0, %v2153
        %v2155 = vpop.f32.mrb[0].mxu0
        %2156 = vmatprep.mubr.f32.mxu0 0.0
        %2157 = vmatmul.mubr.f32.gmra.mrb[0].mxu0 %v2054
        %v2158 = vpop.f32.mrb[0].mxu0
        %v2159 = vadd.f32 0.0, %v2158
        %v2160 = vpop.f32.mrb[0].mxu0
        %2161 = vmatprep.mubr.f32.mxu0 0.0
        %2162 = vmatmul.mubr.f32.gmra.mrb[0].mxu0 %v2057
        %v2163 = vpop.f32.mrb[0].mxu0
        %v2164 = vadd.f32 0.0, %v2163
        %v2165 = vpop.f32.mrb[0].mxu0
        %2166 = vdwg.mxu0
        %2167 = vrot.lane.b32.xlu0 %v1021, 64
        %v2168 = vpop.permute.xlu0 %2167
        %v2170 = vmul.f32 %v2129, %v2168
        %v2171 = vmul.f32 %v2134, %v2168
        %v2172 = vmul.f32 %v2139, %v2168
        %v2173 = vmul.f32 %v2144, %v2168
        %v2174 = vmul.f32 %v2149, %v2168
        %v2175 = vmul.f32 %v2154, %v2168
        %v2176 = vmul.f32 %v2159, %v2168
        %v2177 = vmul.f32 %v2164, %v2168
        %v2178 = vsel %vm942, %v2170, 0.0
        %v2179 = vrot.slane %v2178, 4
        %v2180 = vadd.f32 %v2178, %v2179
        %v2181 = vrot.slane %v2180, 2
        %v2182 = vadd.f32 %v2180, %v2181
        %v2183 = vrot.slane %v2182, 1
        %v2184 = vadd.f32 %v2182, %v2183
        %v2185 = vsel %vm942, %v2171, 0.0
        %v2186 = vrot.slane %v2185, 4
        %v2187 = vadd.f32 %v2185, %v2186
        %v2188 = vrot.slane %v2187, 2
        %v2189 = vadd.f32 %v2187, %v2188
        %v2190 = vrot.slane %v2189, 1
        %v2191 = vadd.f32 %v2189, %v2190
        %v2192 = vsel %vm942, %v2172, 0.0
        %v2193 = vrot.slane %v2192, 4
        %v2194 = vadd.f32 %v2192, %v2193
        %v2195 = vrot.slane %v2194, 2
        %v2196 = vadd.f32 %v2194, %v2195
        %v2197 = vrot.slane %v2196, 1
        %v2198 = vadd.f32 %v2196, %v2197
        %v2199 = vsel %vm942, %v2173, 0.0
        %v2200 = vrot.slane %v2199, 4
        %v2201 = vadd.f32 %v2199, %v2200
        %v2202 = vrot.slane %v2201, 2
        %v2203 = vadd.f32 %v2201, %v2202
        %v2204 = vrot.slane %v2203, 1
        %v2205 = vadd.f32 %v2203, %v2204
        %v2206 = vsel %vm942, %v2174, 0.0
        %v2207 = vrot.slane %v2206, 4
        %v2208 = vadd.f32 %v2206, %v2207
        %v2209 = vrot.slane %v2208, 2
        %v2210 = vadd.f32 %v2208, %v2209
        %v2211 = vrot.slane %v2210, 1
        %v2212 = vadd.f32 %v2210, %v2211
        %v2213 = vsel %vm942, %v2175, 0.0
        %v2214 = vrot.slane %v2213, 4
        %v2215 = vadd.f32 %v2213, %v2214
        %v2216 = vrot.slane %v2215, 2
        %v2217 = vadd.f32 %v2215, %v2216
        %v2218 = vrot.slane %v2217, 1
        %v2219 = vadd.f32 %v2217, %v2218
        %v2220 = vsel %vm942, %v2176, 0.0
        %v2221 = vrot.slane %v2220, 4
        %v2222 = vadd.f32 %v2220, %v2221
        %v2223 = vrot.slane %v2222, 2
        %v2224 = vadd.f32 %v2222, %v2223
        %v2225 = vrot.slane %v2224, 1
        %v2226 = vadd.f32 %v2224, %v2225
        %v2227 = vsel %vm942, %v2177, 0.0
        %v2228 = vrot.slane %v2227, 4
        %v2229 = vadd.f32 %v2227, %v2228
        %v2230 = vrot.slane %v2229, 2
        %v2231 = vadd.f32 %v2229, %v2230
        %v2232 = vrot.slane %v2231, 1
        %v2233 = vadd.f32 %v2231, %v2232
        %vm2242 = vcmask 1041409
        %v2243 = vsel %vm2242, %v2191, %v2184
        %vm2244 = vcmask 1042434
        %v2245 = vsel %vm2244, %v2198, %v2243
        %vm2246 = vcmask 1043459
        %v2247 = vsel %vm2246, %v2205, %v2245
        %vm2248 = vcmask 1044484
        %v2249 = vsel %vm2248, %v2212, %v2247
        %vm2250 = vcmask 1045509
        %v2251 = vsel %vm2250, %v2219, %v2249
        %vm2252 = vcmask 1046534
        %v2253 = vsel %vm2252, %v2226, %v2251
        %vm2254 = vcmask 1047559
        %v2255 = vsel %vm2254, %v2233, %v2253
        %2256 = vrot.lane.b32.xlu0 %v2255, 40
        %v2257 = vpop.permute.xlu0 %2256
        %v2259 = vmul.f32 %v1579, %v2257
        %2261 = vrot.lane.b32.xlu0 %v2259, 96
        %v2262 = vpop.permute.xlu0 %2261
        %v2264 = vadd.f32 %v1578, %v2262
        %v2265 = vld [vmem:[%s15] sm:$0xff]
        %v2266 = vld [vmem:[%s15 + $0x8] sm:$0xff]
        %v2267 = vld [vmem:[%s15 + $0x10] sm:$0xff]
        %v2268 = vld [vmem:[%s15 + $0x18] sm:$0xff]
        %v2269 = vld [vmem:[%s16] sm:$0x1]
        %v2271 = vlaneseq
        %v2272 = vshrl.u32 %v2271, 7
        %v2273 = vsub.s32 0, %v2272
        %v2274 = vrot.slane %v2269, %v2273
        %2277 = vrot.lane.b32.xlu0 %v2264, 120
        %v2278 = vpop.permute.xlu0 %2277
        %v2279 = vsel %vm942, %v2278, 0
        %2281 = vmatprep.subr.mxu0 0.0
        %2282 = vmatpush1.msra.mxu0 %v2265
        %2283 = vmatprep.subr.mxu0 0.0
        %2284 = vmatpush1.msra.mxu0 %v2266
        %2285 = vmatprep.subr.mxu0 0.0
        %2286 = vmatpush1.msra.mxu0 %v2267
        %2287 = vmatprep.subr.mxu0 0.0
        %2288 = vmatpush1.msra.mxu0 %v2268
        %2289 = vmatprep.subr.mxu0 0.0
        %2290 = vmatpush1.msra.mxu0 0.0
        %2291 = vmatprep.subr.mxu0 0.0
        %2292 = vmatpush1.msra.mxu0 0.0
        %2293 = vmatprep.subr.mxu0 0.0
        %2294 = vmatpush1.msra.mxu0 0.0
        %2295 = vmatprep.subr.mxu0 0.0
        %2296 = vmatpush1.msra.mxu0 0.0
        %2297 = vmatprep.subr.mxu0 0.0
        %2298 = vmatpush1.msra.mxu0 0.0
        %2299 = vmatprep.subr.mxu0 0.0
        %2300 = vmatpush1.msra.mxu0 0.0
        %2301 = vmatprep.subr.mxu0 0.0
        %2302 = vmatpush1.msra.mxu0 0.0
        %2303 = vmatprep.subr.mxu0 0.0
        %2304 = vmatpush1.msra.mxu0 0.0
        %2305 = vmatprep.subr.mxu0 0.0
        %2306 = vmatpush1.msra.mxu0 0.0
        %2307 = vmatprep.subr.mxu0 0.0
        %2308 = vmatpush1.msra.mxu0 0.0
        %2309 = vmatprep.subr.mxu0 0.0
        %2310 = vmatpush1.msra.mxu0 0.0
        %2311 = vmatprep.subr.mxu0 0.0
        %2312 = vmatpush1.msra.mxu0 0.0
        %2313 = vmatprep.subr.mxu0 0.0
        %2314 = vmatpush1.msra.mxu0 0.0
        %2315 = vmatprep.subr.mxu0 0.0
        %2316 = vmatpush1.msra.mxu0 0.0
        %2317 = vmatprep.subr.mxu0 0.0
        %2318 = vmatpush1.msra.mxu0 0.0
        %2319 = vmatprep.subr.mxu0 0.0
        %2320 = vmatpush1.msra.mxu0 0.0
        %2321 = vmatprep.subr.mxu0 0.0
        %2322 = vmatpush1.msra.mxu0 0.0
        %2323 = vmatprep.subr.mxu0 0.0
        %2324 = vmatpush1.msra.mxu0 0.0
        %2325 = vmatprep.subr.mxu0 0.0
        %2326 = vmatpush1.msra.mxu0 0.0
        %2327 = vmatprep.subr.mxu0 0.0
        %2328 = vmatpush1.msra.mxu0 0.0
        %2329 = vmatprep.subr.mxu0 0.0
        %2330 = vmatpush1.msra.mxu0 0.0
        %2331 = vmatprep.subr.mxu0 0.0
        %2332 = vmatpush1.msra.mxu0 0.0
        %2333 = vmatprep.subr.mxu0 0.0
        %2334 = vmatpush1.msra.mxu0 0.0
        %2335 = vmatprep.subr.mxu0 0.0
        %2336 = vmatpush1.msra.mxu0 0.0
        %2337 = vmatprep.subr.mxu0 0.0
        %2338 = vmatpush1.msra.mxu0 0.0
        %2339 = vmatprep.subr.mxu0 0.0
        %2340 = vmatpush1.msra.mxu0 0.0
        %2341 = vmatprep.subr.mxu0 0.0
        %2342 = vmatpush1.msra.mxu0 0.0
        %2343 = vmatprep.subr.mxu0 0.0
        %2344 = vmatpush1.msra.mxu0 0.0
        %2345 = vmatprep.mubr.f32.mxu0 0.0
        %2346 = vmatmul.mubr.f32.gmra.mrb[0].mxu0 %v2279
        %v2347 = vpop.f32.mrb[0].mxu0
        %v2348 = vadd.f32 %v2274, %v2347
        %v2349 = vpop.f32.mrb[0].mxu0
        %2350 = vdwg.mxu0
        %v2351 = vmul.f32 %v2348, %v1019
        %2352 = vst.msk [vmem:[%s869] sm:$0xff] %vm942, %v2351
        %v2353 = vsel %vm942, %v912, 0.0
        %v2354 = vrot.slane %v2353, 4
        %v2355 = vadd.f32 %v2353, %v2354
        %v2356 = vrot.slane %v2355, 2
        %v2357 = vadd.f32 %v2355, %v2356
        %v2358 = vrot.slane %v2357, 1
        %v2359 = vadd.f32 %v2357, %v2358
        %v2360 = vrcp.pop 8.0
        %v2361 = vmul.f32 %v2359, %v2360
        %v2362 = vsub.f32 %v912, %v2361
        %v2363 = vmul.f32 %v2362, %v2362
        %v2364 = vsel %vm942, %v2363, 0.0
        %v2365 = vrot.slane %v2364, 4
        %v2366 = vadd.f32 %v2364, %v2365
        %v2367 = vrot.slane %v2366, 2
        %v2368 = vadd.f32 %v2366, %v2367
        %v2369 = vrot.slane %v2368, 1
        %v2370 = vadd.f32 %v2368, %v2369
        %v2371 = vmul.f32 %v2370, 0.14285715
        %v2372 = vrsqrt.pop %v2371
        %v2373 = vmul.f32 %v2371, %v2372
        %vm2374 = vcmp.eq.f32.partialorder %v2371, inf
        %v2375 = vsel %vm2374, %v2371, %v2373
        %vm2376 = vcmp.eq.f32.partialorder %v2371, 0.0
        %v2377 = vand.u32 %v2371, 2147483648
        %v2378 = vsel %vm2376, %v2377, %v2375
        %v2379 = vsel %vm942, %v912, inf
        %v2380 = vrot.slane %v2379, 4
        %v2381 = vmin.f32 %v2379, %v2380
        %v2382 = vrot.slane %v2381, 2
        %v2383 = vmin.f32 %v2381, %v2382
        %v2384 = vrot.slane %v2383, 1
        %v2385 = vmin.f32 %v2383, %v2384
        %v2386 = vsel %vm942, %v912, -inf
        %v2387 = vrot.slane %v2386, 4
        %v2388 = vmax.f32 %v2386, %v2387
        %v2389 = vrot.slane %v2388, 2
        %v2390 = vmax.f32 %v2388, %v2389
        %v2391 = vrot.slane %v2390, 1
        %v2392 = vmax.f32 %v2390, %v2391
        %2394 = vrot.lane.b32.xlu0 %v2385, 32
        %v2395 = vpop.permute.xlu0 %2394
        %2398 = vrot.lane.b32.xlu0 %v2392, 64
        %v2399 = vpop.permute.xlu0 %2398
        %2402 = vrot.lane.b32.xlu0 %v2378, 96
        %v2403 = vpop.permute.xlu0 %2402
        %v2405 = vsel %vm942, %v2361, %v2395
        %vm2406 = vcmask 523264
        %v2407 = vsel %vm2406, %v2405, %v2399
        %vm2408 = vcmask 785408
        %v2409 = vsel %vm2408, %v2407, %v2403
        %v2410 = vsel %vm1031, %v913, 0.0
        %v2411 = vsel %vm1031, %v914, 0.0
        %v2412 = vadd.f32 %v2410, %v2411
        %v2413 = vsel %vm1031, %v915, 0.0
        %v2414 = vadd.f32 %v2412, %v2413
        %v2415 = vsel %vm1031, %v916, 0.0
        %v2416 = vadd.f32 %v2414, %v2415
        %v2417 = vsel %vm1031, %v917, 0.0
        %v2418 = vadd.f32 %v2416, %v2417
        %v2419 = vsel %vm1031, %v918, 0.0
        %v2420 = vadd.f32 %v2418, %v2419
        %v2421 = vsel %vm1031, %v919, 0.0
        %v2422 = vadd.f32 %v2420, %v2421
        %v2423 = vsel %vm1031, %v920, 0.0
        %v2424 = vadd.f32 %v2422, %v2423
        %v2425 = vrot.slane %v2424, 4
        %v2426 = vadd.f32 %v2424, %v2425
        %v2427 = vrot.slane %v2426, 2
        %v2428 = vadd.f32 %v2426, %v2427
        %v2429 = vrot.slane %v2428, 1
        %v2430 = vadd.f32 %v2428, %v2429
        %v2431 = vrcp.pop 64.0
        %v2432 = vmul.f32 %v2430, %v2431
        %v2433 = vsub.f32 %v913, %v2432
        %v2434 = vsub.f32 %v914, %v2432
        %v2435 = vsub.f32 %v915, %v2432
        %v2436 = vsub.f32 %v916, %v2432
        %v2437 = vsub.f32 %v917, %v2432
        %v2438 = vsub.f32 %v918, %v2432
        %v2439 = vsub.f32 %v919, %v2432
        %v2440 = vsub.f32 %v920, %v2432
        %v2441 = vmul.f32 %v2433, %v2433
        %v2442 = vmul.f32 %v2434, %v2434
        %v2443 = vmul.f32 %v2435, %v2435
        %v2444 = vmul.f32 %v2436, %v2436
        %v2445 = vmul.f32 %v2437, %v2437
        %v2446 = vmul.f32 %v2438, %v2438
        %v2447 = vmul.f32 %v2439, %v2439
        %v2448 = vmul.f32 %v2440, %v2440
        %v2449 = vsel %vm1031, %v2441, 0.0
        %v2450 = vsel %vm1031, %v2442, 0.0
        %v2451 = vadd.f32 %v2449, %v2450
        %v2452 = vsel %vm1031, %v2443, 0.0
        %v2453 = vadd.f32 %v2451, %v2452
        %v2454 = vsel %vm1031, %v2444, 0.0
        %v2455 = vadd.f32 %v2453, %v2454
        %v2456 = vsel %vm1031, %v2445, 0.0
        %v2457 = vadd.f32 %v2455, %v2456
        %v2458 = vsel %vm1031, %v2446, 0.0
        %v2459 = vadd.f32 %v2457, %v2458
        %v2460 = vsel %vm1031, %v2447, 0.0
        %v2461 = vadd.f32 %v2459, %v2460
        %v2462 = vsel %vm1031, %v2448, 0.0
        %v2463 = vadd.f32 %v2461, %v2462
        %v2464 = vrot.slane %v2463, 4
        %v2465 = vadd.f32 %v2463, %v2464
        %v2466 = vrot.slane %v2465, 2
        %v2467 = vadd.f32 %v2465, %v2466
        %v2468 = vrot.slane %v2467, 1
        %v2469 = vadd.f32 %v2467, %v2468
        %v2470 = vmul.f32 %v2469, 0.015873017
        %v2471 = vrsqrt.pop %v2470
        %v2472 = vmul.f32 %v2470, %v2471
        %vm2473 = vcmp.eq.f32.partialorder %v2470, inf
        %v2474 = vsel %vm2473, %v2470, %v2472
        %vm2475 = vcmp.eq.f32.partialorder %v2470, 0.0
        %v2476 = vand.u32 %v2470, 2147483648
        %v2477 = vsel %vm2475, %v2476, %v2474
        %v2478 = vsel %vm1031, %v913, inf
        %v2479 = vsel %vm1031, %v914, inf
        %v2480 = vsel %vm1031, %v915, inf
        %v2481 = vsel %vm1031, %v916, inf
        %v2482 = vsel %vm1031, %v917, inf
        %v2483 = vmin.f32 %v2478, %v2482
        %v2484 = vsel %vm1031, %v918, inf
        %v2485 = vmin.f32 %v2479, %v2484
        %v2486 = vsel %vm1031, %v919, inf
        %v2487 = vmin.f32 %v2480, %v2486
        %v2488 = vsel %vm1031, %v920, inf
        %v2489 = vmin.f32 %v2481, %v2488
        %v2490 = vmin.f32 %v2483, %v2485
        %v2491 = vmin.f32 %v2487, %v2489
        %v2492 = vmin.f32 %v2490, %v2491
        %v2493 = vrot.slane %v2492, 4
        %v2494 = vmin.f32 %v2492, %v2493
        %v2495 = vrot.slane %v2494, 2
        %v2496 = vmin.f32 %v2494, %v2495
        %v2497 = vrot.slane %v2496, 1
        %v2498 = vmin.f32 %v2496, %v2497
        %v2499 = vsel %vm1031, %v913, -inf
        %v2500 = vsel %vm1031, %v914, -inf
        %v2501 = vsel %vm1031, %v915, -inf
        %v2502 = vsel %vm1031, %v916, -inf
        %v2503 = vsel %vm1031, %v917, -inf
        %v2504 = vmax.f32 %v2499, %v2503
        %v2505 = vsel %vm1031, %v918, -inf
        %v2506 = vmax.f32 %v2500, %v2505
        %v2507 = vsel %vm1031, %v919, -inf
        %v2508 = vmax.f32 %v2501, %v2507
        %v2509 = vsel %vm1031, %v920, -inf
        %v2510 = vmax.f32 %v2502, %v2509
        %v2511 = vmax.f32 %v2504, %v2506
        %v2512 = vmax.f32 %v2508, %v2510
        %v2513 = vmax.f32 %v2511, %v2512
        %v2514 = vrot.slane %v2513, 4
        %v2515 = vmax.f32 %v2513, %v2514
        %v2516 = vrot.slane %v2515, 2
        %v2517 = vmax.f32 %v2515, %v2516
        %v2518 = vrot.slane %v2517, 1
        %v2519 = vmax.f32 %v2517, %v2518
        %2521 = vrot.lane.b32.xlu0 %v2498, 16
        %v2522 = vpop.permute.xlu0 %2521
        %2525 = vrot.lane.b32.xlu0 %v2519, 32
        %v2526 = vpop.permute.xlu0 %2525
        %2529 = vrot.lane.b32.xlu0 %v2477, 48
        %v2530 = vpop.permute.xlu0 %2529
        %v2532 = vsel %vm1031, %v2432, %v2522
        %v2533 = vsel %vm942, %v2532, %v2526
        %vm2534 = vcmask 392192
        %v2535 = vsel %vm2534, %v2533, %v2530
        %v2536 = vld [vmem:[%s11] sm:$0xff]
        %v2537 = vld [vmem:[%s11 + $0x8] sm:$0xff]
        %v2538 = vld [vmem:[%s11 + $0x10] sm:$0xff]
        %v2539 = vld [vmem:[%s11 + $0x18] sm:$0xff]
        %v2540 = vld [vmem:[%s11 + $0x20] sm:$0xff]
        %v2541 = vld [vmem:[%s11 + $0x28] sm:$0xff]
        %v2542 = vld [vmem:[%s11 + $0x30] sm:$0xff]
        %v2543 = vld [vmem:[%s11 + $0x38] sm:$0xff]
        %v2544 = vld [vmem:[%s11 + $0x40] sm:$0xff]
        %v2545 = vld [vmem:[%s11 + $0x48] sm:$0xff]
        %v2546 = vld [vmem:[%s11 + $0x50] sm:$0xff]
        %v2547 = vld [vmem:[%s11 + $0x58] sm:$0xff]
        %v2548 = vld [vmem:[%s11 + $0x60] sm:$0xff]
        %v2549 = vld [vmem:[%s11 + $0x68] sm:$0xff]
        %v2550 = vld [vmem:[%s11 + $0x70] sm:$0xff]
        %v2551 = vld [vmem:[%s11 + $0x78] sm:$0xff]
        %2552 = vmatprep.subr.mxu0 0.0
        %2553 = vmatpush1.msra.mxu0 %v2536
        %2554 = vmatprep.subr.mxu0 0.0
        %2555 = vmatpush1.msra.mxu0 %v2537
        %2556 = vmatprep.subr.mxu0 0.0
        %2557 = vmatpush1.msra.mxu0 %v2538
        %2558 = vmatprep.subr.mxu0 0.0
        %2559 = vmatpush1.msra.mxu0 %v2539
        %2560 = vmatprep.subr.mxu0 0.0
        %2561 = vmatpush1.msra.mxu0 %v2540
        %2562 = vmatprep.subr.mxu0 0.0
        %2563 = vmatpush1.msra.mxu0 %v2541
        %2564 = vmatprep.subr.mxu0 0.0
        %2565 = vmatpush1.msra.mxu0 %v2542
        %2566 = vmatprep.subr.mxu0 0.0
        %2567 = vmatpush1.msra.mxu0 %v2543
        %2568 = vmatprep.subr.mxu0 0.0
        %2569 = vmatpush1.msra.mxu0 %v2544
        %2570 = vmatprep.subr.mxu0 0.0
        %2571 = vmatpush1.msra.mxu0 %v2545
        %2572 = vmatprep.subr.mxu0 0.0
        %2573 = vmatpush1.msra.mxu0 %v2546
        %2574 = vmatprep.subr.mxu0 0.0
        %2575 = vmatpush1.msra.mxu0 %v2547
        %2576 = vmatprep.subr.mxu0 0.0
        %2577 = vmatpush1.msra.mxu0 %v2548
        %2578 = vmatprep.subr.mxu0 0.0
        %2579 = vmatpush1.msra.mxu0 %v2549
        %2580 = vmatprep.subr.mxu0 0.0
        %2581 = vmatpush1.msra.mxu0 %v2550
        %2582 = vmatprep.subr.mxu0 0.0
        %2583 = vmatpush1.msra.mxu0 %v2551
        %2584 = vmatprep.subr.mxu0 0.0
        %2585 = vmatpush1.msra.mxu0 0.0
        %2586 = vmatprep.subr.mxu0 0.0
        %2587 = vmatpush1.msra.mxu0 0.0
        %2588 = vmatprep.subr.mxu0 0.0
        %2589 = vmatpush1.msra.mxu0 0.0
        %2590 = vmatprep.subr.mxu0 0.0
        %2591 = vmatpush1.msra.mxu0 0.0
        %2592 = vmatprep.subr.mxu0 0.0
        %2593 = vmatpush1.msra.mxu0 0.0
        %2594 = vmatprep.subr.mxu0 0.0
        %2595 = vmatpush1.msra.mxu0 0.0
        %2596 = vmatprep.subr.mxu0 0.0
        %2597 = vmatpush1.msra.mxu0 0.0
        %2598 = vmatprep.subr.mxu0 0.0
        %2599 = vmatpush1.msra.mxu0 0.0
        %2600 = vmatprep.subr.mxu0 0.0
        %2601 = vmatpush1.msra.mxu0 0.0
        %2602 = vmatprep.subr.mxu0 0.0
        %2603 = vmatpush1.msra.mxu0 0.0
        %2604 = vmatprep.subr.mxu0 0.0
        %2605 = vmatpush1.msra.mxu0 0.0
        %2606 = vmatprep.subr.mxu0 0.0
        %2607 = vmatpush1.msra.mxu0 0.0
        %2608 = vmatprep.subr.mxu0 0.0
        %2609 = vmatpush1.msra.mxu0 0.0
        %2610 = vmatprep.subr.mxu0 0.0
        %2611 = vmatpush1.msra.mxu0 0.0
        %2612 = vmatprep.subr.mxu0 0.0
        %2613 = vmatpush1.msra.mxu0 0.0
        %2614 = vmatprep.subr.mxu0 0.0
        %2615 = vmatpush1.msra.mxu0 0.0
        %2616 = vmatprep.mubr.f32.mxu0 0.0
        %2617 = vmatmul.mubr.f32.gmra.mrb[0].mxu0 %v2409
        %v2618 = vpop.f32.mrb[0].mxu0
        %v2619 = vadd.f32 0.0, %v2618
        %v2620 = vpop.f32.mrb[0].mxu0
        %2621 = vdwg.mxu0
        %2623 = vrot.lane.b32.xlu0 %v2619, 72
        %v2624 = vpop.permute.xlu0 %2623
        %v2626 = vadd.f32 %v1282, %v2624
        %v2627 = vld [vmem:[%s12] sm:$0x1]
        %v2629 = vlaneseq
        %v2630 = vshrl.u32 %v2629, 7
        %v2631 = vsub.s32 0, %v2630
        %v2632 = vrot.slane %v2627, %v2631
        %2633 = vrot.lane.b32.xlu0 %v2632, 72
        %v2634 = vpop.permute.xlu0 %2633
        %v2636 = vadd.f32 %v2626, %v2634
        %v2637 = vld [vmem:[%s13] sm:$0xff]
        %v2638 = vld [vmem:[%s13 + $0x8] sm:$0xff]
        %v2639 = vld [vmem:[%s13 + $0x10] sm:$0xff]
        %v2640 = vld [vmem:[%s13 + $0x18] sm:$0xff]
        %v2641 = vld [vmem:[%s13 + $0x20] sm:$0xff]
        %v2642 = vld [vmem:[%s13 + $0x28] sm:$0xff]
        %v2643 = vld [vmem:[%s13 + $0x30] sm:$0xff]
        %v2644 = vld [vmem:[%s13 + $0x38] sm:$0xff]
        %v2646 = vsel %vm2406, %v2535, 0
        %2648 = vmatprep.subr.mxu0 0.0
        %2649 = vmatpush1.msra.mxu0 %v2637
        %2650 = vmatprep.subr.mxu0 0.0
        %2651 = vmatpush1.msra.mxu0 %v2638
        %2652 = vmatprep.subr.mxu0 0.0
        %2653 = vmatpush1.msra.mxu0 %v2639
        %2654 = vmatprep.subr.mxu0 0.0
        %2655 = vmatpush1.msra.mxu0 %v2640
        %2656 = vmatprep.subr.mxu0 0.0
        %2657 = vmatpush1.msra.mxu0 %v2641
        %2658 = vmatprep.subr.mxu0 0.0
        %2659 = vmatpush1.msra.mxu0 %v2642
        %2660 = vmatprep.subr.mxu0 0.0
        %2661 = vmatpush1.msra.mxu0 %v2643
        %2662 = vmatprep.subr.mxu0 0.0
        %2663 = vmatpush1.msra.mxu0 %v2644
        %2664 = vmatprep.subr.mxu0 0.0
        %2665 = vmatpush1.msra.mxu0 0.0
        %2666 = vmatprep.subr.mxu0 0.0
        %2667 = vmatpush1.msra.mxu0 0.0
        %2668 = vmatprep.subr.mxu0 0.0
        %2669 = vmatpush1.msra.mxu0 0.0
        %2670 = vmatprep.subr.mxu0 0.0
        %2671 = vmatpush1.msra.mxu0 0.0
        %2672 = vmatprep.subr.mxu0 0.0
        %2673 = vmatpush1.msra.mxu0 0.0
        %2674 = vmatprep.subr.mxu0 0.0
        %2675 = vmatpush1.msra.mxu0 0.0
        %2676 = vmatprep.subr.mxu0 0.0
        %2677 = vmatpush1.msra.mxu0 0.0
        %2678 = vmatprep.subr.mxu0 0.0
        %2679 = vmatpush1.msra.mxu0 0.0
        %2680 = vmatprep.subr.mxu0 0.0
        %2681 = vmatpush1.msra.mxu0 0.0
        %2682 = vmatprep.subr.mxu0 0.0
        %2683 = vmatpush1.msra.mxu0 0.0
        %2684 = vmatprep.subr.mxu0 0.0
        %2685 = vmatpush1.msra.mxu0 0.0
        %2686 = vmatprep.subr.mxu0 0.0
        %2687 = vmatpush1.msra.mxu0 0.0
        %2688 = vmatprep.subr.mxu0 0.0
        %2689 = vmatpush1.msra.mxu0 0.0
        %2690 = vmatprep.subr.mxu0 0.0
        %2691 = vmatpush1.msra.mxu0 0.0
        %2692 = vmatprep.subr.mxu0 0.0
        %2693 = vmatpush1.msra.mxu0 0.0
        %2694 = vmatprep.subr.mxu0 0.0
        %2695 = vmatpush1.msra.mxu0 0.0
        %2696 = vmatprep.subr.mxu0 0.0
        %2697 = vmatpush1.msra.mxu0 0.0
        %2698 = vmatprep.subr.mxu0 0.0
        %2699 = vmatpush1.msra.mxu0 0.0
        %2700 = vmatprep.subr.mxu0 0.0
        %2701 = vmatpush1.msra.mxu0 0.0
        %2702 = vmatprep.subr.mxu0 0.0
        %2703 = vmatpush1.msra.mxu0 0.0
        %2704 = vmatprep.subr.mxu0 0.0
        %2705 = vmatpush1.msra.mxu0 0.0
        %2706 = vmatprep.subr.mxu0 0.0
        %2707 = vmatpush1.msra.mxu0 0.0
        %2708 = vmatprep.subr.mxu0 0.0
        %2709 = vmatpush1.msra.mxu0 0.0
        %2710 = vmatprep.subr.mxu0 0.0
        %2711 = vmatpush1.msra.mxu0 0.0
        %2712 = vmatprep.mubr.f32.mxu0 0.0
        %2713 = vmatmul.mubr.f32.gmra.mrb[0].mxu0 %v2646
        %v2714 = vpop.f32.mrb[0].mxu0
        %v2715 = vadd.f32 0.0, %v2714
        %v2716 = vpop.f32.mrb[0].mxu0
        %2717 = vdwg.mxu0
        %2719 = vrot.lane.b32.xlu0 %v2715, 72
        %v2720 = vpop.permute.xlu0 %2719
        %v2722 = vadd.f32 %v2636, %v2720
        %v2723 = vld [vmem:[%s14] sm:$0x1]
        %v2725 = vlaneseq
        %v2726 = vshrl.u32 %v2725, 7
        %v2727 = vsub.s32 0, %v2726
        %v2728 = vrot.slane %v2723, %v2727
        %2729 = vrot.lane.b32.xlu0 %v2728, 72
        %v2730 = vpop.permute.xlu0 %2729
        %v2732 = vadd.f32 %v2722, %v2730
        %v2733 = vld [vmem:[%s19] sm:$0xff]
        %v2734 = vld [vmem:[%s19 + $0x8] sm:$0xff]
        %v2735 = vld [vmem:[%s20] sm:$0x1]
        %2737 = vrot.lane.b32.xlu0 %v2732, 56
        %v2738 = vpop.permute.xlu0 %2737
        %v2739 = vsel %vm1031, %v2738, 0
        %2741 = vmatprep.subr.mxu0 0.0
        %2742 = vmatpush1.msra.mxu0 %v2733
        %2743 = vmatprep.subr.mxu0 0.0
        %2744 = vmatpush1.msra.mxu0 %v2734
        %2745 = vmatprep.subr.mxu0 0.0
        %2746 = vmatpush1.msra.mxu0 0.0
        %2747 = vmatprep.subr.mxu0 0.0
        %2748 = vmatpush1.msra.mxu0 0.0
        %2749 = vmatprep.subr.mxu0 0.0
        %2750 = vmatpush1.msra.mxu0 0.0
        %2751 = vmatprep.subr.mxu0 0.0
        %2752 = vmatpush1.msra.mxu0 0.0
        %2753 = vmatprep.subr.mxu0 0.0
        %2754 = vmatpush1.msra.mxu0 0.0
        %2755 = vmatprep.subr.mxu0 0.0
        %2756 = vmatpush1.msra.mxu0 0.0
        %2757 = vmatprep.subr.mxu0 0.0
        %2758 = vmatpush1.msra.mxu0 0.0
        %2759 = vmatprep.subr.mxu0 0.0
        %2760 = vmatpush1.msra.mxu0 0.0
        %2761 = vmatprep.subr.mxu0 0.0
        %2762 = vmatpush1.msra.mxu0 0.0
        %2763 = vmatprep.subr.mxu0 0.0
        %2764 = vmatpush1.msra.mxu0 0.0
        %2765 = vmatprep.subr.mxu0 0.0
        %2766 = vmatpush1.msra.mxu0 0.0
        %2767 = vmatprep.subr.mxu0 0.0
        %2768 = vmatpush1.msra.mxu0 0.0
        %2769 = vmatprep.subr.mxu0 0.0
        %2770 = vmatpush1.msra.mxu0 0.0
        %2771 = vmatprep.subr.mxu0 0.0
        %2772 = vmatpush1.msra.mxu0 0.0
        %2773 = vmatprep.subr.mxu0 0.0
        %2774 = vmatpush1.msra.mxu0 0.0
        %2775 = vmatprep.subr.mxu0 0.0
        %2776 = vmatpush1.msra.mxu0 0.0
        %2777 = vmatprep.subr.mxu0 0.0
        %2778 = vmatpush1.msra.mxu0 0.0
        %2779 = vmatprep.subr.mxu0 0.0
        %2780 = vmatpush1.msra.mxu0 0.0
        %2781 = vmatprep.subr.mxu0 0.0
        %2782 = vmatpush1.msra.mxu0 0.0
        %2783 = vmatprep.subr.mxu0 0.0
        %2784 = vmatpush1.msra.mxu0 0.0
        %2785 = vmatprep.subr.mxu0 0.0
        %2786 = vmatpush1.msra.mxu0 0.0
        %2787 = vmatprep.subr.mxu0 0.0
        %2788 = vmatpush1.msra.mxu0 0.0
        %2789 = vmatprep.subr.mxu0 0.0
        %2790 = vmatpush1.msra.mxu0 0.0
        %2791 = vmatprep.subr.mxu0 0.0
        %2792 = vmatpush1.msra.mxu0 0.0
        %2793 = vmatprep.subr.mxu0 0.0
        %2794 = vmatpush1.msra.mxu0 0.0
        %2795 = vmatprep.subr.mxu0 0.0
        %2796 = vmatpush1.msra.mxu0 0.0
        %2797 = vmatprep.subr.mxu0 0.0
        %2798 = vmatpush1.msra.mxu0 0.0
        %2799 = vmatprep.subr.mxu0 0.0
        %2800 = vmatpush1.msra.mxu0 0.0
        %2801 = vmatprep.subr.mxu0 0.0
        %2802 = vmatpush1.msra.mxu0 0.0
        %2803 = vmatprep.subr.mxu0 0.0
        %2804 = vmatpush1.msra.mxu0 0.0
        %2805 = vmatprep.mubr.f32.mxu0 0.0
        %2806 = vmatmul.mubr.f32.gmra.mrb[0].mxu0 %v2739
        %v2807 = vpop.f32.mrb[0].mxu0
        %v2808 = vadd.f32 %v2735, %v2807
        %v2809 = vpop.f32.mrb[0].mxu0
        %2810 = vdwg.mxu0
        %v2811 = vmax.f32 %v2808, 0.0
        %v2812 = vld [vmem:[%s21] sm:$0xff]
        %v2813 = vld [vmem:[%s21 + $0x8] sm:$0xff]
        %v2814 = vld [vmem:[%s22] sm:$0x1]
        %v2816 = vsel %vm1031, %v2811, 0
        %2818 = vmatprep.subr.mxu0 0.0
        %2819 = vmatpush1.msra.mxu0 %v2812
        %2820 = vmatprep.subr.mxu0 0.0
        %2821 = vmatpush1.msra.mxu0 %v2813
        %2822 = vmatprep.subr.mxu0 0.0
        %2823 = vmatpush1.msra.mxu0 0.0
        %2824 = vmatprep.subr.mxu0 0.0
        %2825 = vmatpush1.msra.mxu0 0.0
        %2826 = vmatprep.subr.mxu0 0.0
        %2827 = vmatpush1.msra.mxu0 0.0
        %2828 = vmatprep.subr.mxu0 0.0
        %2829 = vmatpush1.msra.mxu0 0.0
        %2830 = vmatprep.subr.mxu0 0.0
        %2831 = vmatpush1.msra.mxu0 0.0
        %2832 = vmatprep.subr.mxu0 0.0
        %2833 = vmatpush1.msra.mxu0 0.0
        %2834 = vmatprep.subr.mxu0 0.0
        %2835 = vmatpush1.msra.mxu0 0.0
        %2836 = vmatprep.subr.mxu0 0.0
        %2837 = vmatpush1.msra.mxu0 0.0
        %2838 = vmatprep.subr.mxu0 0.0
        %2839 = vmatpush1.msra.mxu0 0.0
        %2840 = vmatprep.subr.mxu0 0.0
        %2841 = vmatpush1.msra.mxu0 0.0
        %2842 = vmatprep.subr.mxu0 0.0
        %2843 = vmatpush1.msra.mxu0 0.0
        %2844 = vmatprep.subr.mxu0 0.0
        %2845 = vmatpush1.msra.mxu0 0.0
        %2846 = vmatprep.subr.mxu0 0.0
        %2847 = vmatpush1.msra.mxu0 0.0
        %2848 = vmatprep.subr.mxu0 0.0
        %2849 = vmatpush1.msra.mxu0 0.0
        %2850 = vmatprep.subr.mxu0 0.0
        %2851 = vmatpush1.msra.mxu0 0.0
        %2852 = vmatprep.subr.mxu0 0.0
        %2853 = vmatpush1.msra.mxu0 0.0
        %2854 = vmatprep.subr.mxu0 0.0
        %2855 = vmatpush1.msra.mxu0 0.0
        %2856 = vmatprep.subr.mxu0 0.0
        %2857 = vmatpush1.msra.mxu0 0.0
        %2858 = vmatprep.subr.mxu0 0.0
        %2859 = vmatpush1.msra.mxu0 0.0
        %2860 = vmatprep.subr.mxu0 0.0
        %2861 = vmatpush1.msra.mxu0 0.0
        %2862 = vmatprep.subr.mxu0 0.0
        %2863 = vmatpush1.msra.mxu0 0.0
        %2864 = vmatprep.subr.mxu0 0.0
        %2865 = vmatpush1.msra.mxu0 0.0
        %2866 = vmatprep.subr.mxu0 0.0
        %2867 = vmatpush1.msra.mxu0 0.0
        %2868 = vmatprep.subr.mxu0 0.0
        %2869 = vmatpush1.msra.mxu0 0.0
        %2870 = vmatprep.subr.mxu0 0.0
        %2871 = vmatpush1.msra.mxu0 0.0
        %2872 = vmatprep.subr.mxu0 0.0
        %2873 = vmatpush1.msra.mxu0 0.0
        %2874 = vmatprep.subr.mxu0 0.0
        %2875 = vmatpush1.msra.mxu0 0.0
        %2876 = vmatprep.subr.mxu0 0.0
        %2877 = vmatpush1.msra.mxu0 0.0
        %2878 = vmatprep.subr.mxu0 0.0
        %2879 = vmatpush1.msra.mxu0 0.0
        %2880 = vmatprep.subr.mxu0 0.0
        %2881 = vmatpush1.msra.mxu0 0.0
        %2882 = vmatprep.mubr.f32.mxu0 0.0
        %2883 = vmatmul.mubr.f32.gmra.mrb[0].mxu0 %v2816
        %v2884 = vpop.f32.mrb[0].mxu0
        %v2885 = vadd.f32 %v2814, %v2884
        %v2886 = vpop.f32.mrb[0].mxu0
        %2887 = vdwg.mxu0
        %vm2888 = vcmask 122880
        %2889 = vst.msk [vmem:[%s882] sm:$0x1] %vm2888, %v2885
        %s2890 = sand.u32 %s603, 1
        %s2891 = scalar_lea.sflag [#allocation3], %s2890
        %s2892 = sand.u32 %s603, 1
        %s2893 = smul.addr %s2892, 8
        %s2894 = scalar_lea.vmem [#allocation2], %s2893
        %s2895 = smul.u32 8, %s45
        %p2896 = scmp.lt.s32.totalorder %s2895, 15
        %s2897 = scalar_select %p2896, %s2895, 15
        %s2898 = smul.addr %s2897, 8
        %s2899 = scalar_lea.vmem %s26, %s2898
        %s2900 = sand.u32 %s655, 1
        %s2901 = scalar_lea.sflag [#allocation5], %s2900
        %s2902 = sand.u32 %s655, 1
        %s2903 = scalar_lea.vmem [#allocation4], %s2902
        // Predicated region
        $region121: #{tpu_custom_call.1} parent=119 // pred_check
          %p2904 = pneg %p613
        $region122: #{tpu_custom_call.1} parent=119 // pred_check_branch
          %2906 = sbr.rel (%p2904) target = $region124
        $region123: #{tpu_custom_call.1} parent=119 // pred_region
          %s2908 = ssub.s32 128, 128
          %2909 = vsyncadd %s2891, %s2908
          %s2910 = smul.addr %s45, 128
          %s2911 = scalar_lea.hbm %s25, %s2910
          %s2913 = sshll.u32 %s2894, 4
          %s2914 = int_to_ptr.vmem [resolvable:$true] %s2913
          %2916 = dma.vmem_to_hbm [thread:$0]  %s2914, 128, %s2911, %s2891
        $region124: #{tpu_custom_call.1} parent=119 // pred_fallthru
          _
        // Predicated region
        $region125: #{tpu_custom_call.1} parent=119 // pred_check
          %p2917 = pneg %p639
        $region126: #{tpu_custom_call.1} parent=119 // pred_check_branch
          %2919 = sbr.rel (%p2917) target = $region128
        $region127: #{tpu_custom_call.1} parent=119 // pred_region
          %s2920 = smul.u32 8, %s45
        $region128: #{tpu_custom_call.1} parent=119 // pred_fallthru
          _
        // Predicated region
        $region129: #{tpu_custom_call.1} parent=119 // pred_check
          %p2921 = pneg %p665
        $region130: #{tpu_custom_call.1} parent=119 // pred_check_branch
          %2923 = sbr.rel (%p2921) target = $region132
        $region131: #{tpu_custom_call.1} parent=119 // pred_region
          %s2925 = ssub.s32 16, 16
          %2926 = vsyncadd %s2901, %s2925
          %s2927 = smul.addr %s45, 16
          %s2928 = scalar_lea.hbm %s27, %s2927
          %s2930 = sshll.u32 %s2903, 4
          %s2931 = int_to_ptr.vmem [resolvable:$true] %s2930
          %2933 = dma.vmem_to_hbm [thread:$0]  %s2931, 16, %s2928, %s2901
        $region132: #{tpu_custom_call.1} parent=119 // pred_fallthru
          _
      $region120: #{tpu_custom_call.1} parent=5 // pred_fallthru
        _
      %p2934 = scmp.le.s32.totalorder 2, %s40
      // Predicated region
      $region133: #{tpu_custom_call.1} parent=5 // pred_check
        %p2935 = pneg %p2934
      $region134: #{tpu_custom_call.1} parent=5 // pred_check_branch
        %2937 = sbr.rel (%p2935) target = $region136
      $region135: #{tpu_custom_call.1} parent=5 // pred_region
        %s2938 = ssub.s32 %s40, 2
        // Predicated region
        $region137: #{tpu_custom_call.1} parent=135 // pred_check
          %p2939 = pneg %p619
        $region138: #{tpu_custom_call.1} parent=135 // pred_check_branch
          %2941 = sbr.rel (%p2939) target = $region140
        $region139: #{tpu_custom_call.1} parent=135 // pred_region
          %s2942 = sand.u32 %s604, 1
          %s2943 = scalar_lea.sflag [#allocation3], %s2942
          %s2944 = sand.u32 %s604, 1
          %s2945 = smul.addr %s2944, 8
          %s2946 = scalar_lea.vmem [#allocation2], %s2945
          %2947 = dma.done %s2943, 128
        $region140: #{tpu_custom_call.1} parent=135 // pred_fallthru
          _
        // Predicated region
        $region141: #{tpu_custom_call.1} parent=135 // pred_check
          %p2948 = pneg %p645
        $region142: #{tpu_custom_call.1} parent=135 // pred_check_branch
          %2950 = sbr.rel (%p2948) target = $region144
        $region143: #{tpu_custom_call.1} parent=135 // pred_region
          %s2951 = smul.u32 8, %s46
          %p2952 = scmp.lt.s32.totalorder %s2951, 15
          %s2953 = scalar_select %p2952, %s2951, 15
          %s2954 = smul.addr %s2953, 8
          %s2955 = scalar_lea.vmem %s26, %s2954
        $region144: #{tpu_custom_call.1} parent=135 // pred_fallthru
          _
        // Predicated region
        $region145: #{tpu_custom_call.1} parent=135 // pred_check
          %p2956 = pneg %p671
        $region146: #{tpu_custom_call.1} parent=135 // pred_check_branch
          %2958 = sbr.rel (%p2956) target = $region148
        $region147: #{tpu_custom_call.1} parent=135 // pred_region
          %s2959 = sand.u32 %s656, 1
          %s2960 = scalar_lea.sflag [#allocation5], %s2959
          %s2961 = sand.u32 %s656, 1
          %s2962 = scalar_lea.vmem [#allocation4], %s2961
          %2963 = dma.done %s2960, 16
        $region148: #{tpu_custom_call.1} parent=135 // pred_fallthru
          _
      $region136: #{tpu_custom_call.1} parent=5 // pred_fallthru
        _
    $region6: #{tpu_custom_call.1} parent=1 // loop_footer
      %s44 = sadd.s32 1, %s40
    $region7: #{tpu_custom_call.1} parent=1 // loop_footer_branch
      %39 = sbr.rel target = $region3
    $region8: #{tpu_custom_call.1} parent=1 // loop_exit
      _
    %2964 = vsyncpa [#allocation3], 1
    %s2965 = scalar_lea.sflag [#allocation3], 1
    %2966 = vsyncpa %s2965, 1
    %2967 = vsyncpa [#allocation5], 1
    %s2968 = scalar_lea.sflag [#allocation5], 1
    %2969 = vsyncpa %s2968, 1

</llo_original>
